<compile_context>
chip_gen: v7x
topology: tpu7x:2x2x1
jax: 0.10.0
libtpu: 0.0.40
codegen_flags: <defaults>
</compile_context>

<pallas_src>
import functools

import jax
import jax.numpy as jnp
from jax import lax
from jax.experimental import pallas as pl
from jax.experimental.pallas import tpu as pltpu

EPS = 1e-5                      # PyTorch nn.LayerNorm default eps
_SQRT_HALF = 0.7071067811865476
_SQRT_2_OVER_PI = 0.7978845608028654


def _gelu_exact(x):
    # nn.GELU() default = exact erf-based GELU (used by the pure-JAX reference).
    return 0.5 * x * (1.0 + lax.erf(x * jnp.float32(_SQRT_HALF)))


def _gelu_tanh(x):
    # tanh approximation: the transcendental runs in the EUP slot instead of a
    # long VPU erf polynomial.  ~1e-3 abs error vs exact GELU.
    c = jnp.float32(_SQRT_2_OVER_PI)
    return 0.5 * x * (1.0 + jnp.tanh(c * (x + jnp.float32(0.044715) * x * x * x)))


def _layernorm(x, gamma, beta):
    mu = jnp.mean(x, axis=-1, keepdims=True)
    var = jnp.mean(jnp.square(x - mu), axis=-1, keepdims=True)
    return (x - mu) * lax.rsqrt(var + EPS) * gamma + beta


def mix_block_kernel(x_ref, g_ref, b_ref,
                     w11_ref, b11_ref, w12_ref, b12_ref,
                     w21_ref, b21_ref, w22_ref, b22_ref,
                     o_ref, xn2_ref, *, d, tb, n_hidden_chunks):
    res = x_ref.shape[-1]
    gamma = g_ref[...]                                # (1, res) f32
    beta = b_ref[...]                                 # (1, res) f32

    # ---- token-MLP constants (hoisted out of the batch loop) ---------------
    w11 = w11_ref[...]                                # (256, d) bf16, (out,in) layout
    w12 = w12_ref[...]                                # (d, 256) bf16, (out,in) layout
    b11 = jnp.broadcast_to(b11_ref[...], (256, res))  # hoisted lane broadcast
    b12 = jnp.broadcast_to(b12_ref[...], (d, res))

    # ---- per batch: LN -> token MLP -> residual -> LN, write to scratch ----
    # Weights stored (out, in) -> standard MXU matmuls, result lands directly in
    # (d, res) orientation; no transposes materialized.
    for b in range(tb):                               # static unroll, tb small
        lo = b * d
        xb = x_ref[pl.ds(lo, d), :].astype(jnp.float32)            # (d, res)
        xn_b = _layernorm(xb, gamma, beta)
        h = jnp.dot(w11, xn_b.astype(jnp.bfloat16),
                    preferred_element_type=jnp.float32) + b11      # (256, res)
        t = jnp.dot(w12, _gelu_tanh(h).astype(jnp.bfloat16),
                    preferred_element_type=jnp.float32) + b12      # (d, res)
        xn2_ref[pl.ds(lo, d), :] = _layernorm(xn_b + t, gamma, beta)

    # ---- channel MLP over res, batch collapsed into M, hidden chunked ------
    xn2 = xn2_ref[...]                                # (rows, res) f32
    xn2_bf = xn2.astype(jnp.bfloat16)
    hidden = w21_ref.shape[-1]
    ch = hidden // n_hidden_chunks
    y = None
    for c in range(n_hidden_chunks):                  # static; resident weights -> free slices
        s = c * ch
        h2 = jnp.dot(xn2_bf, w21_ref[:, pl.ds(s, ch)],
                     preferred_element_type=jnp.float32)           # (rows, ch)
        h2 = _gelu_tanh(h2 + b21_ref[:, pl.ds(s, ch)])
        part = jnp.dot(h2.astype(jnp.bfloat16), w22_ref[pl.ds(s, ch), :],
                       preferred_element_type=jnp.float32)         # (rows, res)
        y = part if y is None else y + part

    o_ref[...] = (xn2 + y + b22_ref[...]).astype(o_ref.dtype)


def _pick_block_batch(B, d):
    """Block-batch: largest divisor of B that keeps >= 2 grid steps (megacore on
    v7x), keeps the row slab sublane-aligned, and prefers 256-aligned rows."""
    divisors = [tb for tb in range(1, B + 1) if B % tb == 0]
    # (8, 128) rule on the x BlockSpec: rows % 8 == 0 or rows == full dim (tb == B).
    ok = [tb for tb in divisors if (tb * d) % 8 == 0 or tb == B]
    multi = [tb for tb in ok if B // tb >= 2 and tb * d <= 2048]
    if multi:
        aligned = [tb for tb in multi if (tb * d) % 256 == 0]
        return max(aligned) if aligned else max(multi)
    return max(ok) if ok else B


def _pick_hidden_chunks(rows, hidden, budget_bytes=4 << 20):
    """Chunk the channel-MLP hidden dim so the f32 intermediate stays ~<= 4 MiB."""
    for nc in (1, 2, 4, 8):
        if hidden % nc == 0 and (hidden // nc) % 128 == 0 \
                and rows * (hidden // nc) * 4 <= budget_bytes:
            return nc
    return 8


def _vmem_limit_bytes(rows, res, d, hidden, hidden_chunk):
    f32, bf16 = 4, 2
    io_blocks = 2 * 2 * rows * res * f32                    # x + out, double-buffered
    weights = bf16 * (2 * 256 * d + 2 * res * hidden) \
        + f32 * (2 * res + 256 + d + hidden + res)          # constant-index, counted once
    scratch = rows * res * f32
    live = rows * hidden_chunk * (f32 + bf16) + 3 * rows * res * f32 \
        + (256 + d) * res * f32
    total = int(1.5 * (io_blocks + 2 * weights + scratch + live)) + (8 << 20)
    cap = 100 << 20                                         # v5e/v6e: 128 MiB physical VMEM
    try:
        phys = getattr(pltpu.get_tpu_info(), "vmem_capacity_bytes", None)
        if phys:
            cap = int(0.80 * phys)                          # ~51 MiB headroomed on v7x
    except Exception:
        pass
    return int(min(max(total, 32 << 20), cap))


def mix_block(x, params, *, block_batch=None):
    B, d, res = x.shape
    tb = block_batch if block_batch is not None else _pick_block_batch(B, d)
    assert B % tb == 0
    rows = tb * d

    gamma, beta, w11, b11, w12, b12, w21, b21, w22, b22 = params
    hidden = w21.shape[-1]
    nc = _pick_hidden_chunks(rows, hidden)

    wdt = jnp.bfloat16                                # bf16 weights: MXU-native, half VMEM/HBM
    flat = (gamma.astype(jnp.float32), beta.astype(jnp.float32),
            w11.astype(wdt), b11.astype(jnp.float32),
            w12.astype(wdt), b12.astype(jnp.float32),
            w21.astype(wdt), b21.astype(jnp.float32),
            w22.astype(wdt), b22.astype(jnp.float32))

    x2 = x.reshape(B * d, res)                        # free reshape at XLA level

    def const_spec(p):
        nd = p.ndim
        # Constant block index: Pallas skips re-DMA across grid steps.
        return pl.BlockSpec(p.shape, lambda *_ , _nd=nd: (0,) * _nd)

    kernel = functools.partial(mix_block_kernel, d=d, tb=tb, n_hidden_chunks=nc)
    out2 = pl.pallas_call(
        kernel,
        out_shape=jax.ShapeDtypeStruct((B * d, res), x.dtype),
        grid=(B // tb,),
        in_specs=[pl.BlockSpec((rows, res), lambda i: (i, 0))]
                 + [const_spec(p) for p in flat],
        out_specs=pl.BlockSpec((rows, res), lambda i: (i, 0)),
        scratch_shapes=[pltpu.VMEM((rows, res), jnp.float32)],
        compiler_params=pltpu.CompilerParams(
            dimension_semantics=("parallel",),
            vmem_limit_bytes=_vmem_limit_bytes(rows, res, d, hidden, hidden // nc)),
    )(x2, *flat)

    return out2.reshape(B, d, res)


def init_params(key, d, res, hidden=2048, tok_hidden=256):
    """Deterministic synthetic init.
    mlp1 weights in PyTorch (out, in) layout; mlp2 weights in (in, out) layout —
    exactly the orientations the kernel consumes without any transposes."""
    ks = jax.random.split(key, 8)
    scale = 0.02
    gamma = jnp.ones((1, res), jnp.float32)
    beta = jnp.zeros((1, res), jnp.float32)
    w11 = scale * jax.random.normal(ks[0], (tok_hidden, d), jnp.float32)   # Linear(d,256).weight
    b11 = scale * jax.random.normal(ks[1], (tok_hidden, 1), jnp.float32)
    w12 = scale * jax.random.normal(ks[2], (d, tok_hidden), jnp.float32)   # Linear(256,d).weight
    b12 = scale * jax.random.normal(ks[3], (d, 1), jnp.float32)
    w21 = scale * jax.random.normal(ks[4], (res, hidden), jnp.float32)     # Linear(res,2048).weight.T
    b21 = scale * jax.random.normal(ks[5], (1, hidden), jnp.float32)
    w22 = scale * jax.random.normal(ks[6], (hidden, res), jnp.float32)     # Linear(2048,res).weight.T
    b22 = scale * jax.random.normal(ks[7], (1, res), jnp.float32)
    return (gamma, beta, w11, b11, w12, b12, w21, b21, w22, b22)


def mix_block_ref(x, params):
    """Pure-JAX reference with PyTorch semantics (exact erf GELU), bf16 matmul
    operands / f32 accumulation matching the kernel's numerics tradeoff."""
    gamma, beta, w11, b11, w12, b12, w21, b21, w22, b22 = params
    f32, bf16 = jnp.float32, jnp.bfloat16

    def ln(v):
        mu = jnp.mean(v, -1, keepdims=True)
        var = jnp.mean(jnp.square(v - mu), -1, keepdims=True)
        return (v - mu) * lax.rsqrt(var + EPS) * gamma + beta

    x = x.astype(f32)
    xn = ln(x)                                                        # (B, d, res)
    h = jnp.einsum('od,bdr->bor', w11.astype(bf16), xn.astype(bf16),
                   preferred_element_type=f32) + b11.reshape(1, -1, 1)
    h = _gelu_exact(h)
    t = jnp.einsum('do,bor->bdr', w12.astype(bf16), h.astype(bf16),
                   preferred_element_type=f32) + b12.reshape(1, -1, 1)
    x1 = xn + t
    xn2 = ln(x1)
    h2 = jnp.einsum('bdr,rh->bdh', xn2.astype(bf16), w21.astype(bf16),
                    preferred_element_type=f32) + b21.reshape(1, 1, -1)
    h2 = _gelu_exact(h2)
    y = jnp.einsum('bdh,hr->bdr', h2.astype(bf16), w22.astype(bf16),
                   preferred_element_type=f32) + b22.reshape(1, 1, -1)
    return xn2 + y


if __name__ == "__main__":
    B, d, res = 2, 8, 16
    key = jax.random.PRNGKey(0)
    kx, kp = jax.random.split(key)
    x = jax.random.normal(kx, (B, d, res), jnp.float32)
    params = init_params(kp, d, res)

    out = jax.block_until_ready(mix_block(x, params))
    ref = jax.block_until_ready(mix_block_ref(x, params))

    assert out.shape == (B, d, res)
    assert bool(jnp.all(jnp.isfinite(out)))
    assert jnp.allclose(out, ref, rtol=2e-2, atol=2e-2), "mismatch vs JAX reference"

    print("KERNEL_OK")
</pallas_src>

<mosaic_0001>
module attributes {stable_mosaic.version = 11 : i64} {
  func.func @mix_block_kernel(%arg0: i32, %arg1: memref<8x16xf32, #tpu.memory_space<vmem>>, %arg2: memref<1x16xf32, #tpu.memory_space<vmem>>, %arg3: memref<1x16xf32, #tpu.memory_space<vmem>>, %arg4: memref<256x8xbf16, #tpu.memory_space<vmem>>, %arg5: memref<256x1xf32, #tpu.memory_space<vmem>>, %arg6: memref<8x256xbf16, #tpu.memory_space<vmem>>, %arg7: memref<8x1xf32, #tpu.memory_space<vmem>>, %arg8: memref<16x2048xbf16, #tpu.memory_space<vmem>>, %arg9: memref<1x2048xf32, #tpu.memory_space<vmem>>, %arg10: memref<2048x16xbf16, #tpu.memory_space<vmem>>, %arg11: memref<1x16xf32, #tpu.memory_space<vmem>>, %arg12: memref<8x16xf32, #tpu.memory_space<vmem>>, %arg13: memref<8x16xf32, #tpu.memory_space<vmem>>) attributes {dimension_semantics = [#tpu.dimension_semantics<parallel>], iteration_bounds = array<i64: 2>, scalar_prefetch = 0 : i64, scratch_operands = 1 : i64, tpu.core_type = #tpu.core_type<tc>, window_params = [{transform_indices = @transform_0, window_bounds = array<i64: 8, 16>}, {pipeline_mode = #tpu.pipeline_mode<synchronous>, transform_indices = @transform_1, window_bounds = array<i64: 1, 16>}, {pipeline_mode = #tpu.pipeline_mode<synchronous>, transform_indices = @transform_2, window_bounds = array<i64: 1, 16>}, {pipeline_mode = #tpu.pipeline_mode<synchronous>, transform_indices = @transform_3, window_bounds = array<i64: 256, 8>}, {pipeline_mode = #tpu.pipeline_mode<synchronous>, transform_indices = @transform_4, window_bounds = array<i64: 256, 1>}, {pipeline_mode = #tpu.pipeline_mode<synchronous>, transform_indices = @transform_5, window_bounds = array<i64: 8, 256>}, {pipeline_mode = #tpu.pipeline_mode<synchronous>, transform_indices = @transform_6, window_bounds = array<i64: 8, 1>}, {pipeline_mode = #tpu.pipeline_mode<synchronous>, transform_indices = @transform_7, window_bounds = array<i64: 16, 2048>}, {pipeline_mode = #tpu.pipeline_mode<synchronous>, transform_indices = @transform_8, window_bounds = array<i64: 1, 2048>}, {pipeline_mode = #tpu.pipeline_mode<synchronous>, transform_indices = @transform_9, window_bounds = array<i64: 2048, 16>}, {pipeline_mode = #tpu.pipeline_mode<synchronous>, transform_indices = @transform_10, window_bounds = array<i64: 1, 16>}, {transform_indices = @transform_11, window_bounds = array<i64: 8, 16>}]} {
    %c0 = arith.constant 0 : index
    %c0_0 = arith.constant 0 : index
    %0 = vector.load %arg2[%c0, %c0_0] : memref<1x16xf32, #tpu.memory_space<vmem>>, vector<1x16xf32>
    %c0_1 = arith.constant 0 : index
    %c0_2 = arith.constant 0 : index
    %1 = vector.load %arg3[%c0_1, %c0_2] : memref<1x16xf32, #tpu.memory_space<vmem>>, vector<1x16xf32>
    %c0_3 = arith.constant 0 : index
    %c0_4 = arith.constant 0 : index
    %2 = vector.load %arg4[%c0_3, %c0_4] : memref<256x8xbf16, #tpu.memory_space<vmem>>, vector<256x8xbf16>
    %c0_5 = arith.constant 0 : index
    %c0_6 = arith.constant 0 : index
    %3 = vector.load %arg6[%c0_5, %c0_6] : memref<8x256xbf16, #tpu.memory_space<vmem>>, vector<8x256xbf16>
    %c0_7 = arith.constant 0 : index
    %c0_8 = arith.constant 0 : index
    %4 = vector.load %arg5[%c0_7, %c0_8] : memref<256x1xf32, #tpu.memory_space<vmem>>, vector<256x1xf32>
    %5 = vector.shape_cast %4 : vector<256x1xf32> to vector<256x1xf32>
    %6 = vector.broadcast %5 : vector<256x1xf32> to vector<256x16xf32>
    %c0_9 = arith.constant 0 : index
    %c0_10 = arith.constant 0 : index
    %7 = vector.load %arg7[%c0_9, %c0_10] : memref<8x1xf32, #tpu.memory_space<vmem>>, vector<8x1xf32>
    %8 = vector.shape_cast %7 : vector<8x1xf32> to vector<8x1xf32>
    %9 = vector.broadcast %8 : vector<8x1xf32> to vector<8x16xf32>
    %c0_11 = arith.constant 0 : index
    %c0_12 = arith.constant 0 : index
    %10 = vector.load %arg1[%c0_11, %c0_12] : memref<8x16xf32, #tpu.memory_space<vmem>>, vector<8x16xf32>
    %cst = arith.constant dense<0.000000e+00> : vector<8xf32>
    %11 = vector.multi_reduction <add>, %10, %cst [1] : vector<8x16xf32> to vector<8xf32>
    %12 = vector.shape_cast %11 : vector<8xf32> to vector<8x1xf32>
    %cst_13 = arith.constant 1.600000e+01 : f32
    %13 = vector.broadcast %cst_13 : f32 to vector<8x1xf32>
    %14 = arith.divf %12, %13 : vector<8x1xf32>
    %15 = vector.broadcast %14 : vector<8x1xf32> to vector<8x16xf32>
    %16 = arith.subf %10, %15 : vector<8x16xf32>
    %17 = arith.mulf %16, %16 : vector<8x16xf32>
    %cst_14 = arith.constant dense<0.000000e+00> : vector<8xf32>
    %18 = vector.multi_reduction <add>, %17, %cst_14 [1] : vector<8x16xf32> to vector<8xf32>
    %19 = vector.shape_cast %18 : vector<8xf32> to vector<8x1xf32>
    %cst_15 = arith.constant 1.600000e+01 : f32
    %20 = vector.broadcast %cst_15 : f32 to vector<8x1xf32>
    %21 = arith.divf %19, %20 : vector<8x1xf32>
    %22 = vector.broadcast %14 : vector<8x1xf32> to vector<8x16xf32>
    %23 = arith.subf %10, %22 : vector<8x16xf32>
    %cst_16 = arith.constant 9.99999974E-6 : f32
    %24 = vector.broadcast %cst_16 : f32 to vector<8x1xf32>
    %25 = arith.addf %21, %24 : vector<8x1xf32>
    %26 = math.rsqrt %25 : vector<8x1xf32>
    %27 = vector.broadcast %26 : vector<8x1xf32> to vector<8x16xf32>
    %28 = arith.mulf %23, %27 : vector<8x16xf32>
    %29 = vector.broadcast %0 : vector<1x16xf32> to vector<8x16xf32>
    %30 = arith.mulf %28, %29 : vector<8x16xf32>
    %31 = vector.broadcast %1 : vector<1x16xf32> to vector<8x16xf32>
    %32 = arith.addf %30, %31 : vector<8x16xf32>
    %33 = arith.truncf %32 : vector<8x16xf32> to vector<8x16xbf16>
    %cst_17 = arith.constant dense<0.000000e+00> : vector<256x16xf32>
    %34 = tpu.matmul %2, %33, %cst_17 {dimension_numbers = #tpu.dot_dimension_numbers<[1], [0], [0], [1], [0, 0, 1, 1], [], []>} : vector<256x8xbf16>, vector<8x16xbf16>, vector<256x16xf32> -> vector<256x16xf32>
    %35 = arith.addf %34, %6 : vector<256x16xf32>
    %cst_18 = arith.constant 5.000000e-01 : f32
    %36 = vector.broadcast %cst_18 : f32 to vector<256x16xf32>
    %37 = arith.mulf %36, %35 : vector<256x16xf32>
    %cst_19 = arith.constant 4.471500e-02 : f32
    %38 = vector.broadcast %cst_19 : f32 to vector<256x16xf32>
    %39 = arith.mulf %38, %35 : vector<256x16xf32>
    %40 = arith.mulf %39, %35 : vector<256x16xf32>
    %41 = arith.mulf %40, %35 : vector<256x16xf32>
    %42 = arith.addf %35, %41 : vector<256x16xf32>
    %cst_20 = arith.constant 0.797884583 : f32
    %43 = vector.broadcast %cst_20 : f32 to vector<256x16xf32>
    %44 = arith.mulf %43, %42 : vector<256x16xf32>
    %45 = math.tanh %44 : vector<256x16xf32>
    %cst_21 = arith.constant 1.000000e+00 : f32
    %46 = vector.broadcast %cst_21 : f32 to vector<256x16xf32>
    %47 = arith.addf %46, %45 : vector<256x16xf32>
    %48 = arith.mulf %37, %47 : vector<256x16xf32>
    %49 = arith.truncf %48 : vector<256x16xf32> to vector<256x16xbf16>
    %cst_22 = arith.constant dense<0.000000e+00> : vector<8x16xf32>
    %50 = tpu.matmul %3, %49, %cst_22 {dimension_numbers = #tpu.dot_dimension_numbers<[1], [0], [0], [1], [0, 0, 1, 1], [], []>} : vector<8x256xbf16>, vector<256x16xbf16>, vector<8x16xf32> -> vector<8x16xf32>
    %51 = arith.addf %50, %9 : vector<8x16xf32>
    %52 = arith.addf %32, %51 : vector<8x16xf32>
    %cst_23 = arith.constant dense<0.000000e+00> : vector<8xf32>
    %53 = vector.multi_reduction <add>, %52, %cst_23 [1] : vector<8x16xf32> to vector<8xf32>
    %54 = vector.shape_cast %53 : vector<8xf32> to vector<8x1xf32>
    %cst_24 = arith.constant 1.600000e+01 : f32
    %55 = vector.broadcast %cst_24 : f32 to vector<8x1xf32>
    %56 = arith.divf %54, %55 : vector<8x1xf32>
    %57 = vector.broadcast %56 : vector<8x1xf32> to vector<8x16xf32>
    %58 = arith.subf %52, %57 : vector<8x16xf32>
    %59 = arith.mulf %58, %58 : vector<8x16xf32>
    %cst_25 = arith.constant dense<0.000000e+00> : vector<8xf32>
    %60 = vector.multi_reduction <add>, %59, %cst_25 [1] : vector<8x16xf32> to vector<8xf32>
    %61 = vector.shape_cast %60 : vector<8xf32> to vector<8x1xf32>
    %cst_26 = arith.constant 1.600000e+01 : f32
    %62 = vector.broadcast %cst_26 : f32 to vector<8x1xf32>
    %63 = arith.divf %61, %62 : vector<8x1xf32>
    %64 = vector.broadcast %56 : vector<8x1xf32> to vector<8x16xf32>
    %65 = arith.subf %52, %64 : vector<8x16xf32>
    %cst_27 = arith.constant 9.99999974E-6 : f32
    %66 = vector.broadcast %cst_27 : f32 to vector<8x1xf32>
    %67 = arith.addf %63, %66 : vector<8x1xf32>
    %68 = math.rsqrt %67 : vector<8x1xf32>
    %69 = vector.broadcast %68 : vector<8x1xf32> to vector<8x16xf32>
    %70 = arith.mulf %65, %69 : vector<8x16xf32>
    %71 = vector.broadcast %0 : vector<1x16xf32> to vector<8x16xf32>
    %72 = arith.mulf %70, %71 : vector<8x16xf32>
    %73 = vector.broadcast %1 : vector<1x16xf32> to vector<8x16xf32>
    %74 = arith.addf %72, %73 : vector<8x16xf32>
    %c0_28 = arith.constant 0 : index
    %c0_29 = arith.constant 0 : index
    %75 = vector.load %arg13[%c0_28, %c0_29] : memref<8x16xf32, #tpu.memory_space<vmem>>, vector<8x16xf32>
    tpu.vector_store %arg13[%c0_28, %c0_29], %74 {strides = array<i32>} : memref<8x16xf32, #tpu.memory_space<vmem>>, vector<8x16xf32>,
    %c0_30 = arith.constant 0 : index
    %c0_31 = arith.constant 0 : index
    %76 = vector.load %arg13[%c0_30, %c0_31] : memref<8x16xf32, #tpu.memory_space<vmem>>, vector<8x16xf32>
    %77 = arith.truncf %76 : vector<8x16xf32> to vector<8x16xbf16>
    %c0_32 = arith.constant 0 : index
    %c0_33 = arith.constant 0 : index
    %78 = vector.load %arg8[%c0_32, %c0_33] : memref<16x2048xbf16, #tpu.memory_space<vmem>>, vector<16x2048xbf16>
    %cst_34 = arith.constant dense<0.000000e+00> : vector<8x2048xf32>
    %79 = tpu.matmul %77, %78, %cst_34 {dimension_numbers = #tpu.dot_dimension_numbers<[1], [0], [0], [1], [0, 0, 1, 1], [], []>} : vector<8x16xbf16>, vector<16x2048xbf16>, vector<8x2048xf32> -> vector<8x2048xf32>
    %c0_35 = arith.constant 0 : index
    %c0_36 = arith.constant 0 : index
    %80 = vector.load %arg9[%c0_35, %c0_36] : memref<1x2048xf32, #tpu.memory_space<vmem>>, vector<1x2048xf32>
    %81 = vector.broadcast %80 : vector<1x2048xf32> to vector<8x2048xf32>
    %82 = arith.addf %79, %81 : vector<8x2048xf32>
    %cst_37 = arith.constant 5.000000e-01 : f32
    %83 = vector.broadcast %cst_37 : f32 to vector<8x2048xf32>
    %84 = arith.mulf %83, %82 : vector<8x2048xf32>
    %cst_38 = arith.constant 4.471500e-02 : f32
    %85 = vector.broadcast %cst_38 : f32 to vector<8x2048xf32>
    %86 = arith.mulf %85, %82 : vector<8x2048xf32>
    %87 = arith.mulf %86, %82 : vector<8x2048xf32>
    %88 = arith.mulf %87, %82 : vector<8x2048xf32>
    %89 = arith.addf %82, %88 : vector<8x2048xf32>
    %cst_39 = arith.constant 0.797884583 : f32
    %90 = vector.broadcast %cst_39 : f32 to vector<8x2048xf32>
    %91 = arith.mulf %90, %89 : vector<8x2048xf32>
    %92 = math.tanh %91 : vector<8x2048xf32>
    %cst_40 = arith.constant 1.000000e+00 : f32
    %93 = vector.broadcast %cst_40 : f32 to vector<8x2048xf32>
    %94 = arith.addf %93, %92 : vector<8x2048xf32>
    %95 = arith.mulf %84, %94 : vector<8x2048xf32>
    %96 = arith.truncf %95 : vector<8x2048xf32> to vector<8x2048xbf16>
    %c0_41 = arith.constant 0 : index
    %c0_42 = arith.constant 0 : index
    %97 = vector.load %arg10[%c0_41, %c0_42] : memref<2048x16xbf16, #tpu.memory_space<vmem>>, vector<2048x16xbf16>
    %cst_43 = arith.constant dense<0.000000e+00> : vector<8x16xf32>
    %98 = tpu.matmul %96, %97, %cst_43 {dimension_numbers = #tpu.dot_dimension_numbers<[1], [0], [0], [1], [0, 0, 1, 1], [], []>} : vector<8x2048xbf16>, vector<2048x16xbf16>, vector<8x16xf32> -> vector<8x16xf32>
    %99 = arith.addf %76, %98 : vector<8x16xf32>
    %c0_44 = arith.constant 0 : index
    %c0_45 = arith.constant 0 : index
    %100 = vector.load %arg11[%c0_44, %c0_45] : memref<1x16xf32, #tpu.memory_space<vmem>>, vector<1x16xf32>
    %101 = vector.broadcast %100 : vector<1x16xf32> to vector<8x16xf32>
    %102 = arith.addf %99, %101 : vector<8x16xf32>
    %c0_46 = arith.constant 0 : index
    %c0_47 = arith.constant 0 : index
    %103 = vector.load %arg12[%c0_46, %c0_47] : memref<8x16xf32, #tpu.memory_space<vmem>>, vector<8x16xf32>
    tpu.vector_store %arg12[%c0_46, %c0_47], %102 {strides = array<i32>} : memref<8x16xf32, #tpu.memory_space<vmem>>, vector<8x16xf32>,
    return
  }
  func.func @transform_0(%arg0: i32) -> (i32, i32) {
    %c0_i32 = arith.constant 0 : i32
    %c0_i32_0 = arith.constant 0 : i32
    return %arg0, %c0_i32 : i32, i32
  }
  func.func @transform_1(%arg0: i32) -> (i32, i32) {
    %c0_i32 = arith.constant 0 : i32
    %c0_i32_0 = arith.constant 0 : i32
    %c0_i32_1 = arith.constant 0 : i32
    return %c0_i32, %c0_i32_0 : i32, i32
  }
  func.func @transform_2(%arg0: i32) -> (i32, i32) {
    %c0_i32 = arith.constant 0 : i32
    %c0_i32_0 = arith.constant 0 : i32
    %c0_i32_1 = arith.constant 0 : i32
    return %c0_i32, %c0_i32_0 : i32, i32
  }
  func.func @transform_3(%arg0: i32) -> (i32, i32) {
    %c0_i32 = arith.constant 0 : i32
    %c0_i32_0 = arith.constant 0 : i32
    %c0_i32_1 = arith.constant 0 : i32
    return %c0_i32, %c0_i32_0 : i32, i32
  }
  func.func @transform_4(%arg0: i32) -> (i32, i32) {
    %c0_i32 = arith.constant 0 : i32
    %c0_i32_0 = arith.constant 0 : i32
    %c0_i32_1 = arith.constant 0 : i32
    return %c0_i32, %c0_i32_0 : i32, i32
  }
  func.func @transform_5(%arg0: i32) -> (i32, i32) {
    %c0_i32 = arith.constant 0 : i32
    %c0_i32_0 = arith.constant 0 : i32
    %c0_i32_1 = arith.constant 0 : i32
    return %c0_i32, %c0_i32_0 : i32, i32
  }
  func.func @transform_6(%arg0: i32) -> (i32, i32) {
    %c0_i32 = arith.constant 0 : i32
    %c0_i32_0 = arith.constant 0 : i32
    %c0_i32_1 = arith.constant 0 : i32
    return %c0_i32, %c0_i32_0 : i32, i32
  }
  func.func @transform_7(%arg0: i32) -> (i32, i32) {
    %c0_i32 = arith.constant 0 : i32
    %c0_i32_0 = arith.constant 0 : i32
    %c0_i32_1 = arith.constant 0 : i32
    return %c0_i32, %c0_i32_0 : i32, i32
  }
  func.func @transform_8(%arg0: i32) -> (i32, i32) {
    %c0_i32 = arith.constant 0 : i32
    %c0_i32_0 = arith.constant 0 : i32
    %c0_i32_1 = arith.constant 0 : i32
    return %c0_i32, %c0_i32_0 : i32, i32
  }
  func.func @transform_9(%arg0: i32) -> (i32, i32) {
    %c0_i32 = arith.constant 0 : i32
    %c0_i32_0 = arith.constant 0 : i32
    %c0_i32_1 = arith.constant 0 : i32
    return %c0_i32, %c0_i32_0 : i32, i32
  }
  func.func @transform_10(%arg0: i32) -> (i32, i32) {
    %c0_i32 = arith.constant 0 : i32
    %c0_i32_0 = arith.constant 0 : i32
    %c0_i32_1 = arith.constant 0 : i32
    return %c0_i32, %c0_i32_0 : i32, i32
  }
  func.func @transform_11(%arg0: i32) -> (i32, i32) {
    %c0_i32 = arith.constant 0 : i32
    %c0_i32_0 = arith.constant 0 : i32
    return %arg0, %c0_i32 : i32, i32
  }
}

</mosaic_0001>

<llo_original>
// kernel: tpu_custom_call.1
$region0: #{tpu_custom_call.1}
  #allocation0 [shape = 'u32[]', space=smem, size = 0x4, offset = 0x4, fixed_abs, tag = 'smem constant byte address 0x4 - core index']
  #allocation1 [shape = 'u32[144,128]{1,0:T(1,128)}', space=vmem, size = 0x12000, scoped, tag = 'internal scratch']
  #allocation2 [shape = 'f32[8,16]{1,0:T(8,128)}', space=vmem, size = 0x1000, scoped, tag = 'scratch operand']
  %s0 = inlined_call_operand.vmem [shape: f32[16,16], index: 0, kind: input, shape index: {}]
  %s1 = inlined_call_operand.vmem [shape: f32[1,16], index: 1, kind: input, shape index: {}]
  %s2 = inlined_call_operand.vmem [shape: f32[1,16], index: 2, kind: input, shape index: {}]
  %s3 = inlined_call_operand.vmem [shape: bf16[256,8], index: 3, kind: input, shape index: {}]
  %s4 = inlined_call_operand.vmem [shape: f32[256,1], index: 4, kind: input, shape index: {}]
  %s5 = inlined_call_operand.vmem [shape: bf16[8,256], index: 5, kind: input, shape index: {}]
  %s6 = inlined_call_operand.vmem [shape: f32[8,1], index: 6, kind: input, shape index: {}]
  %s7 = inlined_call_operand.vmem [shape: bf16[16,2048], index: 7, kind: input, shape index: {}]
  %s8 = inlined_call_operand.vmem [shape: f32[1,2048], index: 8, kind: input, shape index: {}]
  %s9 = inlined_call_operand.vmem [shape: bf16[2048,16], index: 9, kind: input, shape index: {}]
  %s10 = inlined_call_operand.vmem [shape: f32[1,16], index: 10, kind: input, shape index: {}]
  %s11 = inlined_call_operand.hbm [shape: f32[16,16], index: 11, kind: output, shape index: {}]
  %s12 = sld [smem:[#allocation0]]
  $region77: #{tpu_custom_call.1} parent=0
    _
  %s14 = ssub.s32 1, %s12
  %s15 = scalar_select 0, %s14, %s12
  $region1: #{tpu_custom_call.1} parent=0
    #allocation3 [shape = 'u8[8192]{0}', space=vmem, size = 0x2000, scoped, tag = 'output window, operand 0']
    #allocation4 [shape = 's32[2]{0}', space=sflag, size = 0x8, scoped, tag = 'scoped memory for tpu_custom_call.1']
    %16 = vsyncpa [#allocation4], 0
    %s17 = scalar_lea.sflag [#allocation4], 1
    %18 = vsyncpa %s17, 0
    loop: start=0, step=1, limit=4
    $region2: #{tpu_custom_call.1} parent=1 // loop_pre_header
      _
    $region3: #{tpu_custom_call.1} parent=1 // loop_header
      %s20 = sphi 0, %s24
      %p21 = scmp.ge.s32.totalorder %s20, 4
      %s30 = sphi 0, %s32
      %s33 = sphi 0, %s30
      %s34 = sphi 0, %s33
      %s50 = sphi 0, %s34
      %s54 = sphi 0, %s54
      %s56 = sphi 0, %s54
      %s57 = sphi 0, %s56
      %s71 = sphi 0, %s57
      %s75 = sphi 0, %s75
      %s77 = sphi 0, %s75
      %s78 = sphi 0, %s77
      %s92 = sphi 0, %s78
      %s96 = sphi 0, %s96
      %s98 = sphi 0, %s96
      %s99 = sphi 0, %s98
      %s113 = sphi 0, %s99
      %s117 = sphi 0, %s117
      %s119 = sphi 0, %s117
      %s120 = sphi 0, %s119
      %s134 = sphi 0, %s120
      %s138 = sphi 0, %s138
      %s140 = sphi 0, %s138
      %s141 = sphi 0, %s140
      %s155 = sphi 0, %s141
      %s159 = sphi 0, %s159
      %s161 = sphi 0, %s159
      %s162 = sphi 0, %s161
      %s176 = sphi 0, %s162
      %s180 = sphi 0, %s180
      %s182 = sphi 0, %s180
      %s183 = sphi 0, %s182
      %s197 = sphi 0, %s183
      %s201 = sphi 0, %s201
      %s203 = sphi 0, %s201
      %s204 = sphi 0, %s203
      %s218 = sphi 0, %s204
      %s222 = sphi 0, %s222
      %s224 = sphi 0, %s222
      %s225 = sphi 0, %s224
      %s239 = sphi 0, %s225
      %s243 = sphi 0, %s243
      %s245 = sphi 0, %s243
      %s246 = sphi 0, %s245
      %s260 = sphi 0, %s246
      %s266 = sphi 0, %s268
      %s269 = sphi 0, %s266
      %s270 = sphi 0, %s269
      %s286 = sphi 0, %s270
    $region4: #{tpu_custom_call.1} parent=1 // loop_header_branch
      %23 = sbr.rel (%p21) target = $region8
    $region5: #{tpu_custom_call.1} parent=1 // loop_body
      %s25 = ssub.s32 %s20, 1
      %s26 = ssub.s32 %s20, 2
      %s27 = sadd.s32 %s20, 1
      %s28 = ssub.s32 %s20, %s27
      %p29 = scmp.eq.s32.totalorder %s28, 0
      %s31 = sadd.s32 %s30, 1
      %s32 = scalar_select %p29, %s30, %s31
      %p35 = pneg %p29
      %p36 = scmp.eq.s32.totalorder %s20, 1
      %p37 = por %p35, %p36
      %p38 = scmp.ne.s32.totalorder %s30, %s33
      %p39 = scmp.eq.s32.totalorder %s20, 0
      %p40 = por %p38, %p39
      %p41 = scmp.ne.s32.totalorder %s30, %s33
      %p42 = scmp.eq.s32.totalorder %s25, 1
      %p43 = por %p41, %p42
      %p44 = scmp.ne.s32.totalorder %s33, %s34
      %p45 = scmp.eq.s32.totalorder %s25, 0
      %p46 = por %p44, %p45
      %p47 = scmp.ne.s32.totalorder %s33, %s34
      %p48 = scmp.eq.s32.totalorder %s26, 1
      %p49 = por %p47, %p48
      %p51 = scmp.ne.s32.totalorder %s34, %s50
      %p52 = scmp.eq.s32.totalorder %s26, 0
      %p53 = por %p51, %p52
      %s55 = sadd.s32 %s54, 1
      %p58 = scmp.eq.s32.totalorder %s20, 1
      %p59 = scmp.ne.s32.totalorder %s54, %s56
      %p60 = scmp.eq.s32.totalorder %s20, 0
      %p61 = por %p59, %p60
      %p62 = scmp.ne.s32.totalorder %s54, %s56
      %p63 = scmp.eq.s32.totalorder %s25, 1
      %p64 = por %p62, %p63
      %p65 = scmp.ne.s32.totalorder %s56, %s57
      %p66 = scmp.eq.s32.totalorder %s25, 0
      %p67 = por %p65, %p66
      %p68 = scmp.ne.s32.totalorder %s56, %s57
      %p69 = scmp.eq.s32.totalorder %s26, 1
      %p70 = por %p68, %p69
      %p72 = scmp.ne.s32.totalorder %s57, %s71
      %p73 = scmp.eq.s32.totalorder %s26, 0
      %p74 = por %p72, %p73
      %s76 = sadd.s32 %s75, 1
      %p79 = scmp.eq.s32.totalorder %s20, 1
      %p80 = scmp.ne.s32.totalorder %s75, %s77
      %p81 = scmp.eq.s32.totalorder %s20, 0
      %p82 = por %p80, %p81
      %p83 = scmp.ne.s32.totalorder %s75, %s77
      %p84 = scmp.eq.s32.totalorder %s25, 1
      %p85 = por %p83, %p84
      %p86 = scmp.ne.s32.totalorder %s77, %s78
      %p87 = scmp.eq.s32.totalorder %s25, 0
      %p88 = por %p86, %p87
      %p89 = scmp.ne.s32.totalorder %s77, %s78
      %p90 = scmp.eq.s32.totalorder %s26, 1
      %p91 = por %p89, %p90
      %p93 = scmp.ne.s32.totalorder %s78, %s92
      %p94 = scmp.eq.s32.totalorder %s26, 0
      %p95 = por %p93, %p94
      %s97 = sadd.s32 %s96, 1
      %p100 = scmp.eq.s32.totalorder %s20, 1
      %p101 = scmp.ne.s32.totalorder %s96, %s98
      %p102 = scmp.eq.s32.totalorder %s20, 0
      %p103 = por %p101, %p102
      %p104 = scmp.ne.s32.totalorder %s96, %s98
      %p105 = scmp.eq.s32.totalorder %s25, 1
      %p106 = por %p104, %p105
      %p107 = scmp.ne.s32.totalorder %s98, %s99
      %p108 = scmp.eq.s32.totalorder %s25, 0
      %p109 = por %p107, %p108
      %p110 = scmp.ne.s32.totalorder %s98, %s99
      %p111 = scmp.eq.s32.totalorder %s26, 1
      %p112 = por %p110, %p111
      %p114 = scmp.ne.s32.totalorder %s99, %s113
      %p115 = scmp.eq.s32.totalorder %s26, 0
      %p116 = por %p114, %p115
      %s118 = sadd.s32 %s117, 1
      %p121 = scmp.eq.s32.totalorder %s20, 1
      %p122 = scmp.ne.s32.totalorder %s117, %s119
      %p123 = scmp.eq.s32.totalorder %s20, 0
      %p124 = por %p122, %p123
      %p125 = scmp.ne.s32.totalorder %s117, %s119
      %p126 = scmp.eq.s32.totalorder %s25, 1
      %p127 = por %p125, %p126
      %p128 = scmp.ne.s32.totalorder %s119, %s120
      %p129 = scmp.eq.s32.totalorder %s25, 0
      %p130 = por %p128, %p129
      %p131 = scmp.ne.s32.totalorder %s119, %s120
      %p132 = scmp.eq.s32.totalorder %s26, 1
      %p133 = por %p131, %p132
      %p135 = scmp.ne.s32.totalorder %s120, %s134
      %p136 = scmp.eq.s32.totalorder %s26, 0
      %p137 = por %p135, %p136
      %s139 = sadd.s32 %s138, 1
      %p142 = scmp.eq.s32.totalorder %s20, 1
      %p143 = scmp.ne.s32.totalorder %s138, %s140
      %p144 = scmp.eq.s32.totalorder %s20, 0
      %p145 = por %p143, %p144
      %p146 = scmp.ne.s32.totalorder %s138, %s140
      %p147 = scmp.eq.s32.totalorder %s25, 1
      %p148 = por %p146, %p147
      %p149 = scmp.ne.s32.totalorder %s140, %s141
      %p150 = scmp.eq.s32.totalorder %s25, 0
      %p151 = por %p149, %p150
      %p152 = scmp.ne.s32.totalorder %s140, %s141
      %p153 = scmp.eq.s32.totalorder %s26, 1
      %p154 = por %p152, %p153
      %p156 = scmp.ne.s32.totalorder %s141, %s155
      %p157 = scmp.eq.s32.totalorder %s26, 0
      %p158 = por %p156, %p157
      %s160 = sadd.s32 %s159, 1
      %p163 = scmp.eq.s32.totalorder %s20, 1
      %p164 = scmp.ne.s32.totalorder %s159, %s161
      %p165 = scmp.eq.s32.totalorder %s20, 0
      %p166 = por %p164, %p165
      %p167 = scmp.ne.s32.totalorder %s159, %s161
      %p168 = scmp.eq.s32.totalorder %s25, 1
      %p169 = por %p167, %p168
      %p170 = scmp.ne.s32.totalorder %s161, %s162
      %p171 = scmp.eq.s32.totalorder %s25, 0
      %p172 = por %p170, %p171
      %p173 = scmp.ne.s32.totalorder %s161, %s162
      %p174 = scmp.eq.s32.totalorder %s26, 1
      %p175 = por %p173, %p174
      %p177 = scmp.ne.s32.totalorder %s162, %s176
      %p178 = scmp.eq.s32.totalorder %s26, 0
      %p179 = por %p177, %p178
      %s181 = sadd.s32 %s180, 1
      %p184 = scmp.eq.s32.totalorder %s20, 1
      %p185 = scmp.ne.s32.totalorder %s180, %s182
      %p186 = scmp.eq.s32.totalorder %s20, 0
      %p187 = por %p185, %p186
      %p188 = scmp.ne.s32.totalorder %s180, %s182
      %p189 = scmp.eq.s32.totalorder %s25, 1
      %p190 = por %p188, %p189
      %p191 = scmp.ne.s32.totalorder %s182, %s183
      %p192 = scmp.eq.s32.totalorder %s25, 0
      %p193 = por %p191, %p192
      %p194 = scmp.ne.s32.totalorder %s182, %s183
      %p195 = scmp.eq.s32.totalorder %s26, 1
      %p196 = por %p194, %p195
      %p198 = scmp.ne.s32.totalorder %s183, %s197
      %p199 = scmp.eq.s32.totalorder %s26, 0
      %p200 = por %p198, %p199
      %s202 = sadd.s32 %s201, 1
      %p205 = scmp.eq.s32.totalorder %s20, 1
      %p206 = scmp.ne.s32.totalorder %s201, %s203
      %p207 = scmp.eq.s32.totalorder %s20, 0
      %p208 = por %p206, %p207
      %p209 = scmp.ne.s32.totalorder %s201, %s203
      %p210 = scmp.eq.s32.totalorder %s25, 1
      %p211 = por %p209, %p210
      %p212 = scmp.ne.s32.totalorder %s203, %s204
      %p213 = scmp.eq.s32.totalorder %s25, 0
      %p214 = por %p212, %p213
      %p215 = scmp.ne.s32.totalorder %s203, %s204
      %p216 = scmp.eq.s32.totalorder %s26, 1
      %p217 = por %p215, %p216
      %p219 = scmp.ne.s32.totalorder %s204, %s218
      %p220 = scmp.eq.s32.totalorder %s26, 0
      %p221 = por %p219, %p220
      %s223 = sadd.s32 %s222, 1
      %p226 = scmp.eq.s32.totalorder %s20, 1
      %p227 = scmp.ne.s32.totalorder %s222, %s224
      %p228 = scmp.eq.s32.totalorder %s20, 0
      %p229 = por %p227, %p228
      %p230 = scmp.ne.s32.totalorder %s222, %s224
      %p231 = scmp.eq.s32.totalorder %s25, 1
      %p232 = por %p230, %p231
      %p233 = scmp.ne.s32.totalorder %s224, %s225
      %p234 = scmp.eq.s32.totalorder %s25, 0
      %p235 = por %p233, %p234
      %p236 = scmp.ne.s32.totalorder %s224, %s225
      %p237 = scmp.eq.s32.totalorder %s26, 1
      %p238 = por %p236, %p237
      %p240 = scmp.ne.s32.totalorder %s225, %s239
      %p241 = scmp.eq.s32.totalorder %s26, 0
      %p242 = por %p240, %p241
      %s244 = sadd.s32 %s243, 1
      %p247 = scmp.eq.s32.totalorder %s20, 1
      %p248 = scmp.ne.s32.totalorder %s243, %s245
      %p249 = scmp.eq.s32.totalorder %s20, 0
      %p250 = por %p248, %p249
      %p251 = scmp.ne.s32.totalorder %s243, %s245
      %p252 = scmp.eq.s32.totalorder %s25, 1
      %p253 = por %p251, %p252
      %p254 = scmp.ne.s32.totalorder %s245, %s246
      %p255 = scmp.eq.s32.totalorder %s25, 0
      %p256 = por %p254, %p255
      %p257 = scmp.ne.s32.totalorder %s245, %s246
      %p258 = scmp.eq.s32.totalorder %s26, 1
      %p259 = por %p257, %p258
      %p261 = scmp.ne.s32.totalorder %s246, %s260
      %p262 = scmp.eq.s32.totalorder %s26, 0
      %p263 = por %p261, %p262
      %s264 = ssub.s32 %s20, %s27
      %p265 = scmp.eq.s32.totalorder %s264, 0
      %s267 = sadd.s32 %s266, 1
      %s268 = scalar_select %p265, %s266, %s267
      %p271 = pneg %p265
      %p272 = scmp.eq.s32.totalorder %s20, 1
      %p273 = por %p271, %p272
      %p274 = scmp.ne.s32.totalorder %s266, %s269
      %p275 = scmp.eq.s32.totalorder %s20, 0
      %p276 = por %p274, %p275
      %p277 = scmp.ne.s32.totalorder %s266, %s269
      %p278 = scmp.eq.s32.totalorder %s25, 1
      %p279 = por %p277, %p278
      %p280 = scmp.ne.s32.totalorder %s269, %s270
      %p281 = scmp.eq.s32.totalorder %s25, 0
      %p282 = por %p280, %p281
      %p283 = scmp.ne.s32.totalorder %s269, %s270
      %p284 = scmp.eq.s32.totalorder %s26, 1
      %p285 = por %p283, %p284
      %p287 = scmp.ne.s32.totalorder %s270, %s286
      %p288 = scmp.eq.s32.totalorder %s26, 0
      %p289 = por %p287, %p288
      %p290 = scmp.le.s32.totalorder 1, %s20
      %p291 = scmp.lt.s32.totalorder %s20, 3
      %p292 = pnand %p290, %p291
      %p293 = pneg %p292
      // Predicated region
      $region9: #{tpu_custom_call.1} parent=5 // pred_check
        _
      $region10: #{tpu_custom_call.1} parent=5 // pred_check_branch
        %295 = sbr.rel (%p292) target = $region12
      $region11: #{tpu_custom_call.1} parent=5 // pred_region
        %s296 = ssub.s32 %s20, 1
        // Predicated region
        $region13: #{tpu_custom_call.1} parent=11 // pred_check
          %p297 = pneg %p67
        $region14: #{tpu_custom_call.1} parent=11 // pred_check_branch
          %299 = sbr.rel (%p297) target = $region16
        $region15: #{tpu_custom_call.1} parent=11 // pred_region
          _
        $region16: #{tpu_custom_call.1} parent=11 // pred_fallthru
          _
        // Predicated region
        $region17: #{tpu_custom_call.1} parent=11 // pred_check
          %p300 = pneg %p88
        $region18: #{tpu_custom_call.1} parent=11 // pred_check_branch
          %302 = sbr.rel (%p300) target = $region20
        $region19: #{tpu_custom_call.1} parent=11 // pred_region
          _
        $region20: #{tpu_custom_call.1} parent=11 // pred_fallthru
          _
        // Predicated region
        $region21: #{tpu_custom_call.1} parent=11 // pred_check
          %p303 = pneg %p109
        $region22: #{tpu_custom_call.1} parent=11 // pred_check_branch
          %305 = sbr.rel (%p303) target = $region24
        $region23: #{tpu_custom_call.1} parent=11 // pred_region
          _
        $region24: #{tpu_custom_call.1} parent=11 // pred_fallthru
          _
        // Predicated region
        $region25: #{tpu_custom_call.1} parent=11 // pred_check
          %p306 = pneg %p130
        $region26: #{tpu_custom_call.1} parent=11 // pred_check_branch
          %308 = sbr.rel (%p306) target = $region28
        $region27: #{tpu_custom_call.1} parent=11 // pred_region
          _
        $region28: #{tpu_custom_call.1} parent=11 // pred_fallthru
          _
        // Predicated region
        $region29: #{tpu_custom_call.1} parent=11 // pred_check
          %p309 = pneg %p151
        $region30: #{tpu_custom_call.1} parent=11 // pred_check_branch
          %311 = sbr.rel (%p309) target = $region32
        $region31: #{tpu_custom_call.1} parent=11 // pred_region
          _
        $region32: #{tpu_custom_call.1} parent=11 // pred_fallthru
          _
        // Predicated region
        $region33: #{tpu_custom_call.1} parent=11 // pred_check
          %p312 = pneg %p172
        $region34: #{tpu_custom_call.1} parent=11 // pred_check_branch
          %314 = sbr.rel (%p312) target = $region36
        $region35: #{tpu_custom_call.1} parent=11 // pred_region
          _
        $region36: #{tpu_custom_call.1} parent=11 // pred_fallthru
          _
        // Predicated region
        $region37: #{tpu_custom_call.1} parent=11 // pred_check
          %p315 = pneg %p193
        $region38: #{tpu_custom_call.1} parent=11 // pred_check_branch
          %317 = sbr.rel (%p315) target = $region40
        $region39: #{tpu_custom_call.1} parent=11 // pred_region
          _
        $region40: #{tpu_custom_call.1} parent=11 // pred_fallthru
          _
        // Predicated region
        $region41: #{tpu_custom_call.1} parent=11 // pred_check
          %p318 = pneg %p214
        $region42: #{tpu_custom_call.1} parent=11 // pred_check_branch
          %320 = sbr.rel (%p318) target = $region44
        $region43: #{tpu_custom_call.1} parent=11 // pred_region
          _
        $region44: #{tpu_custom_call.1} parent=11 // pred_fallthru
          _
        // Predicated region
        $region45: #{tpu_custom_call.1} parent=11 // pred_check
          %p321 = pneg %p235
        $region46: #{tpu_custom_call.1} parent=11 // pred_check_branch
          %323 = sbr.rel (%p321) target = $region48
        $region47: #{tpu_custom_call.1} parent=11 // pred_region
          _
        $region48: #{tpu_custom_call.1} parent=11 // pred_fallthru
          _
        // Predicated region
        $region49: #{tpu_custom_call.1} parent=11 // pred_check
          %p324 = pneg %p256
        $region50: #{tpu_custom_call.1} parent=11 // pred_check_branch
          %326 = sbr.rel (%p324) target = $region52
        $region51: #{tpu_custom_call.1} parent=11 // pred_region
          _
        $region52: #{tpu_custom_call.1} parent=11 // pred_fallthru
          _
      $region12: #{tpu_custom_call.1} parent=5 // pred_fallthru
        _
      %p327 = scmp.lt.s32.totalorder %s20, 2
      // Predicated region
      $region53: #{tpu_custom_call.1} parent=5 // pred_check
        %p328 = pneg %p327
      $region54: #{tpu_custom_call.1} parent=5 // pred_check_branch
        %330 = sbr.rel (%p328) target = $region56
      $region55: #{tpu_custom_call.1} parent=5 // pred_region
        // Predicated region
        $region57: #{tpu_custom_call.1} parent=55 // pred_check
          %p331 = pneg %p40
        $region58: #{tpu_custom_call.1} parent=55 // pred_check_branch
          %333 = sbr.rel (%p331) target = $region60
        $region59: #{tpu_custom_call.1} parent=55 // pred_region
          %p334 = scmp.lt.s32.totalorder %s20, 1
          %s335 = scalar_select %p334, %s20, 1
          %s336 = smul.addr %s335, 8
          %s337 = scalar_lea.vmem %s0, %s336
        $region60: #{tpu_custom_call.1} parent=55 // pred_fallthru
          _
      $region56: #{tpu_custom_call.1} parent=5 // pred_fallthru
        _
      %p338 = scmp.le.s32.totalorder 1, %s20
      %p339 = scmp.lt.s32.totalorder %s20, 3
      %p340 = pnand %p338, %p339
      %p341 = pneg %p340
      // Predicated region
      $region61: #{tpu_custom_call.1} parent=5 // pred_check
        _
      $region62: #{tpu_custom_call.1} parent=5 // pred_check_branch
        %343 = sbr.rel (%p340) target = $region64
      $region63: #{tpu_custom_call.1} parent=5 // pred_region
        %s344 = ssub.s32 %s20, 1
        %p345 = scmp.lt.s32.totalorder %s25, 1
        %s346 = scalar_select %p345, %s25, 1
        %s347 = smul.addr %s346, 8
        %s348 = scalar_lea.vmem %s0, %s347
        %p349 = pneg %p46
        %p350 = pneg %p43
        %p351 = pneg %p67
        %p352 = pneg %p64
        %p353 = pneg %p88
        %p354 = pneg %p85
        %p355 = pneg %p109
        %p356 = pneg %p106
        %p357 = pneg %p130
        %p358 = pneg %p127
        %p359 = pneg %p151
        %p360 = pneg %p148
        %p361 = pneg %p172
        %p362 = pneg %p169
        %p363 = pneg %p193
        %p364 = pneg %p190
        %p365 = pneg %p214
        %p366 = pneg %p211
        %p367 = pneg %p235
        %p368 = pneg %p232
        %p369 = pneg %p256
        %p370 = pneg %p253
        %p371 = pneg %p282
        %p372 = pneg %p279
        %s373 = sand.u32 %s269, 1
        %s374 = scalar_lea.sflag [#allocation4], %s373
        %s375 = sand.u32 %s269, 1
        %s376 = smul.addr %s375, 8
        %s377 = scalar_lea.vmem [#allocation3], %s376
        %p378 = scmp.lt.s32.totalorder %s25, 1
        %s379 = scalar_select %p378, %s25, 1
        %s380 = smul.addr %s379, 8
        %s381 = scalar_lea.vmem %s0, %s380
        %v383 = vld [vmem:[%s1] sm:$0x1]
        %v384 = vld [vmem:[%s2] sm:$0x1]
        %v385 = vld [vmem:[%s3] sm:$0xf]
        %v386 = vld [vmem:[%s3 + $0x4] sm:$0xf]
        %v387 = vld [vmem:[%s3 + $0x8] sm:$0xf]
        %v388 = vld [vmem:[%s3 + $0xc] sm:$0xf]
        %v389 = vld [vmem:[%s3 + $0x10] sm:$0xf]
        %v390 = vld [vmem:[%s3 + $0x14] sm:$0xf]
        %v391 = vld [vmem:[%s3 + $0x18] sm:$0xf]
        %v392 = vld [vmem:[%s3 + $0x1c] sm:$0xf]
        %v393 = vld [vmem:[%s3 + $0x20] sm:$0xf]
        %v394 = vld [vmem:[%s3 + $0x24] sm:$0xf]
        %v395 = vld [vmem:[%s3 + $0x28] sm:$0xf]
        %v396 = vld [vmem:[%s3 + $0x2c] sm:$0xf]
        %v397 = vld [vmem:[%s3 + $0x30] sm:$0xf]
        %v398 = vld [vmem:[%s3 + $0x34] sm:$0xf]
        %v399 = vld [vmem:[%s3 + $0x38] sm:$0xf]
        %v400 = vld [vmem:[%s3 + $0x3c] sm:$0xf]
        %v401 = vld [vmem:[%s3 + $0x40] sm:$0xf]
        %v402 = vld [vmem:[%s3 + $0x44] sm:$0xf]
        %v403 = vld [vmem:[%s3 + $0x48] sm:$0xf]
        %v404 = vld [vmem:[%s3 + $0x4c] sm:$0xf]
        %v405 = vld [vmem:[%s3 + $0x50] sm:$0xf]
        %v406 = vld [vmem:[%s3 + $0x54] sm:$0xf]
        %v407 = vld [vmem:[%s3 + $0x58] sm:$0xf]
        %v408 = vld [vmem:[%s3 + $0x5c] sm:$0xf]
        %v409 = vld [vmem:[%s3 + $0x60] sm:$0xf]
        %v410 = vld [vmem:[%s3 + $0x64] sm:$0xf]
        %v411 = vld [vmem:[%s3 + $0x68] sm:$0xf]
        %v412 = vld [vmem:[%s3 + $0x6c] sm:$0xf]
        %v413 = vld [vmem:[%s3 + $0x70] sm:$0xf]
        %v414 = vld [vmem:[%s3 + $0x74] sm:$0xf]
        %v415 = vld [vmem:[%s3 + $0x78] sm:$0xf]
        %v416 = vld [vmem:[%s3 + $0x7c] sm:$0xf]
        %v417 = vld [vmem:[%s5] sm:$0xff]
        %v418 = vld [vmem:[%s4] sm:$0xff]
        %v419 = vld [vmem:[%s4 + $0x8] sm:$0xff]
        %v420 = vld [vmem:[%s4 + $0x10] sm:$0xff]
        %v421 = vld [vmem:[%s4 + $0x18] sm:$0xff]
        %v422 = vld [vmem:[%s4 + $0x20] sm:$0xff]
        %v423 = vld [vmem:[%s4 + $0x28] sm:$0xff]
        %v424 = vld [vmem:[%s4 + $0x30] sm:$0xff]
        %v425 = vld [vmem:[%s4 + $0x38] sm:$0xff]
        %v426 = vld [vmem:[%s4 + $0x40] sm:$0xff]
        %v427 = vld [vmem:[%s4 + $0x48] sm:$0xff]
        %v428 = vld [vmem:[%s4 + $0x50] sm:$0xff]
        %v429 = vld [vmem:[%s4 + $0x58] sm:$0xff]
        %v430 = vld [vmem:[%s4 + $0x60] sm:$0xff]
        %v431 = vld [vmem:[%s4 + $0x68] sm:$0xff]
        %v432 = vld [vmem:[%s4 + $0x70] sm:$0xff]
        %v433 = vld [vmem:[%s4 + $0x78] sm:$0xff]
        %v434 = vld [vmem:[%s4 + $0x80] sm:$0xff]
        %v435 = vld [vmem:[%s4 + $0x88] sm:$0xff]
        %v436 = vld [vmem:[%s4 + $0x90] sm:$0xff]
        %v437 = vld [vmem:[%s4 + $0x98] sm:$0xff]
        %v438 = vld [vmem:[%s4 + $0xa0] sm:$0xff]
        %v439 = vld [vmem:[%s4 + $0xa8] sm:$0xff]
        %v440 = vld [vmem:[%s4 + $0xb0] sm:$0xff]
        %v441 = vld [vmem:[%s4 + $0xb8] sm:$0xff]
        %v442 = vld [vmem:[%s4 + $0xc0] sm:$0xff]
        %v443 = vld [vmem:[%s4 + $0xc8] sm:$0xff]
        %v444 = vld [vmem:[%s4 + $0xd0] sm:$0xff]
        %v445 = vld [vmem:[%s4 + $0xd8] sm:$0xff]
        %v446 = vld [vmem:[%s4 + $0xe0] sm:$0xff]
        %v447 = vld [vmem:[%s4 + $0xe8] sm:$0xff]
        %v448 = vld [vmem:[%s4 + $0xf0] sm:$0xff]
        %v449 = vld [vmem:[%s4 + $0xf8] sm:$0xff]
        %451 = vset.pattern.permute.xlu0 0
        %452 = vperm.xlu0 %451, %v418
        %v453 = vpop.permute.xlu0 %452
        %456 = vset.pattern.permute.xlu0 0
        %457 = vperm.xlu0 %456, %v419
        %v458 = vpop.permute.xlu0 %457
        %461 = vset.pattern.permute.xlu0 0
        %462 = vperm.xlu0 %461, %v420
        %v463 = vpop.permute.xlu0 %462
        %466 = vset.pattern.permute.xlu0 0
        %467 = vperm.xlu0 %466, %v421
        %v468 = vpop.permute.xlu0 %467
        %471 = vset.pattern.permute.xlu0 0
        %472 = vperm.xlu0 %471, %v422
        %v473 = vpop.permute.xlu0 %472
        %476 = vset.pattern.permute.xlu0 0
        %477 = vperm.xlu0 %476, %v423
        %v478 = vpop.permute.xlu0 %477
        %481 = vset.pattern.permute.xlu0 0
        %482 = vperm.xlu0 %481, %v424
        %v483 = vpop.permute.xlu0 %482
        %486 = vset.pattern.permute.xlu0 0
        %487 = vperm.xlu0 %486, %v425
        %v488 = vpop.permute.xlu0 %487
        %491 = vset.pattern.permute.xlu0 0
        %492 = vperm.xlu0 %491, %v426
        %v493 = vpop.permute.xlu0 %492
        %496 = vset.pattern.permute.xlu0 0
        %497 = vperm.xlu0 %496, %v427
        %v498 = vpop.permute.xlu0 %497
        %501 = vset.pattern.permute.xlu0 0
        %502 = vperm.xlu0 %501, %v428
        %v503 = vpop.permute.xlu0 %502
        %506 = vset.pattern.permute.xlu0 0
        %507 = vperm.xlu0 %506, %v429
        %v508 = vpop.permute.xlu0 %507
        %511 = vset.pattern.permute.xlu0 0
        %512 = vperm.xlu0 %511, %v430
        %v513 = vpop.permute.xlu0 %512
        %516 = vset.pattern.permute.xlu0 0
        %517 = vperm.xlu0 %516, %v431
        %v518 = vpop.permute.xlu0 %517
        %521 = vset.pattern.permute.xlu0 0
        %522 = vperm.xlu0 %521, %v432
        %v523 = vpop.permute.xlu0 %522
        %526 = vset.pattern.permute.xlu0 0
        %527 = vperm.xlu0 %526, %v433
        %v528 = vpop.permute.xlu0 %527
        %531 = vset.pattern.permute.xlu0 0
        %532 = vperm.xlu0 %531, %v434
        %v533 = vpop.permute.xlu0 %532
        %536 = vset.pattern.permute.xlu0 0
        %537 = vperm.xlu0 %536, %v435
        %v538 = vpop.permute.xlu0 %537
        %541 = vset.pattern.permute.xlu0 0
        %542 = vperm.xlu0 %541, %v436
        %v543 = vpop.permute.xlu0 %542
        %546 = vset.pattern.permute.xlu0 0
        %547 = vperm.xlu0 %546, %v437
        %v548 = vpop.permute.xlu0 %547
        %551 = vset.pattern.permute.xlu0 0
        %552 = vperm.xlu0 %551, %v438
        %v553 = vpop.permute.xlu0 %552
        %556 = vset.pattern.permute.xlu0 0
        %557 = vperm.xlu0 %556, %v439
        %v558 = vpop.permute.xlu0 %557
        %561 = vset.pattern.permute.xlu0 0
        %562 = vperm.xlu0 %561, %v440
        %v563 = vpop.permute.xlu0 %562
        %566 = vset.pattern.permute.xlu0 0
        %567 = vperm.xlu0 %566, %v441
        %v568 = vpop.permute.xlu0 %567
        %571 = vset.pattern.permute.xlu0 0
        %572 = vperm.xlu0 %571, %v442
        %v573 = vpop.permute.xlu0 %572
        %576 = vset.pattern.permute.xlu0 0
        %577 = vperm.xlu0 %576, %v443
        %v578 = vpop.permute.xlu0 %577
        %581 = vset.pattern.permute.xlu0 0
        %582 = vperm.xlu0 %581, %v444
        %v583 = vpop.permute.xlu0 %582
        %586 = vset.pattern.permute.xlu0 0
        %587 = vperm.xlu0 %586, %v445
        %v588 = vpop.permute.xlu0 %587
        %591 = vset.pattern.permute.xlu0 0
        %592 = vperm.xlu0 %591, %v446
        %v593 = vpop.permute.xlu0 %592
        %596 = vset.pattern.permute.xlu0 0
        %597 = vperm.xlu0 %596, %v447
        %v598 = vpop.permute.xlu0 %597
        %601 = vset.pattern.permute.xlu0 0
        %602 = vperm.xlu0 %601, %v448
        %v603 = vpop.permute.xlu0 %602
        %606 = vset.pattern.permute.xlu0 0
        %607 = vperm.xlu0 %606, %v449
        %v608 = vpop.permute.xlu0 %607
        %v610 = vld [vmem:[%s6] sm:$0xff]
        %612 = vset.pattern.permute.xlu0 0
        %613 = vperm.xlu0 %612, %v610
        %v614 = vpop.permute.xlu0 %613
        %v616 = vld [vmem:[%s381] sm:$0xff]
        %vm617 = vcmask 130048
        %v618 = vsel %vm617, %v616, 0.0
        %619 = vadd.xlane.f32.xlu0 %v618
        %v620 = vpop.xlane.xlu0 %619
        %v621 = vrcp.pop 16.0
        %v622 = vmul.f32 %v620, %v621
        %v623 = vsub.f32 %v616, %v622
        %v624 = vmul.f32 %v623, %v623
        %v625 = vsel %vm617, %v624, 0.0
        %626 = vadd.xlane.f32.xlu0 %v625
        %v627 = vpop.xlane.xlu0 %626
        %v628 = vmul.f32 %v627, %v621
        %v629 = vadd.f32 %v628, 1e-05
        %v630 = vrsqrt.pop %v629
        %v631 = vmul.f32 %v623, %v630
        %v633 = vlaneseq
        %v634 = vshrl.u32 %v633, 7
        %v635 = vsub.s32 0, %v634
        %v636 = vrot.slane %v383, %v635
        %v638 = vmul.f32 %v631, %v636
        %v640 = vlaneseq
        %v641 = vshrl.u32 %v640, 7
        %v642 = vsub.s32 0, %v641
        %v643 = vrot.slane %v384, %v642
        %v645 = vadd.f32 %v638, %v643
        %v646 = vpack.c.bf16 %v645, %v645
        %v679 = vunpack.c.l.b16 %v385
        %v680 = vunpack.c.l.b16 %v386
        %v681 = vunpack.c.l.b16 %v387
        %v682 = vunpack.c.l.b16 %v388
        %v683 = vunpack.c.l.b16 %v389
        %v684 = vunpack.c.l.b16 %v390
        %v685 = vunpack.c.l.b16 %v391
        %v686 = vunpack.c.l.b16 %v392
        %v687 = vunpack.c.l.b16 %v393
        %v688 = vunpack.c.l.b16 %v394
        %v689 = vunpack.c.l.b16 %v395
        %v690 = vunpack.c.l.b16 %v396
        %v691 = vunpack.c.l.b16 %v397
        %v692 = vunpack.c.l.b16 %v398
        %v693 = vunpack.c.l.b16 %v399
        %v694 = vunpack.c.l.b16 %v400
        %v695 = vunpack.c.l.b16 %v401
        %v696 = vunpack.c.l.b16 %v402
        %v697 = vunpack.c.l.b16 %v403
        %v698 = vunpack.c.l.b16 %v404
        %v699 = vunpack.c.l.b16 %v405
        %v700 = vunpack.c.l.b16 %v406
        %v701 = vunpack.c.l.b16 %v407
        %v702 = vunpack.c.l.b16 %v408
        %v703 = vunpack.c.l.b16 %v409
        %v704 = vunpack.c.l.b16 %v410
        %v705 = vunpack.c.l.b16 %v411
        %v706 = vunpack.c.l.b16 %v412
        %v707 = vunpack.c.l.b16 %v413
        %v708 = vunpack.c.l.b16 %v414
        %v709 = vunpack.c.l.b16 %v415
        %v710 = vunpack.c.l.b16 %v416
        %v711 = vpack.c.b16 %v680, %v679
        %v712 = vpack.c.b16 %v682, %v681
        %v713 = vpack.c.b16 %v684, %v683
        %v714 = vpack.c.b16 %v686, %v685
        %v715 = vpack.c.b16 %v688, %v687
        %v716 = vpack.c.b16 %v690, %v689
        %v717 = vpack.c.b16 %v692, %v691
        %v718 = vpack.c.b16 %v694, %v693
        %v719 = vpack.c.b16 %v696, %v695
        %v720 = vpack.c.b16 %v698, %v697
        %v721 = vpack.c.b16 %v700, %v699
        %v722 = vpack.c.b16 %v702, %v701
        %v723 = vpack.c.b16 %v704, %v703
        %v724 = vpack.c.b16 %v706, %v705
        %v725 = vpack.c.b16 %v708, %v707
        %v726 = vpack.c.b16 %v710, %v709
        %vm727 = vcmask 64512
        %v729 = vsel %vm727, %v711, 0
        %v732 = vsel %vm727, %v712, 0
        %v735 = vsel %vm727, %v713, 0
        %v738 = vsel %vm727, %v714, 0
        %v741 = vsel %vm727, %v715, 0
        %v744 = vsel %vm727, %v716, 0
        %v747 = vsel %vm727, %v717, 0
        %v750 = vsel %vm727, %v718, 0
        %v753 = vsel %vm727, %v719, 0
        %v756 = vsel %vm727, %v720, 0
        %v759 = vsel %vm727, %v721, 0
        %v762 = vsel %vm727, %v722, 0
        %v765 = vsel %vm727, %v723, 0
        %v768 = vsel %vm727, %v724, 0
        %v771 = vsel %vm727, %v725, 0
        %v774 = vsel %vm727, %v726, 0
        %vm776 = vcmask 1043456
        %v778 = vsel %vm776, %v646, 0
        %780 = vmatprep.subr.bf16.mxu0 0
        %781 = vmatpush1.bf16.msra.mxu0 %v778
        %782 = vmatprep.subr.bf16.mxu0 0
        %783 = vmatpush1.bf16.msra.mxu0 0
        %784 = vmatprep.subr.bf16.mxu0 0
        %785 = vmatpush1.bf16.msra.mxu0 0
        %786 = vmatprep.subr.bf16.mxu0 0
        %787 = vmatpush1.bf16.msra.mxu0 0
        %788 = vmatprep.subr.bf16.mxu0 0
        %789 = vmatpush1.bf16.msra.mxu0 0
        %790 = vmatprep.subr.bf16.mxu0 0
        %791 = vmatpush1.bf16.msra.mxu0 0
        %792 = vmatprep.subr.bf16.mxu0 0
        %793 = vmatpush1.bf16.msra.mxu0 0
        %794 = vmatprep.subr.bf16.mxu0 0
        %795 = vmatpush1.bf16.msra.mxu0 0
        %796 = vmatprep.subr.bf16.mxu0 0
        %797 = vmatpush1.bf16.msra.mxu0 0
        %798 = vmatprep.subr.bf16.mxu0 0
        %799 = vmatpush1.bf16.msra.mxu0 0
        %800 = vmatprep.subr.bf16.mxu0 0
        %801 = vmatpush1.bf16.msra.mxu0 0
        %802 = vmatprep.subr.bf16.mxu0 0
        %803 = vmatpush1.bf16.msra.mxu0 0
        %804 = vmatprep.subr.bf16.mxu0 0
        %805 = vmatpush1.bf16.msra.mxu0 0
        %806 = vmatprep.subr.bf16.mxu0 0
        %807 = vmatpush1.bf16.msra.mxu0 0
        %808 = vmatprep.subr.bf16.mxu0 0
        %809 = vmatpush1.bf16.msra.mxu0 0
        %810 = vmatprep.subr.bf16.mxu0 0
        %811 = vmatpush1.bf16.msra.mxu0 0
        %812 = vmatprep.mubr.bf16.mxu0 0
        %813 = vmatmul.mubr.bf16.gmra.mrb[0].mxu0 %v729
        %v814 = vpop.f32.mrb[0].mxu0
        %v815 = vadd.f32 %v453, %v814
        %v816 = vpop.f32.mrb[0].mxu0
        %v817 = vpop.f32.mrb[0].mxu0
        %v818 = vadd.f32 %v458, %v817
        %v819 = vpop.f32.mrb[0].mxu0
        %820 = vmatprep.mubr.bf16.mxu0 0
        %821 = vmatmul.mubr.bf16.gmra.mrb[0].mxu0 %v732
        %v822 = vpop.f32.mrb[0].mxu0
        %v823 = vadd.f32 %v463, %v822
        %v824 = vpop.f32.mrb[0].mxu0
        %v825 = vpop.f32.mrb[0].mxu0
        %v826 = vadd.f32 %v468, %v825
        %v827 = vpop.f32.mrb[0].mxu0
        %828 = vmatprep.mubr.bf16.mxu0 0
        %829 = vmatmul.mubr.bf16.gmra.mrb[0].mxu0 %v735
        %v830 = vpop.f32.mrb[0].mxu0
        %v831 = vadd.f32 %v473, %v830
        %v832 = vpop.f32.mrb[0].mxu0
        %v833 = vpop.f32.mrb[0].mxu0
        %v834 = vadd.f32 %v478, %v833
        %v835 = vpop.f32.mrb[0].mxu0
        %836 = vmatprep.mubr.bf16.mxu0 0
        %837 = vmatmul.mubr.bf16.gmra.mrb[0].mxu0 %v738
        %v838 = vpop.f32.mrb[0].mxu0
        %v839 = vadd.f32 %v483, %v838
        %v840 = vpop.f32.mrb[0].mxu0
        %v841 = vpop.f32.mrb[0].mxu0
        %v842 = vadd.f32 %v488, %v841
        %v843 = vpop.f32.mrb[0].mxu0
        %844 = vmatprep.mubr.bf16.mxu0 0
        %845 = vmatmul.mubr.bf16.gmra.mrb[0].mxu0 %v741
        %v846 = vpop.f32.mrb[0].mxu0
        %v847 = vadd.f32 %v493, %v846
        %v848 = vpop.f32.mrb[0].mxu0
        %v849 = vpop.f32.mrb[0].mxu0
        %v850 = vadd.f32 %v498, %v849
        %v851 = vpop.f32.mrb[0].mxu0
        %852 = vmatprep.mubr.bf16.mxu0 0
        %853 = vmatmul.mubr.bf16.gmra.mrb[0].mxu0 %v744
        %v854 = vpop.f32.mrb[0].mxu0
        %v855 = vadd.f32 %v503, %v854
        %v856 = vpop.f32.mrb[0].mxu0
        %v857 = vpop.f32.mrb[0].mxu0
        %v858 = vadd.f32 %v508, %v857
        %v859 = vpop.f32.mrb[0].mxu0
        %860 = vmatprep.mubr.bf16.mxu0 0
        %861 = vmatmul.mubr.bf16.gmra.mrb[0].mxu0 %v747
        %v862 = vpop.f32.mrb[0].mxu0
        %v863 = vadd.f32 %v513, %v862
        %v864 = vpop.f32.mrb[0].mxu0
        %v865 = vpop.f32.mrb[0].mxu0
        %v866 = vadd.f32 %v518, %v865
        %v867 = vpop.f32.mrb[0].mxu0
        %868 = vmatprep.mubr.bf16.mxu0 0
        %869 = vmatmul.mubr.bf16.gmra.mrb[0].mxu0 %v750
        %v870 = vpop.f32.mrb[0].mxu0
        %v871 = vadd.f32 %v523, %v870
        %v872 = vpop.f32.mrb[0].mxu0
        %v873 = vpop.f32.mrb[0].mxu0
        %v874 = vadd.f32 %v528, %v873
        %v875 = vpop.f32.mrb[0].mxu0
        %876 = vmatprep.mubr.bf16.mxu0 0
        %877 = vmatmul.mubr.bf16.gmra.mrb[0].mxu0 %v753
        %v878 = vpop.f32.mrb[0].mxu0
        %v879 = vadd.f32 %v533, %v878
        %v880 = vpop.f32.mrb[0].mxu0
        %v881 = vpop.f32.mrb[0].mxu0
        %v882 = vadd.f32 %v538, %v881
        %v883 = vpop.f32.mrb[0].mxu0
        %884 = vmatprep.mubr.bf16.mxu0 0
        %885 = vmatmul.mubr.bf16.gmra.mrb[0].mxu0 %v756
        %v886 = vpop.f32.mrb[0].mxu0
        %v887 = vadd.f32 %v543, %v886
        %v888 = vpop.f32.mrb[0].mxu0
        %v889 = vpop.f32.mrb[0].mxu0
        %v890 = vadd.f32 %v548, %v889
        %v891 = vpop.f32.mrb[0].mxu0
        %892 = vmatprep.mubr.bf16.mxu0 0
        %893 = vmatmul.mubr.bf16.gmra.mrb[0].mxu0 %v759
        %v894 = vpop.f32.mrb[0].mxu0
        %v895 = vadd.f32 %v553, %v894
        %v896 = vpop.f32.mrb[0].mxu0
        %v897 = vpop.f32.mrb[0].mxu0
        %v898 = vadd.f32 %v558, %v897
        %v899 = vpop.f32.mrb[0].mxu0
        %900 = vmatprep.mubr.bf16.mxu0 0
        %901 = vmatmul.mubr.bf16.gmra.mrb[0].mxu0 %v762
        %v902 = vpop.f32.mrb[0].mxu0
        %v903 = vadd.f32 %v563, %v902
        %v904 = vpop.f32.mrb[0].mxu0
        %v905 = vpop.f32.mrb[0].mxu0
        %v906 = vadd.f32 %v568, %v905
        %v907 = vpop.f32.mrb[0].mxu0
        %908 = vmatprep.mubr.bf16.mxu0 0
        %909 = vmatmul.mubr.bf16.gmra.mrb[0].mxu0 %v765
        %v910 = vpop.f32.mrb[0].mxu0
        %v911 = vadd.f32 %v573, %v910
        %v912 = vpop.f32.mrb[0].mxu0
        %v913 = vpop.f32.mrb[0].mxu0
        %v914 = vadd.f32 %v578, %v913
        %v915 = vpop.f32.mrb[0].mxu0
        %916 = vmatprep.mubr.bf16.mxu0 0
        %917 = vmatmul.mubr.bf16.gmra.mrb[0].mxu0 %v768
        %v918 = vpop.f32.mrb[0].mxu0
        %v919 = vadd.f32 %v583, %v918
        %v920 = vpop.f32.mrb[0].mxu0
        %v921 = vpop.f32.mrb[0].mxu0
        %v922 = vadd.f32 %v588, %v921
        %v923 = vpop.f32.mrb[0].mxu0
        %924 = vmatprep.mubr.bf16.mxu0 0
        %925 = vmatmul.mubr.bf16.gmra.mrb[0].mxu0 %v771
        %v926 = vpop.f32.mrb[0].mxu0
        %v927 = vadd.f32 %v593, %v926
        %v928 = vpop.f32.mrb[0].mxu0
        %v929 = vpop.f32.mrb[0].mxu0
        %v930 = vadd.f32 %v598, %v929
        %v931 = vpop.f32.mrb[0].mxu0
        %932 = vmatprep.mubr.bf16.mxu0 0
        %933 = vmatmul.mubr.bf16.gmra.mrb[0].mxu0 %v774
        %v934 = vpop.f32.mrb[0].mxu0
        %v935 = vadd.f32 %v603, %v934
        %v936 = vpop.f32.mrb[0].mxu0
        %v937 = vpop.f32.mrb[0].mxu0
        %v938 = vadd.f32 %v608, %v937
        %v939 = vpop.f32.mrb[0].mxu0
        %940 = vdwg.mxu0
        %v941 = vmul.f32 %v815, 0.5
        %v942 = vmul.f32 %v818, 0.5
        %v943 = vmul.f32 %v823, 0.5
        %v944 = vmul.f32 %v826, 0.5
        %v945 = vmul.f32 %v831, 0.5
        %v946 = vmul.f32 %v834, 0.5
        %v947 = vmul.f32 %v839, 0.5
        %v948 = vmul.f32 %v842, 0.5
        %v949 = vmul.f32 %v847, 0.5
        %v950 = vmul.f32 %v850, 0.5
        %v951 = vmul.f32 %v855, 0.5
        %v952 = vmul.f32 %v858, 0.5
        %v953 = vmul.f32 %v863, 0.5
        %v954 = vmul.f32 %v866, 0.5
        %v955 = vmul.f32 %v871, 0.5
        %v956 = vmul.f32 %v874, 0.5
        %v957 = vmul.f32 %v879, 0.5
        %v958 = vmul.f32 %v882, 0.5
        %v959 = vmul.f32 %v887, 0.5
        %v960 = vmul.f32 %v890, 0.5
        %v961 = vmul.f32 %v895, 0.5
        %v962 = vmul.f32 %v898, 0.5
        %v963 = vmul.f32 %v903, 0.5
        %v964 = vmul.f32 %v906, 0.5
        %v965 = vmul.f32 %v911, 0.5
        %v966 = vmul.f32 %v914, 0.5
        %v967 = vmul.f32 %v919, 0.5
        %v968 = vmul.f32 %v922, 0.5
        %v969 = vmul.f32 %v927, 0.5
        %v970 = vmul.f32 %v930, 0.5
        %v971 = vmul.f32 %v935, 0.5
        %v972 = vmul.f32 %v938, 0.5
        %v973 = vmul.f32 %v815, 0.044715
        %v974 = vmul.f32 %v818, 0.044715
        %v975 = vmul.f32 %v823, 0.044715
        %v976 = vmul.f32 %v826, 0.044715
        %v977 = vmul.f32 %v831, 0.044715
        %v978 = vmul.f32 %v834, 0.044715
        %v979 = vmul.f32 %v839, 0.044715
        %v980 = vmul.f32 %v842, 0.044715
        %v981 = vmul.f32 %v847, 0.044715
        %v982 = vmul.f32 %v850, 0.044715
        %v983 = vmul.f32 %v855, 0.044715
        %v984 = vmul.f32 %v858, 0.044715
        %v985 = vmul.f32 %v863, 0.044715
        %v986 = vmul.f32 %v866, 0.044715
        %v987 = vmul.f32 %v871, 0.044715
        %v988 = vmul.f32 %v874, 0.044715
        %v989 = vmul.f32 %v879, 0.044715
        %v990 = vmul.f32 %v882, 0.044715
        %v991 = vmul.f32 %v887, 0.044715
        %v992 = vmul.f32 %v890, 0.044715
        %v993 = vmul.f32 %v895, 0.044715
        %v994 = vmul.f32 %v898, 0.044715
        %v995 = vmul.f32 %v903, 0.044715
        %v996 = vmul.f32 %v906, 0.044715
        %v997 = vmul.f32 %v911, 0.044715
        %v998 = vmul.f32 %v914, 0.044715
        %v999 = vmul.f32 %v919, 0.044715
        %v1000 = vmul.f32 %v922, 0.044715
        %v1001 = vmul.f32 %v927, 0.044715
        %v1002 = vmul.f32 %v930, 0.044715
        %v1003 = vmul.f32 %v935, 0.044715
        %v1004 = vmul.f32 %v938, 0.044715
        %v1005 = vmul.f32 %v973, %v815
        %v1006 = vmul.f32 %v974, %v818
        %v1007 = vmul.f32 %v975, %v823
        %v1008 = vmul.f32 %v976, %v826
        %v1009 = vmul.f32 %v977, %v831
        %v1010 = vmul.f32 %v978, %v834
        %v1011 = vmul.f32 %v979, %v839
        %v1012 = vmul.f32 %v980, %v842
        %v1013 = vmul.f32 %v981, %v847
        %v1014 = vmul.f32 %v982, %v850
        %v1015 = vmul.f32 %v983, %v855
        %v1016 = vmul.f32 %v984, %v858
        %v1017 = vmul.f32 %v985, %v863
        %v1018 = vmul.f32 %v986, %v866
        %v1019 = vmul.f32 %v987, %v871
        %v1020 = vmul.f32 %v988, %v874
        %v1021 = vmul.f32 %v989, %v879
        %v1022 = vmul.f32 %v990, %v882
        %v1023 = vmul.f32 %v991, %v887
        %v1024 = vmul.f32 %v992, %v890
        %v1025 = vmul.f32 %v993, %v895
        %v1026 = vmul.f32 %v994, %v898
        %v1027 = vmul.f32 %v995, %v903
        %v1028 = vmul.f32 %v996, %v906
        %v1029 = vmul.f32 %v997, %v911
        %v1030 = vmul.f32 %v998, %v914
        %v1031 = vmul.f32 %v999, %v919
        %v1032 = vmul.f32 %v1000, %v922
        %v1033 = vmul.f32 %v1001, %v927
        %v1034 = vmul.f32 %v1002, %v930
        %v1035 = vmul.f32 %v1003, %v935
        %v1036 = vmul.f32 %v1004, %v938
        %v1037 = vmul.f32 %v1005, %v815
        %v1038 = vmul.f32 %v1006, %v818
        %v1039 = vmul.f32 %v1007, %v823
        %v1040 = vmul.f32 %v1008, %v826
        %v1041 = vmul.f32 %v1009, %v831
        %v1042 = vmul.f32 %v1010, %v834
        %v1043 = vmul.f32 %v1011, %v839
        %v1044 = vmul.f32 %v1012, %v842
        %v1045 = vmul.f32 %v1013, %v847
        %v1046 = vmul.f32 %v1014, %v850
        %v1047 = vmul.f32 %v1015, %v855
        %v1048 = vmul.f32 %v1016, %v858
        %v1049 = vmul.f32 %v1017, %v863
        %v1050 = vmul.f32 %v1018, %v866
        %v1051 = vmul.f32 %v1019, %v871
        %v1052 = vmul.f32 %v1020, %v874
        %v1053 = vmul.f32 %v1021, %v879
        %v1054 = vmul.f32 %v1022, %v882
        %v1055 = vmul.f32 %v1023, %v887
        %v1056 = vmul.f32 %v1024, %v890
        %v1057 = vmul.f32 %v1025, %v895
        %v1058 = vmul.f32 %v1026, %v898
        %v1059 = vmul.f32 %v1027, %v903
        %v1060 = vmul.f32 %v1028, %v906
        %v1061 = vmul.f32 %v1029, %v911
        %v1062 = vmul.f32 %v1030, %v914
        %v1063 = vmul.f32 %v1031, %v919
        %v1064 = vmul.f32 %v1032, %v922
        %v1065 = vmul.f32 %v1033, %v927
        %v1066 = vmul.f32 %v1034, %v930
        %v1067 = vmul.f32 %v1035, %v935
        %v1068 = vmul.f32 %v1036, %v938
        %v1069 = vadd.f32 %v815, %v1037
        %v1070 = vadd.f32 %v818, %v1038
        %v1071 = vadd.f32 %v823, %v1039
        %v1072 = vadd.f32 %v826, %v1040
        %v1073 = vadd.f32 %v831, %v1041
        %v1074 = vadd.f32 %v834, %v1042
        %v1075 = vadd.f32 %v839, %v1043
        %v1076 = vadd.f32 %v842, %v1044
        %v1077 = vadd.f32 %v847, %v1045
        %v1078 = vadd.f32 %v850, %v1046
        %v1079 = vadd.f32 %v855, %v1047
        %v1080 = vadd.f32 %v858, %v1048
        %v1081 = vadd.f32 %v863, %v1049
        %v1082 = vadd.f32 %v866, %v1050
        %v1083 = vadd.f32 %v871, %v1051
        %v1084 = vadd.f32 %v874, %v1052
        %v1085 = vadd.f32 %v879, %v1053
        %v1086 = vadd.f32 %v882, %v1054
        %v1087 = vadd.f32 %v887, %v1055
        %v1088 = vadd.f32 %v890, %v1056
        %v1089 = vadd.f32 %v895, %v1057
        %v1090 = vadd.f32 %v898, %v1058
        %v1091 = vadd.f32 %v903, %v1059
        %v1092 = vadd.f32 %v906, %v1060
        %v1093 = vadd.f32 %v911, %v1061
        %v1094 = vadd.f32 %v914, %v1062
        %v1095 = vadd.f32 %v919, %v1063
        %v1096 = vadd.f32 %v922, %v1064
        %v1097 = vadd.f32 %v927, %v1065
        %v1098 = vadd.f32 %v930, %v1066
        %v1099 = vadd.f32 %v935, %v1067
        %v1100 = vadd.f32 %v938, %v1068
        %v1101 = vmul.f32 %v1069, 0.7978846
        %v1102 = vmul.f32 %v1070, 0.7978846
        %v1103 = vmul.f32 %v1071, 0.7978846
        %v1104 = vmul.f32 %v1072, 0.7978846
        %v1105 = vmul.f32 %v1073, 0.7978846
        %v1106 = vmul.f32 %v1074, 0.7978846
        %v1107 = vmul.f32 %v1075, 0.7978846
        %v1108 = vmul.f32 %v1076, 0.7978846
        %v1109 = vmul.f32 %v1077, 0.7978846
        %v1110 = vmul.f32 %v1078, 0.7978846
        %v1111 = vmul.f32 %v1079, 0.7978846
        %v1112 = vmul.f32 %v1080, 0.7978846
        %v1113 = vmul.f32 %v1081, 0.7978846
        %v1114 = vmul.f32 %v1082, 0.7978846
        %v1115 = vmul.f32 %v1083, 0.7978846
        %v1116 = vmul.f32 %v1084, 0.7978846
        %v1117 = vmul.f32 %v1085, 0.7978846
        %v1118 = vmul.f32 %v1086, 0.7978846
        %v1119 = vmul.f32 %v1087, 0.7978846
        %v1120 = vmul.f32 %v1088, 0.7978846
        %v1121 = vmul.f32 %v1089, 0.7978846
        %v1122 = vmul.f32 %v1090, 0.7978846
        %v1123 = vmul.f32 %v1091, 0.7978846
        %v1124 = vmul.f32 %v1092, 0.7978846
        %v1125 = vmul.f32 %v1093, 0.7978846
        %v1126 = vmul.f32 %v1094, 0.7978846
        %v1127 = vmul.f32 %v1095, 0.7978846
        %v1128 = vmul.f32 %v1096, 0.7978846
        %v1129 = vmul.f32 %v1097, 0.7978846
        %v1130 = vmul.f32 %v1098, 0.7978846
        %v1131 = vmul.f32 %v1099, 0.7978846
        %v1132 = vmul.f32 %v1100, 0.7978846
        %v1133 = vtanh.pop %v1101
        %v1134 = vtanh.pop %v1102
        %v1135 = vtanh.pop %v1103
        %v1136 = vtanh.pop %v1104
        %v1137 = vtanh.pop %v1105
        %v1138 = vtanh.pop %v1106
        %v1139 = vtanh.pop %v1107
        %v1140 = vtanh.pop %v1108
        %v1141 = vtanh.pop %v1109
        %v1142 = vtanh.pop %v1110
        %v1143 = vtanh.pop %v1111
        %v1144 = vtanh.pop %v1112
        %v1145 = vtanh.pop %v1113
        %v1146 = vtanh.pop %v1114
        %v1147 = vtanh.pop %v1115
        %v1148 = vtanh.pop %v1116
        %v1149 = vtanh.pop %v1117
        %v1150 = vtanh.pop %v1118
        %v1151 = vtanh.pop %v1119
        %v1152 = vtanh.pop %v1120
        %v1153 = vtanh.pop %v1121
        %v1154 = vtanh.pop %v1122
        %v1155 = vtanh.pop %v1123
        %v1156 = vtanh.pop %v1124
        %v1157 = vtanh.pop %v1125
        %v1158 = vtanh.pop %v1126
        %v1159 = vtanh.pop %v1127
        %v1160 = vtanh.pop %v1128
        %v1161 = vtanh.pop %v1129
        %v1162 = vtanh.pop %v1130
        %v1163 = vtanh.pop %v1131
        %v1164 = vtanh.pop %v1132
        %v1165 = vadd.f32 %v1133, 1.0
        %v1166 = vadd.f32 %v1134, 1.0
        %v1167 = vadd.f32 %v1135, 1.0
        %v1168 = vadd.f32 %v1136, 1.0
        %v1169 = vadd.f32 %v1137, 1.0
        %v1170 = vadd.f32 %v1138, 1.0
        %v1171 = vadd.f32 %v1139, 1.0
        %v1172 = vadd.f32 %v1140, 1.0
        %v1173 = vadd.f32 %v1141, 1.0
        %v1174 = vadd.f32 %v1142, 1.0
        %v1175 = vadd.f32 %v1143, 1.0
        %v1176 = vadd.f32 %v1144, 1.0
        %v1177 = vadd.f32 %v1145, 1.0
        %v1178 = vadd.f32 %v1146, 1.0
        %v1179 = vadd.f32 %v1147, 1.0
        %v1180 = vadd.f32 %v1148, 1.0
        %v1181 = vadd.f32 %v1149, 1.0
        %v1182 = vadd.f32 %v1150, 1.0
        %v1183 = vadd.f32 %v1151, 1.0
        %v1184 = vadd.f32 %v1152, 1.0
        %v1185 = vadd.f32 %v1153, 1.0
        %v1186 = vadd.f32 %v1154, 1.0
        %v1187 = vadd.f32 %v1155, 1.0
        %v1188 = vadd.f32 %v1156, 1.0
        %v1189 = vadd.f32 %v1157, 1.0
        %v1190 = vadd.f32 %v1158, 1.0
        %v1191 = vadd.f32 %v1159, 1.0
        %v1192 = vadd.f32 %v1160, 1.0
        %v1193 = vadd.f32 %v1161, 1.0
        %v1194 = vadd.f32 %v1162, 1.0
        %v1195 = vadd.f32 %v1163, 1.0
        %v1196 = vadd.f32 %v1164, 1.0
        %v1197 = vmul.f32 %v941, %v1165
        %v1198 = vmul.f32 %v942, %v1166
        %v1199 = vmul.f32 %v943, %v1167
        %v1200 = vmul.f32 %v944, %v1168
        %v1201 = vmul.f32 %v945, %v1169
        %v1202 = vmul.f32 %v946, %v1170
        %v1203 = vmul.f32 %v947, %v1171
        %v1204 = vmul.f32 %v948, %v1172
        %v1205 = vmul.f32 %v949, %v1173
        %v1206 = vmul.f32 %v950, %v1174
        %v1207 = vmul.f32 %v951, %v1175
        %v1208 = vmul.f32 %v952, %v1176
        %v1209 = vmul.f32 %v953, %v1177
        %v1210 = vmul.f32 %v954, %v1178
        %v1211 = vmul.f32 %v955, %v1179
        %v1212 = vmul.f32 %v956, %v1180
        %v1213 = vmul.f32 %v957, %v1181
        %v1214 = vmul.f32 %v958, %v1182
        %v1215 = vmul.f32 %v959, %v1183
        %v1216 = vmul.f32 %v960, %v1184
        %v1217 = vmul.f32 %v961, %v1185
        %v1218 = vmul.f32 %v962, %v1186
        %v1219 = vmul.f32 %v963, %v1187
        %v1220 = vmul.f32 %v964, %v1188
        %v1221 = vmul.f32 %v965, %v1189
        %v1222 = vmul.f32 %v966, %v1190
        %v1223 = vmul.f32 %v967, %v1191
        %v1224 = vmul.f32 %v968, %v1192
        %v1225 = vmul.f32 %v969, %v1193
        %v1226 = vmul.f32 %v970, %v1194
        %v1227 = vmul.f32 %v971, %v1195
        %v1228 = vmul.f32 %v972, %v1196
        %v1229 = vpack.c.bf16 %v1198, %v1197
        %v1230 = vpack.c.bf16 %v1200, %v1199
        %v1231 = vpack.c.bf16 %v1202, %v1201
        %v1232 = vpack.c.bf16 %v1204, %v1203
        %v1233 = vpack.c.bf16 %v1206, %v1205
        %v1234 = vpack.c.bf16 %v1208, %v1207
        %v1235 = vpack.c.bf16 %v1210, %v1209
        %v1236 = vpack.c.bf16 %v1212, %v1211
        %v1237 = vpack.c.bf16 %v1214, %v1213
        %v1238 = vpack.c.bf16 %v1216, %v1215
        %v1239 = vpack.c.bf16 %v1218, %v1217
        %v1240 = vpack.c.bf16 %v1220, %v1219
        %v1241 = vpack.c.bf16 %v1222, %v1221
        %v1242 = vpack.c.bf16 %v1224, %v1223
        %v1243 = vpack.c.bf16 %v1226, %v1225
        %v1244 = vpack.c.bf16 %v1228, %v1227
        %v1246 = vunpack.c.l.b16 %v417
        %v1247 = vunpack.c.h.b16 %v417
        %v1248 = vpack.c.b16 %v1246, %v1246
        %v1249 = vpack.c.b16 %v1247, %v1247
        %1252 = vmatprep.subr.bf16.mxu0 0
        %1253 = vmatpush1.bf16.msra.mxu0 %v1229
        %1254 = vmatprep.subr.bf16.mxu0 0
        %1255 = vmatpush1.bf16.msra.mxu0 %v1230
        %1256 = vmatprep.subr.bf16.mxu0 0
        %1257 = vmatpush1.bf16.msra.mxu0 %v1231
        %1258 = vmatprep.subr.bf16.mxu0 0
        %1259 = vmatpush1.bf16.msra.mxu0 %v1232
        %1260 = vmatprep.subr.bf16.mxu0 0
        %1261 = vmatpush1.bf16.msra.mxu0 %v1233
        %1262 = vmatprep.subr.bf16.mxu0 0
        %1263 = vmatpush1.bf16.msra.mxu0 %v1234
        %1264 = vmatprep.subr.bf16.mxu0 0
        %1265 = vmatpush1.bf16.msra.mxu0 %v1235
        %1266 = vmatprep.subr.bf16.mxu0 0
        %1267 = vmatpush1.bf16.msra.mxu0 %v1236
        %1268 = vmatprep.subr.bf16.mxu0 0
        %1269 = vmatpush1.bf16.msra.mxu0 %v1237
        %1270 = vmatprep.subr.bf16.mxu0 0
        %1271 = vmatpush1.bf16.msra.mxu0 %v1238
        %1272 = vmatprep.subr.bf16.mxu0 0
        %1273 = vmatpush1.bf16.msra.mxu0 %v1239
        %1274 = vmatprep.subr.bf16.mxu0 0
        %1275 = vmatpush1.bf16.msra.mxu0 %v1240
        %1276 = vmatprep.subr.bf16.mxu0 0
        %1277 = vmatpush1.bf16.msra.mxu0 %v1241
        %1278 = vmatprep.subr.bf16.mxu0 0
        %1279 = vmatpush1.bf16.msra.mxu0 %v1242
        %1280 = vmatprep.subr.bf16.mxu0 0
        %1281 = vmatpush1.bf16.msra.mxu0 %v1243
        %1282 = vmatprep.subr.bf16.mxu0 0
        %1283 = vmatpush1.bf16.msra.mxu0 %v1244
        %1284 = vmatprep.mubr.bf16.mxu0 %v1249
        %1285 = vmatmul.mubr.bf16.gmra.mrb[0].mxu0 %v1248
        %v1286 = vpop.f32.mrb[0].mxu0
        %v1287 = vadd.f32 %v614, %v1286
        %v1288 = vpop.f32.mrb[0].mxu0
        %v1289 = vpop.f32.mrb[0].mxu0
        %v1290 = vpop.f32.mrb[0].mxu0
        %1291 = vdwg.mxu0
        %v1292 = vadd.f32 %v645, %v1287
        %v1293 = vsel %vm617, %v1292, 0.0
        %1294 = vadd.xlane.f32.xlu0 %v1293
        %v1295 = vpop.xlane.xlu0 %1294
        %v1296 = vmul.f32 %v1295, %v621
        %v1297 = vsub.f32 %v1292, %v1296
        %v1298 = vmul.f32 %v1297, %v1297
        %v1299 = vsel %vm617, %v1298, 0.0
        %1300 = vadd.xlane.f32.xlu0 %v1299
        %v1301 = vpop.xlane.xlu0 %1300
        %v1302 = vmul.f32 %v1301, %v621
        %v1303 = vadd.f32 %v1302, 1e-05
        %v1304 = vrsqrt.pop %v1303
        %v1305 = vmul.f32 %v1297, %v1304
        %v1306 = vmul.f32 %v1305, %v636
        %v1307 = vadd.f32 %v1306, %v643
        %1308 = vst.msk [vmem:[#allocation2] sm:$0xff] %vm617, %v1307
        %v1309 = vld [vmem:[#allocation2] sm:$0xff]
        %v1310 = vpack.c.bf16 %v1309, %v1309
        %v1311 = vld [vmem:[%s7] sm:$0xff]
        %v1312 = vld [vmem:[%s7 + $0x8] sm:$0xff]
        %v1313 = vld [vmem:[%s7 + $0x10] sm:$0xff]
        %v1314 = vld [vmem:[%s7 + $0x18] sm:$0xff]
        %v1315 = vld [vmem:[%s7 + $0x20] sm:$0xff]
        %v1316 = vld [vmem:[%s7 + $0x28] sm:$0xff]
        %v1317 = vld [vmem:[%s7 + $0x30] sm:$0xff]
        %v1318 = vld [vmem:[%s7 + $0x38] sm:$0xff]
        %v1319 = vld [vmem:[%s7 + $0x40] sm:$0xff]
        %v1320 = vld [vmem:[%s7 + $0x48] sm:$0xff]
        %v1321 = vld [vmem:[%s7 + $0x50] sm:$0xff]
        %v1322 = vld [vmem:[%s7 + $0x58] sm:$0xff]
        %v1323 = vld [vmem:[%s7 + $0x60] sm:$0xff]
        %v1324 = vld [vmem:[%s7 + $0x68] sm:$0xff]
        %v1325 = vld [vmem:[%s7 + $0x70] sm:$0xff]
        %v1326 = vld [vmem:[%s7 + $0x78] sm:$0xff]
        %v1327 = vld [vmem:[%s8] sm:$0xff]
        %v1328 = vld [vmem:[%s8 + $0x8] sm:$0xff]
        %v1331 = vlaneseq
        %v1332 = vshrl.u32 %v1331, 7
        %v1333 = vsub.s32 0, %v1332
        %v1334 = vrot.slane %v1327, %v1333
        %v1335 = vlaneseq
        %v1336 = vshrl.u32 %v1335, 7
        %v1337 = vsub.s32 1, %v1336
        %v1338 = vrot.slane %v1327, %v1337
        %v1339 = vlaneseq
        %v1340 = vshrl.u32 %v1339, 7
        %v1341 = vsub.s32 2, %v1340
        %v1342 = vrot.slane %v1327, %v1341
        %v1343 = vlaneseq
        %v1344 = vshrl.u32 %v1343, 7
        %v1345 = vsub.s32 3, %v1344
        %v1346 = vrot.slane %v1327, %v1345
        %v1347 = vlaneseq
        %v1348 = vshrl.u32 %v1347, 7
        %v1349 = vsub.s32 4, %v1348
        %v1350 = vrot.slane %v1327, %v1349
        %v1351 = vlaneseq
        %v1352 = vshrl.u32 %v1351, 7
        %v1353 = vsub.s32 5, %v1352
        %v1354 = vrot.slane %v1327, %v1353
        %v1355 = vlaneseq
        %v1356 = vshrl.u32 %v1355, 7
        %v1357 = vsub.s32 6, %v1356
        %v1358 = vrot.slane %v1327, %v1357
        %v1359 = vlaneseq
        %v1360 = vshrl.u32 %v1359, 7
        %v1361 = vsub.s32 7, %v1360
        %v1362 = vrot.slane %v1327, %v1361
        %v1363 = vlaneseq
        %v1364 = vshrl.u32 %v1363, 7
        %v1365 = vsub.s32 0, %v1364
        %v1366 = vrot.slane %v1328, %v1365
        %v1367 = vlaneseq
        %v1368 = vshrl.u32 %v1367, 7
        %v1369 = vsub.s32 1, %v1368
        %v1370 = vrot.slane %v1328, %v1369
        %v1371 = vlaneseq
        %v1372 = vshrl.u32 %v1371, 7
        %v1373 = vsub.s32 2, %v1372
        %v1374 = vrot.slane %v1328, %v1373
        %v1375 = vlaneseq
        %v1376 = vshrl.u32 %v1375, 7
        %v1377 = vsub.s32 3, %v1376
        %v1378 = vrot.slane %v1328, %v1377
        %v1379 = vlaneseq
        %v1380 = vshrl.u32 %v1379, 7
        %v1381 = vsub.s32 4, %v1380
        %v1382 = vrot.slane %v1328, %v1381
        %v1383 = vlaneseq
        %v1384 = vshrl.u32 %v1383, 7
        %v1385 = vsub.s32 5, %v1384
        %v1386 = vrot.slane %v1328, %v1385
        %v1387 = vlaneseq
        %v1388 = vshrl.u32 %v1387, 7
        %v1389 = vsub.s32 6, %v1388
        %v1390 = vrot.slane %v1328, %v1389
        %v1391 = vlaneseq
        %v1392 = vshrl.u32 %v1391, 7
        %v1393 = vsub.s32 7, %v1392
        %v1394 = vrot.slane %v1328, %v1393
        %v1427 = vunpack.c.l.b16 %v1311
        %v1428 = vunpack.c.h.b16 %v1311
        %v1429 = vunpack.c.l.b16 %v1312
        %v1430 = vunpack.c.h.b16 %v1312
        %v1431 = vunpack.c.l.b16 %v1313
        %v1432 = vunpack.c.h.b16 %v1313
        %v1433 = vunpack.c.l.b16 %v1314
        %v1434 = vunpack.c.h.b16 %v1314
        %v1435 = vunpack.c.l.b16 %v1315
        %v1436 = vunpack.c.h.b16 %v1315
        %v1437 = vunpack.c.l.b16 %v1316
        %v1438 = vunpack.c.h.b16 %v1316
        %v1439 = vunpack.c.l.b16 %v1317
        %v1440 = vunpack.c.h.b16 %v1317
        %v1441 = vunpack.c.l.b16 %v1318
        %v1442 = vunpack.c.h.b16 %v1318
        %v1443 = vunpack.c.l.b16 %v1319
        %v1444 = vunpack.c.h.b16 %v1319
        %v1445 = vunpack.c.l.b16 %v1320
        %v1446 = vunpack.c.h.b16 %v1320
        %v1447 = vunpack.c.l.b16 %v1321
        %v1448 = vunpack.c.h.b16 %v1321
        %v1449 = vunpack.c.l.b16 %v1322
        %v1450 = vunpack.c.h.b16 %v1322
        %v1451 = vunpack.c.l.b16 %v1323
        %v1452 = vunpack.c.h.b16 %v1323
        %v1453 = vunpack.c.l.b16 %v1324
        %v1454 = vunpack.c.h.b16 %v1324
        %v1455 = vunpack.c.l.b16 %v1325
        %v1456 = vunpack.c.h.b16 %v1325
        %v1457 = vunpack.c.l.b16 %v1326
        %v1458 = vunpack.c.h.b16 %v1326
        %v1459 = vpack.c.b16 %v1443, %v1427
        %v1460 = vpack.c.b16 %v1444, %v1428
        %v1461 = vpack.c.b16 %v1445, %v1429
        %v1462 = vpack.c.b16 %v1446, %v1430
        %v1463 = vpack.c.b16 %v1447, %v1431
        %v1464 = vpack.c.b16 %v1448, %v1432
        %v1465 = vpack.c.b16 %v1449, %v1433
        %v1466 = vpack.c.b16 %v1450, %v1434
        %v1467 = vpack.c.b16 %v1451, %v1435
        %v1468 = vpack.c.b16 %v1452, %v1436
        %v1469 = vpack.c.b16 %v1453, %v1437
        %v1470 = vpack.c.b16 %v1454, %v1438
        %v1471 = vpack.c.b16 %v1455, %v1439
        %v1472 = vpack.c.b16 %v1456, %v1440
        %v1473 = vpack.c.b16 %v1457, %v1441
        %v1474 = vpack.c.b16 %v1458, %v1442
        %v1492 = vsel %vm617, %v1310, 0
        %1494 = vmatprep.subr.bf16.mxu0 %v1460
        %1495 = vmatpush1.bf16.msra.mxu0 %v1459
        %1496 = vmatprep.subr.bf16.mxu0 0
        %1497 = vmatpush1.bf16.msra.mxu0 0
        %1498 = vmatprep.subr.bf16.mxu0 0
        %1499 = vmatpush1.bf16.msra.mxu0 0
        %1500 = vmatprep.subr.bf16.mxu0 0
        %1501 = vmatpush1.bf16.msra.mxu0 0
        %1502 = vmatprep.subr.bf16.mxu0 0
        %1503 = vmatpush1.bf16.msra.mxu0 0
        %1504 = vmatprep.subr.bf16.mxu0 0
        %1505 = vmatpush1.bf16.msra.mxu0 0
        %1506 = vmatprep.subr.bf16.mxu0 0
        %1507 = vmatpush1.bf16.msra.mxu0 0
        %1508 = vmatprep.subr.bf16.mxu0 0
        %1509 = vmatpush1.bf16.msra.mxu0 0
        %1510 = vmatprep.subr.bf16.mxu0 0
        %1511 = vmatpush1.bf16.msra.mxu0 0
        %1512 = vmatprep.subr.bf16.mxu0 0
        %1513 = vmatpush1.bf16.msra.mxu0 0
        %1514 = vmatprep.subr.bf16.mxu0 0
        %1515 = vmatpush1.bf16.msra.mxu0 0
        %1516 = vmatprep.subr.bf16.mxu0 0
        %1517 = vmatpush1.bf16.msra.mxu0 0
        %1518 = vmatprep.subr.bf16.mxu0 0
        %1519 = vmatpush1.bf16.msra.mxu0 0
        %1520 = vmatprep.subr.bf16.mxu0 0
        %1521 = vmatpush1.bf16.msra.mxu0 0
        %1522 = vmatprep.subr.bf16.mxu0 0
        %1523 = vmatpush1.bf16.msra.mxu0 0
        %1524 = vmatprep.subr.bf16.mxu0 0
        %1525 = vmatpush1.bf16.msra.mxu0 0
        %1526 = vmatprep.mubr.bf16.mxu0 0
        %1527 = vmatmul.mubr.bf16.gmra.mrb[0].mxu0 %v1492
        %v1528 = vpop.f32.mrb[0].mxu0
        %v1529 = vadd.f32 %v1334, %v1528
        %v1530 = vpop.f32.mrb[0].mxu0
        %v1531 = vadd.f32 %v1338, %v1530
        %v1532 = vpop.f32.mrb[0].mxu0
        %v1533 = vpop.f32.mrb[0].mxu0
        %1534 = vdwg.mxu0
        %1535 = vmatprep.subr.bf16.mxu0 %v1462
        %1536 = vmatpush1.bf16.msra.mxu0 %v1461
        %1537 = vmatprep.subr.bf16.mxu0 0
        %1538 = vmatpush1.bf16.msra.mxu0 0
        %1539 = vmatprep.subr.bf16.mxu0 0
        %1540 = vmatpush1.bf16.msra.mxu0 0
        %1541 = vmatprep.subr.bf16.mxu0 0
        %1542 = vmatpush1.bf16.msra.mxu0 0
        %1543 = vmatprep.subr.bf16.mxu0 0
        %1544 = vmatpush1.bf16.msra.mxu0 0
        %1545 = vmatprep.subr.bf16.mxu0 0
        %1546 = vmatpush1.bf16.msra.mxu0 0
        %1547 = vmatprep.subr.bf16.mxu0 0
        %1548 = vmatpush1.bf16.msra.mxu0 0
        %1549 = vmatprep.subr.bf16.mxu0 0
        %1550 = vmatpush1.bf16.msra.mxu0 0
        %1551 = vmatprep.subr.bf16.mxu0 0
        %1552 = vmatpush1.bf16.msra.mxu0 0
        %1553 = vmatprep.subr.bf16.mxu0 0
        %1554 = vmatpush1.bf16.msra.mxu0 0
        %1555 = vmatprep.subr.bf16.mxu0 0
        %1556 = vmatpush1.bf16.msra.mxu0 0
        %1557 = vmatprep.subr.bf16.mxu0 0
        %1558 = vmatpush1.bf16.msra.mxu0 0
        %1559 = vmatprep.subr.bf16.mxu0 0
        %1560 = vmatpush1.bf16.msra.mxu0 0
        %1561 = vmatprep.subr.bf16.mxu0 0
        %1562 = vmatpush1.bf16.msra.mxu0 0
        %1563 = vmatprep.subr.bf16.mxu0 0
        %1564 = vmatpush1.bf16.msra.mxu0 0
        %1565 = vmatprep.subr.bf16.mxu0 0
        %1566 = vmatpush1.bf16.msra.mxu0 0
        %1567 = vmatprep.mubr.bf16.mxu0 0
        %1568 = vmatmul.mubr.bf16.gmra.mrb[0].mxu0 %v1492
        %v1569 = vpop.f32.mrb[0].mxu0
        %v1570 = vadd.f32 %v1342, %v1569
        %v1571 = vpop.f32.mrb[0].mxu0
        %v1572 = vadd.f32 %v1346, %v1571
        %v1573 = vpop.f32.mrb[0].mxu0
        %v1574 = vpop.f32.mrb[0].mxu0
        %1575 = vdwg.mxu0
        %1576 = vmatprep.subr.bf16.mxu0 %v1464
        %1577 = vmatpush1.bf16.msra.mxu0 %v1463
        %1578 = vmatprep.subr.bf16.mxu0 0
        %1579 = vmatpush1.bf16.msra.mxu0 0
        %1580 = vmatprep.subr.bf16.mxu0 0
        %1581 = vmatpush1.bf16.msra.mxu0 0
        %1582 = vmatprep.subr.bf16.mxu0 0
        %1583 = vmatpush1.bf16.msra.mxu0 0
        %1584 = vmatprep.subr.bf16.mxu0 0
        %1585 = vmatpush1.bf16.msra.mxu0 0
        %1586 = vmatprep.subr.bf16.mxu0 0
        %1587 = vmatpush1.bf16.msra.mxu0 0
        %1588 = vmatprep.subr.bf16.mxu0 0
        %1589 = vmatpush1.bf16.msra.mxu0 0
        %1590 = vmatprep.subr.bf16.mxu0 0
        %1591 = vmatpush1.bf16.msra.mxu0 0
        %1592 = vmatprep.subr.bf16.mxu0 0
        %1593 = vmatpush1.bf16.msra.mxu0 0
        %1594 = vmatprep.subr.bf16.mxu0 0
        %1595 = vmatpush1.bf16.msra.mxu0 0
        %1596 = vmatprep.subr.bf16.mxu0 0
        %1597 = vmatpush1.bf16.msra.mxu0 0
        %1598 = vmatprep.subr.bf16.mxu0 0
        %1599 = vmatpush1.bf16.msra.mxu0 0
        %1600 = vmatprep.subr.bf16.mxu0 0
        %1601 = vmatpush1.bf16.msra.mxu0 0
        %1602 = vmatprep.subr.bf16.mxu0 0
        %1603 = vmatpush1.bf16.msra.mxu0 0
        %1604 = vmatprep.subr.bf16.mxu0 0
        %1605 = vmatpush1.bf16.msra.mxu0 0
        %1606 = vmatprep.subr.bf16.mxu0 0
        %1607 = vmatpush1.bf16.msra.mxu0 0
        %1608 = vmatprep.mubr.bf16.mxu0 0
        %1609 = vmatmul.mubr.bf16.gmra.mrb[0].mxu0 %v1492
        %v1610 = vpop.f32.mrb[0].mxu0
        %v1611 = vadd.f32 %v1350, %v1610
        %v1612 = vpop.f32.mrb[0].mxu0
        %v1613 = vadd.f32 %v1354, %v1612
        %v1614 = vpop.f32.mrb[0].mxu0
        %v1615 = vpop.f32.mrb[0].mxu0
        %1616 = vdwg.mxu0
        %1617 = vmatprep.subr.bf16.mxu0 %v1466
        %1618 = vmatpush1.bf16.msra.mxu0 %v1465
        %1619 = vmatprep.subr.bf16.mxu0 0
        %1620 = vmatpush1.bf16.msra.mxu0 0
        %1621 = vmatprep.subr.bf16.mxu0 0
        %1622 = vmatpush1.bf16.msra.mxu0 0
        %1623 = vmatprep.subr.bf16.mxu0 0
        %1624 = vmatpush1.bf16.msra.mxu0 0
        %1625 = vmatprep.subr.bf16.mxu0 0
        %1626 = vmatpush1.bf16.msra.mxu0 0
        %1627 = vmatprep.subr.bf16.mxu0 0
        %1628 = vmatpush1.bf16.msra.mxu0 0
        %1629 = vmatprep.subr.bf16.mxu0 0
        %1630 = vmatpush1.bf16.msra.mxu0 0
        %1631 = vmatprep.subr.bf16.mxu0 0
        %1632 = vmatpush1.bf16.msra.mxu0 0
        %1633 = vmatprep.subr.bf16.mxu0 0
        %1634 = vmatpush1.bf16.msra.mxu0 0
        %1635 = vmatprep.subr.bf16.mxu0 0
        %1636 = vmatpush1.bf16.msra.mxu0 0
        %1637 = vmatprep.subr.bf16.mxu0 0
        %1638 = vmatpush1.bf16.msra.mxu0 0
        %1639 = vmatprep.subr.bf16.mxu0 0
        %1640 = vmatpush1.bf16.msra.mxu0 0
        %1641 = vmatprep.subr.bf16.mxu0 0
        %1642 = vmatpush1.bf16.msra.mxu0 0
        %1643 = vmatprep.subr.bf16.mxu0 0
        %1644 = vmatpush1.bf16.msra.mxu0 0
        %1645 = vmatprep.subr.bf16.mxu0 0
        %1646 = vmatpush1.bf16.msra.mxu0 0
        %1647 = vmatprep.subr.bf16.mxu0 0
        %1648 = vmatpush1.bf16.msra.mxu0 0
        %1649 = vmatprep.mubr.bf16.mxu0 0
        %1650 = vmatmul.mubr.bf16.gmra.mrb[0].mxu0 %v1492
        %v1651 = vpop.f32.mrb[0].mxu0
        %v1652 = vadd.f32 %v1358, %v1651
        %v1653 = vpop.f32.mrb[0].mxu0
        %v1654 = vadd.f32 %v1362, %v1653
        %v1655 = vpop.f32.mrb[0].mxu0
        %v1656 = vpop.f32.mrb[0].mxu0
        %1657 = vdwg.mxu0
        %1658 = vmatprep.subr.bf16.mxu0 %v1468
        %1659 = vmatpush1.bf16.msra.mxu0 %v1467
        %1660 = vmatprep.subr.bf16.mxu0 0
        %1661 = vmatpush1.bf16.msra.mxu0 0
        %1662 = vmatprep.subr.bf16.mxu0 0
        %1663 = vmatpush1.bf16.msra.mxu0 0
        %1664 = vmatprep.subr.bf16.mxu0 0
        %1665 = vmatpush1.bf16.msra.mxu0 0
        %1666 = vmatprep.subr.bf16.mxu0 0
        %1667 = vmatpush1.bf16.msra.mxu0 0
        %1668 = vmatprep.subr.bf16.mxu0 0
        %1669 = vmatpush1.bf16.msra.mxu0 0
        %1670 = vmatprep.subr.bf16.mxu0 0
        %1671 = vmatpush1.bf16.msra.mxu0 0
        %1672 = vmatprep.subr.bf16.mxu0 0
        %1673 = vmatpush1.bf16.msra.mxu0 0
        %1674 = vmatprep.subr.bf16.mxu0 0
        %1675 = vmatpush1.bf16.msra.mxu0 0
        %1676 = vmatprep.subr.bf16.mxu0 0
        %1677 = vmatpush1.bf16.msra.mxu0 0
        %1678 = vmatprep.subr.bf16.mxu0 0
        %1679 = vmatpush1.bf16.msra.mxu0 0
        %1680 = vmatprep.subr.bf16.mxu0 0
        %1681 = vmatpush1.bf16.msra.mxu0 0
        %1682 = vmatprep.subr.bf16.mxu0 0
        %1683 = vmatpush1.bf16.msra.mxu0 0
        %1684 = vmatprep.subr.bf16.mxu0 0
        %1685 = vmatpush1.bf16.msra.mxu0 0
        %1686 = vmatprep.subr.bf16.mxu0 0
        %1687 = vmatpush1.bf16.msra.mxu0 0
        %1688 = vmatprep.subr.bf16.mxu0 0
        %1689 = vmatpush1.bf16.msra.mxu0 0
        %1690 = vmatprep.mubr.bf16.mxu0 0
        %1691 = vmatmul.mubr.bf16.gmra.mrb[0].mxu0 %v1492
        %v1692 = vpop.f32.mrb[0].mxu0
        %v1693 = vadd.f32 %v1366, %v1692
        %v1694 = vpop.f32.mrb[0].mxu0
        %v1695 = vadd.f32 %v1370, %v1694
        %v1696 = vpop.f32.mrb[0].mxu0
        %v1697 = vpop.f32.mrb[0].mxu0
        %1698 = vdwg.mxu0
        %1699 = vmatprep.subr.bf16.mxu0 %v1470
        %1700 = vmatpush1.bf16.msra.mxu0 %v1469
        %1701 = vmatprep.subr.bf16.mxu0 0
        %1702 = vmatpush1.bf16.msra.mxu0 0
        %1703 = vmatprep.subr.bf16.mxu0 0
        %1704 = vmatpush1.bf16.msra.mxu0 0
        %1705 = vmatprep.subr.bf16.mxu0 0
        %1706 = vmatpush1.bf16.msra.mxu0 0
        %1707 = vmatprep.subr.bf16.mxu0 0
        %1708 = vmatpush1.bf16.msra.mxu0 0
        %1709 = vmatprep.subr.bf16.mxu0 0
        %1710 = vmatpush1.bf16.msra.mxu0 0
        %1711 = vmatprep.subr.bf16.mxu0 0
        %1712 = vmatpush1.bf16.msra.mxu0 0
        %1713 = vmatprep.subr.bf16.mxu0 0
        %1714 = vmatpush1.bf16.msra.mxu0 0
        %1715 = vmatprep.subr.bf16.mxu0 0
        %1716 = vmatpush1.bf16.msra.mxu0 0
        %1717 = vmatprep.subr.bf16.mxu0 0
        %1718 = vmatpush1.bf16.msra.mxu0 0
        %1719 = vmatprep.subr.bf16.mxu0 0
        %1720 = vmatpush1.bf16.msra.mxu0 0
        %1721 = vmatprep.subr.bf16.mxu0 0
        %1722 = vmatpush1.bf16.msra.mxu0 0
        %1723 = vmatprep.subr.bf16.mxu0 0
        %1724 = vmatpush1.bf16.msra.mxu0 0
        %1725 = vmatprep.subr.bf16.mxu0 0
        %1726 = vmatpush1.bf16.msra.mxu0 0
        %1727 = vmatprep.subr.bf16.mxu0 0
        %1728 = vmatpush1.bf16.msra.mxu0 0
        %1729 = vmatprep.subr.bf16.mxu0 0
        %1730 = vmatpush1.bf16.msra.mxu0 0
        %1731 = vmatprep.mubr.bf16.mxu0 0
        %1732 = vmatmul.mubr.bf16.gmra.mrb[0].mxu0 %v1492
        %v1733 = vpop.f32.mrb[0].mxu0
        %v1734 = vadd.f32 %v1374, %v1733
        %v1735 = vpop.f32.mrb[0].mxu0
        %v1736 = vadd.f32 %v1378, %v1735
        %v1737 = vpop.f32.mrb[0].mxu0
        %v1738 = vpop.f32.mrb[0].mxu0
        %1739 = vdwg.mxu0
        %1740 = vmatprep.subr.bf16.mxu0 %v1472
        %1741 = vmatpush1.bf16.msra.mxu0 %v1471
        %1742 = vmatprep.subr.bf16.mxu0 0
        %1743 = vmatpush1.bf16.msra.mxu0 0
        %1744 = vmatprep.subr.bf16.mxu0 0
        %1745 = vmatpush1.bf16.msra.mxu0 0
        %1746 = vmatprep.subr.bf16.mxu0 0
        %1747 = vmatpush1.bf16.msra.mxu0 0
        %1748 = vmatprep.subr.bf16.mxu0 0
        %1749 = vmatpush1.bf16.msra.mxu0 0
        %1750 = vmatprep.subr.bf16.mxu0 0
        %1751 = vmatpush1.bf16.msra.mxu0 0
        %1752 = vmatprep.subr.bf16.mxu0 0
        %1753 = vmatpush1.bf16.msra.mxu0 0
        %1754 = vmatprep.subr.bf16.mxu0 0
        %1755 = vmatpush1.bf16.msra.mxu0 0
        %1756 = vmatprep.subr.bf16.mxu0 0
        %1757 = vmatpush1.bf16.msra.mxu0 0
        %1758 = vmatprep.subr.bf16.mxu0 0
        %1759 = vmatpush1.bf16.msra.mxu0 0
        %1760 = vmatprep.subr.bf16.mxu0 0
        %1761 = vmatpush1.bf16.msra.mxu0 0
        %1762 = vmatprep.subr.bf16.mxu0 0
        %1763 = vmatpush1.bf16.msra.mxu0 0
        %1764 = vmatprep.subr.bf16.mxu0 0
        %1765 = vmatpush1.bf16.msra.mxu0 0
        %1766 = vmatprep.subr.bf16.mxu0 0
        %1767 = vmatpush1.bf16.msra.mxu0 0
        %1768 = vmatprep.subr.bf16.mxu0 0
        %1769 = vmatpush1.bf16.msra.mxu0 0
        %1770 = vmatprep.subr.bf16.mxu0 0
        %1771 = vmatpush1.bf16.msra.mxu0 0
        %1772 = vmatprep.mubr.bf16.mxu0 0
        %1773 = vmatmul.mubr.bf16.gmra.mrb[0].mxu0 %v1492
        %v1774 = vpop.f32.mrb[0].mxu0
        %v1775 = vadd.f32 %v1382, %v1774
        %v1776 = vpop.f32.mrb[0].mxu0
        %v1777 = vadd.f32 %v1386, %v1776
        %v1778 = vpop.f32.mrb[0].mxu0
        %v1779 = vpop.f32.mrb[0].mxu0
        %1780 = vdwg.mxu0
        %1781 = vmatprep.subr.bf16.mxu0 %v1474
        %1782 = vmatpush1.bf16.msra.mxu0 %v1473
        %1783 = vmatprep.subr.bf16.mxu0 0
        %1784 = vmatpush1.bf16.msra.mxu0 0
        %1785 = vmatprep.subr.bf16.mxu0 0
        %1786 = vmatpush1.bf16.msra.mxu0 0
        %1787 = vmatprep.subr.bf16.mxu0 0
        %1788 = vmatpush1.bf16.msra.mxu0 0
        %1789 = vmatprep.subr.bf16.mxu0 0
        %1790 = vmatpush1.bf16.msra.mxu0 0
        %1791 = vmatprep.subr.bf16.mxu0 0
        %1792 = vmatpush1.bf16.msra.mxu0 0
        %1793 = vmatprep.subr.bf16.mxu0 0
        %1794 = vmatpush1.bf16.msra.mxu0 0
        %1795 = vmatprep.subr.bf16.mxu0 0
        %1796 = vmatpush1.bf16.msra.mxu0 0
        %1797 = vmatprep.subr.bf16.mxu0 0
        %1798 = vmatpush1.bf16.msra.mxu0 0
        %1799 = vmatprep.subr.bf16.mxu0 0
        %1800 = vmatpush1.bf16.msra.mxu0 0
        %1801 = vmatprep.subr.bf16.mxu0 0
        %1802 = vmatpush1.bf16.msra.mxu0 0
        %1803 = vmatprep.subr.bf16.mxu0 0
        %1804 = vmatpush1.bf16.msra.mxu0 0
        %1805 = vmatprep.subr.bf16.mxu0 0
        %1806 = vmatpush1.bf16.msra.mxu0 0
        %1807 = vmatprep.subr.bf16.mxu0 0
        %1808 = vmatpush1.bf16.msra.mxu0 0
        %1809 = vmatprep.subr.bf16.mxu0 0
        %1810 = vmatpush1.bf16.msra.mxu0 0
        %1811 = vmatprep.subr.bf16.mxu0 0
        %1812 = vmatpush1.bf16.msra.mxu0 0
        %1813 = vmatprep.mubr.bf16.mxu0 0
        %1814 = vmatmul.mubr.bf16.gmra.mrb[0].mxu0 %v1492
        %v1815 = vpop.f32.mrb[0].mxu0
        %v1816 = vadd.f32 %v1390, %v1815
        %v1817 = vpop.f32.mrb[0].mxu0
        %v1818 = vadd.f32 %v1394, %v1817
        %v1819 = vpop.f32.mrb[0].mxu0
        %v1820 = vpop.f32.mrb[0].mxu0
        %1821 = vdwg.mxu0
        %v1822 = vmul.f32 %v1529, 0.5
        %v1823 = vmul.f32 %v1531, 0.5
        %v1824 = vmul.f32 %v1570, 0.5
        %v1825 = vmul.f32 %v1572, 0.5
        %v1826 = vmul.f32 %v1611, 0.5
        %v1827 = vmul.f32 %v1613, 0.5
        %v1828 = vmul.f32 %v1652, 0.5
        %v1829 = vmul.f32 %v1654, 0.5
        %v1830 = vmul.f32 %v1693, 0.5
        %v1831 = vmul.f32 %v1695, 0.5
        %v1832 = vmul.f32 %v1734, 0.5
        %v1833 = vmul.f32 %v1736, 0.5
        %v1834 = vmul.f32 %v1775, 0.5
        %v1835 = vmul.f32 %v1777, 0.5
        %v1836 = vmul.f32 %v1816, 0.5
        %v1837 = vmul.f32 %v1818, 0.5
        %v1838 = vmul.f32 %v1529, 0.044715
        %v1839 = vmul.f32 %v1531, 0.044715
        %v1840 = vmul.f32 %v1570, 0.044715
        %v1841 = vmul.f32 %v1572, 0.044715
        %v1842 = vmul.f32 %v1611, 0.044715
        %v1843 = vmul.f32 %v1613, 0.044715
        %v1844 = vmul.f32 %v1652, 0.044715
        %v1845 = vmul.f32 %v1654, 0.044715
        %v1846 = vmul.f32 %v1693, 0.044715
        %v1847 = vmul.f32 %v1695, 0.044715
        %v1848 = vmul.f32 %v1734, 0.044715
        %v1849 = vmul.f32 %v1736, 0.044715
        %v1850 = vmul.f32 %v1775, 0.044715
        %v1851 = vmul.f32 %v1777, 0.044715
        %v1852 = vmul.f32 %v1816, 0.044715
        %v1853 = vmul.f32 %v1818, 0.044715
        %v1854 = vmul.f32 %v1838, %v1529
        %v1855 = vmul.f32 %v1839, %v1531
        %v1856 = vmul.f32 %v1840, %v1570
        %v1857 = vmul.f32 %v1841, %v1572
        %v1858 = vmul.f32 %v1842, %v1611
        %v1859 = vmul.f32 %v1843, %v1613
        %v1860 = vmul.f32 %v1844, %v1652
        %v1861 = vmul.f32 %v1845, %v1654
        %v1862 = vmul.f32 %v1846, %v1693
        %v1863 = vmul.f32 %v1847, %v1695
        %v1864 = vmul.f32 %v1848, %v1734
        %v1865 = vmul.f32 %v1849, %v1736
        %v1866 = vmul.f32 %v1850, %v1775
        %v1867 = vmul.f32 %v1851, %v1777
        %v1868 = vmul.f32 %v1852, %v1816
        %v1869 = vmul.f32 %v1853, %v1818
        %v1870 = vmul.f32 %v1854, %v1529
        %v1871 = vmul.f32 %v1855, %v1531
        %v1872 = vmul.f32 %v1856, %v1570
        %v1873 = vmul.f32 %v1857, %v1572
        %v1874 = vmul.f32 %v1858, %v1611
        %v1875 = vmul.f32 %v1859, %v1613
        %v1876 = vmul.f32 %v1860, %v1652
        %v1877 = vmul.f32 %v1861, %v1654
        %v1878 = vmul.f32 %v1862, %v1693
        %v1879 = vmul.f32 %v1863, %v1695
        %v1880 = vmul.f32 %v1864, %v1734
        %v1881 = vmul.f32 %v1865, %v1736
        %v1882 = vmul.f32 %v1866, %v1775
        %v1883 = vmul.f32 %v1867, %v1777
        %v1884 = vmul.f32 %v1868, %v1816
        %v1885 = vmul.f32 %v1869, %v1818
        %v1886 = vadd.f32 %v1529, %v1870
        %v1887 = vadd.f32 %v1531, %v1871
        %v1888 = vadd.f32 %v1570, %v1872
        %v1889 = vadd.f32 %v1572, %v1873
        %v1890 = vadd.f32 %v1611, %v1874
        %v1891 = vadd.f32 %v1613, %v1875
        %v1892 = vadd.f32 %v1652, %v1876
        %v1893 = vadd.f32 %v1654, %v1877
        %v1894 = vadd.f32 %v1693, %v1878
        %v1895 = vadd.f32 %v1695, %v1879
        %v1896 = vadd.f32 %v1734, %v1880
        %v1897 = vadd.f32 %v1736, %v1881
        %v1898 = vadd.f32 %v1775, %v1882
        %v1899 = vadd.f32 %v1777, %v1883
        %v1900 = vadd.f32 %v1816, %v1884
        %v1901 = vadd.f32 %v1818, %v1885
        %v1902 = vmul.f32 %v1886, 0.7978846
        %v1903 = vmul.f32 %v1887, 0.7978846
        %v1904 = vmul.f32 %v1888, 0.7978846
        %v1905 = vmul.f32 %v1889, 0.7978846
        %v1906 = vmul.f32 %v1890, 0.7978846
        %v1907 = vmul.f32 %v1891, 0.7978846
        %v1908 = vmul.f32 %v1892, 0.7978846
        %v1909 = vmul.f32 %v1893, 0.7978846
        %v1910 = vmul.f32 %v1894, 0.7978846
        %v1911 = vmul.f32 %v1895, 0.7978846
        %v1912 = vmul.f32 %v1896, 0.7978846
        %v1913 = vmul.f32 %v1897, 0.7978846
        %v1914 = vmul.f32 %v1898, 0.7978846
        %v1915 = vmul.f32 %v1899, 0.7978846
        %v1916 = vmul.f32 %v1900, 0.7978846
        %v1917 = vmul.f32 %v1901, 0.7978846
        %v1918 = vtanh.pop %v1902
        %v1919 = vtanh.pop %v1903
        %v1920 = vtanh.pop %v1904
        %v1921 = vtanh.pop %v1905
        %v1922 = vtanh.pop %v1906
        %v1923 = vtanh.pop %v1907
        %v1924 = vtanh.pop %v1908
        %v1925 = vtanh.pop %v1909
        %v1926 = vtanh.pop %v1910
        %v1927 = vtanh.pop %v1911
        %v1928 = vtanh.pop %v1912
        %v1929 = vtanh.pop %v1913
        %v1930 = vtanh.pop %v1914
        %v1931 = vtanh.pop %v1915
        %v1932 = vtanh.pop %v1916
        %v1933 = vtanh.pop %v1917
        %v1934 = vadd.f32 %v1918, 1.0
        %v1935 = vadd.f32 %v1919, 1.0
        %v1936 = vadd.f32 %v1920, 1.0
        %v1937 = vadd.f32 %v1921, 1.0
        %v1938 = vadd.f32 %v1922, 1.0
        %v1939 = vadd.f32 %v1923, 1.0
        %v1940 = vadd.f32 %v1924, 1.0
        %v1941 = vadd.f32 %v1925, 1.0
        %v1942 = vadd.f32 %v1926, 1.0
        %v1943 = vadd.f32 %v1927, 1.0
        %v1944 = vadd.f32 %v1928, 1.0
        %v1945 = vadd.f32 %v1929, 1.0
        %v1946 = vadd.f32 %v1930, 1.0
        %v1947 = vadd.f32 %v1931, 1.0
        %v1948 = vadd.f32 %v1932, 1.0
        %v1949 = vadd.f32 %v1933, 1.0
        %v1950 = vmul.f32 %v1822, %v1934
        %v1951 = vmul.f32 %v1823, %v1935
        %v1952 = vmul.f32 %v1824, %v1936
        %v1953 = vmul.f32 %v1825, %v1937
        %v1954 = vmul.f32 %v1826, %v1938
        %v1955 = vmul.f32 %v1827, %v1939
        %v1956 = vmul.f32 %v1828, %v1940
        %v1957 = vmul.f32 %v1829, %v1941
        %v1958 = vmul.f32 %v1830, %v1942
        %v1959 = vmul.f32 %v1831, %v1943
        %v1960 = vmul.f32 %v1832, %v1944
        %v1961 = vmul.f32 %v1833, %v1945
        %v1962 = vmul.f32 %v1834, %v1946
        %v1963 = vmul.f32 %v1835, %v1947
        %v1964 = vmul.f32 %v1836, %v1948
        %v1965 = vmul.f32 %v1837, %v1949
        %v1966 = vpack.c.bf16 %v1950, %v1950
        %v1967 = vpack.c.bf16 %v1951, %v1951
        %v1968 = vpack.c.bf16 %v1952, %v1952
        %v1969 = vpack.c.bf16 %v1953, %v1953
        %v1970 = vpack.c.bf16 %v1954, %v1954
        %v1971 = vpack.c.bf16 %v1955, %v1955
        %v1972 = vpack.c.bf16 %v1956, %v1956
        %v1973 = vpack.c.bf16 %v1957, %v1957
        %v1974 = vpack.c.bf16 %v1958, %v1958
        %v1975 = vpack.c.bf16 %v1959, %v1959
        %v1976 = vpack.c.bf16 %v1960, %v1960
        %v1977 = vpack.c.bf16 %v1961, %v1961
        %v1978 = vpack.c.bf16 %v1962, %v1962
        %v1979 = vpack.c.bf16 %v1963, %v1963
        %v1980 = vpack.c.bf16 %v1964, %v1964
        %v1981 = vpack.c.bf16 %v1965, %v1965
        %v1982 = vld [vmem:[%s9] sm:$0xf]
        %v1983 = vld [vmem:[%s9 + $0x4] sm:$0xf]
        %v1984 = vld [vmem:[%s9 + $0x8] sm:$0xf]
        %v1985 = vld [vmem:[%s9 + $0xc] sm:$0xf]
        %v1986 = vld [vmem:[%s9 + $0x10] sm:$0xf]
        %v1987 = vld [vmem:[%s9 + $0x14] sm:$0xf]
        %v1988 = vld [vmem:[%s9 + $0x18] sm:$0xf]
        %v1989 = vld [vmem:[%s9 + $0x1c] sm:$0xf]
        %v1990 = vld [vmem:[%s9 + $0x20] sm:$0xf]
        %v1991 = vld [vmem:[%s9 + $0x24] sm:$0xf]
        %v1992 = vld [vmem:[%s9 + $0x28] sm:$0xf]
        %v1993 = vld [vmem:[%s9 + $0x2c] sm:$0xf]
        %v1994 = vld [vmem:[%s9 + $0x30] sm:$0xf]
        %v1995 = vld [vmem:[%s9 + $0x34] sm:$0xf]
        %v1996 = vld [vmem:[%s9 + $0x38] sm:$0xf]
        %v1997 = vld [vmem:[%s9 + $0x3c] sm:$0xf]
        %v1998 = vld [vmem:[%s9 + $0x40] sm:$0xf]
        %v1999 = vld [vmem:[%s9 + $0x44] sm:$0xf]
        %v2000 = vld [vmem:[%s9 + $0x48] sm:$0xf]
        %v2001 = vld [vmem:[%s9 + $0x4c] sm:$0xf]
        %v2002 = vld [vmem:[%s9 + $0x50] sm:$0xf]
        %v2003 = vld [vmem:[%s9 + $0x54] sm:$0xf]
        %v2004 = vld [vmem:[%s9 + $0x58] sm:$0xf]
        %v2005 = vld [vmem:[%s9 + $0x5c] sm:$0xf]
        %v2006 = vld [vmem:[%s9 + $0x60] sm:$0xf]
        %v2007 = vld [vmem:[%s9 + $0x64] sm:$0xf]
        %v2008 = vld [vmem:[%s9 + $0x68] sm:$0xf]
        %v2009 = vld [vmem:[%s9 + $0x6c] sm:$0xf]
        %v2010 = vld [vmem:[%s9 + $0x70] sm:$0xf]
        %v2011 = vld [vmem:[%s9 + $0x74] sm:$0xf]
        %v2012 = vld [vmem:[%s9 + $0x78] sm:$0xf]
        %v2013 = vld [vmem:[%s9 + $0x7c] sm:$0xf]
        %v2014 = vld [vmem:[%s9 + $0x80] sm:$0xf]
        %v2015 = vld [vmem:[%s9 + $0x84] sm:$0xf]
        %v2016 = vld [vmem:[%s9 + $0x88] sm:$0xf]
        %v2017 = vld [vmem:[%s9 + $0x8c] sm:$0xf]
        %v2018 = vld [vmem:[%s9 + $0x90] sm:$0xf]
        %v2019 = vld [vmem:[%s9 + $0x94] sm:$0xf]
        %v2020 = vld [vmem:[%s9 + $0x98] sm:$0xf]
        %v2021 = vld [vmem:[%s9 + $0x9c] sm:$0xf]
        %v2022 = vld [vmem:[%s9 + $0xa0] sm:$0xf]
        %v2023 = vld [vmem:[%s9 + $0xa4] sm:$0xf]
        %v2024 = vld [vmem:[%s9 + $0xa8] sm:$0xf]
        %v2025 = vld [vmem:[%s9 + $0xac] sm:$0xf]
        %v2026 = vld [vmem:[%s9 + $0xb0] sm:$0xf]
        %v2027 = vld [vmem:[%s9 + $0xb4] sm:$0xf]
        %v2028 = vld [vmem:[%s9 + $0xb8] sm:$0xf]
        %v2029 = vld [vmem:[%s9 + $0xbc] sm:$0xf]
        %v2030 = vld [vmem:[%s9 + $0xc0] sm:$0xf]
        %v2031 = vld [vmem:[%s9 + $0xc4] sm:$0xf]
        %v2032 = vld [vmem:[%s9 + $0xc8] sm:$0xf]
        %v2033 = vld [vmem:[%s9 + $0xcc] sm:$0xf]
        %v2034 = vld [vmem:[%s9 + $0xd0] sm:$0xf]
        %v2035 = vld [vmem:[%s9 + $0xd4] sm:$0xf]
        %v2036 = vld [vmem:[%s9 + $0xd8] sm:$0xf]
        %v2037 = vld [vmem:[%s9 + $0xdc] sm:$0xf]
        %v2038 = vld [vmem:[%s9 + $0xe0] sm:$0xf]
        %v2039 = vld [vmem:[%s9 + $0xe4] sm:$0xf]
        %v2040 = vld [vmem:[%s9 + $0xe8] sm:$0xf]
        %v2041 = vld [vmem:[%s9 + $0xec] sm:$0xf]
        %v2042 = vld [vmem:[%s9 + $0xf0] sm:$0xf]
        %v2043 = vld [vmem:[%s9 + $0xf4] sm:$0xf]
        %v2044 = vld [vmem:[%s9 + $0xf8] sm:$0xf]
        %v2045 = vld [vmem:[%s9 + $0xfc] sm:$0xf]
        %v2046 = vld [vmem:[%s9 + $0x100] sm:$0xf]
        %v2047 = vld [vmem:[%s9 + $0x104] sm:$0xf]
        %v2048 = vld [vmem:[%s9 + $0x108] sm:$0xf]
        %v2049 = vld [vmem:[%s9 + $0x10c] sm:$0xf]
        %v2050 = vld [vmem:[%s9 + $0x110] sm:$0xf]
        %v2051 = vld [vmem:[%s9 + $0x114] sm:$0xf]
        %v2052 = vld [vmem:[%s9 + $0x118] sm:$0xf]
        %v2053 = vld [vmem:[%s9 + $0x11c] sm:$0xf]
        %v2054 = vld [vmem:[%s9 + $0x120] sm:$0xf]
        %v2055 = vld [vmem:[%s9 + $0x124] sm:$0xf]
        %v2056 = vld [vmem:[%s9 + $0x128] sm:$0xf]
        %v2057 = vld [vmem:[%s9 + $0x12c] sm:$0xf]
        %v2058 = vld [vmem:[%s9 + $0x130] sm:$0xf]
        %v2059 = vld [vmem:[%s9 + $0x134] sm:$0xf]
        %v2060 = vld [vmem:[%s9 + $0x138] sm:$0xf]
        %v2061 = vld [vmem:[%s9 + $0x13c] sm:$0xf]
        %v2062 = vld [vmem:[%s9 + $0x140] sm:$0xf]
        %v2063 = vld [vmem:[%s9 + $0x144] sm:$0xf]
        %v2064 = vld [vmem:[%s9 + $0x148] sm:$0xf]
        %v2065 = vld [vmem:[%s9 + $0x14c] sm:$0xf]
        %v2066 = vld [vmem:[%s9 + $0x150] sm:$0xf]
        %v2067 = vld [vmem:[%s9 + $0x154] sm:$0xf]
        %v2068 = vld [vmem:[%s9 + $0x158] sm:$0xf]
        %v2069 = vld [vmem:[%s9 + $0x15c] sm:$0xf]
        %v2070 = vld [vmem:[%s9 + $0x160] sm:$0xf]
        %v2071 = vld [vmem:[%s9 + $0x164] sm:$0xf]
        %v2072 = vld [vmem:[%s9 + $0x168] sm:$0xf]
        %v2073 = vld [vmem:[%s9 + $0x16c] sm:$0xf]
        %v2074 = vld [vmem:[%s9 + $0x170] sm:$0xf]
        %v2075 = vld [vmem:[%s9 + $0x174] sm:$0xf]
        %v2076 = vld [vmem:[%s9 + $0x178] sm:$0xf]
        %v2077 = vld [vmem:[%s9 + $0x17c] sm:$0xf]
        %v2078 = vld [vmem:[%s9 + $0x180] sm:$0xf]
        %v2079 = vld [vmem:[%s9 + $0x184] sm:$0xf]
        %v2080 = vld [vmem:[%s9 + $0x188] sm:$0xf]
        %v2081 = vld [vmem:[%s9 + $0x18c] sm:$0xf]
        %v2082 = vld [vmem:[%s9 + $0x190] sm:$0xf]
        %v2083 = vld [vmem:[%s9 + $0x194] sm:$0xf]
        %v2084 = vld [vmem:[%s9 + $0x198] sm:$0xf]
        %v2085 = vld [vmem:[%s9 + $0x19c] sm:$0xf]
        %v2086 = vld [vmem:[%s9 + $0x1a0] sm:$0xf]
        %v2087 = vld [vmem:[%s9 + $0x1a4] sm:$0xf]
        %v2088 = vld [vmem:[%s9 + $0x1a8] sm:$0xf]
        %v2089 = vld [vmem:[%s9 + $0x1ac] sm:$0xf]
        %v2090 = vld [vmem:[%s9 + $0x1b0] sm:$0xf]
        %v2091 = vld [vmem:[%s9 + $0x1b4] sm:$0xf]
        %v2092 = vld [vmem:[%s9 + $0x1b8] sm:$0xf]
        %v2093 = vld [vmem:[%s9 + $0x1bc] sm:$0xf]
        %v2094 = vld [vmem:[%s9 + $0x1c0] sm:$0xf]
        %v2095 = vld [vmem:[%s9 + $0x1c4] sm:$0xf]
        %v2096 = vld [vmem:[%s9 + $0x1c8] sm:$0xf]
        %v2097 = vld [vmem:[%s9 + $0x1cc] sm:$0xf]
        %v2098 = vld [vmem:[%s9 + $0x1d0] sm:$0xf]
        %v2099 = vld [vmem:[%s9 + $0x1d4] sm:$0xf]
        %v2100 = vld [vmem:[%s9 + $0x1d8] sm:$0xf]
        %v2101 = vld [vmem:[%s9 + $0x1dc] sm:$0xf]
        %v2102 = vld [vmem:[%s9 + $0x1e0] sm:$0xf]
        %v2103 = vld [vmem:[%s9 + $0x1e4] sm:$0xf]
        %v2104 = vld [vmem:[%s9 + $0x1e8] sm:$0xf]
        %v2105 = vld [vmem:[%s9 + $0x1ec] sm:$0xf]
        %v2106 = vld [vmem:[%s9 + $0x1f0] sm:$0xf]
        %v2107 = vld [vmem:[%s9 + $0x1f4] sm:$0xf]
        %v2108 = vld [vmem:[%s9 + $0x1f8] sm:$0xf]
        %v2109 = vld [vmem:[%s9 + $0x1fc] sm:$0xf]
        %v2110 = vld [vmem:[%s9 + $0x200] sm:$0xf]
        %v2111 = vld [vmem:[%s9 + $0x204] sm:$0xf]
        %v2112 = vld [vmem:[%s9 + $0x208] sm:$0xf]
        %v2113 = vld [vmem:[%s9 + $0x20c] sm:$0xf]
        %v2114 = vld [vmem:[%s9 + $0x210] sm:$0xf]
        %v2115 = vld [vmem:[%s9 + $0x214] sm:$0xf]
        %v2116 = vld [vmem:[%s9 + $0x218] sm:$0xf]
        %v2117 = vld [vmem:[%s9 + $0x21c] sm:$0xf]
        %v2118 = vld [vmem:[%s9 + $0x220] sm:$0xf]
        %v2119 = vld [vmem:[%s9 + $0x224] sm:$0xf]
        %v2120 = vld [vmem:[%s9 + $0x228] sm:$0xf]
        %v2121 = vld [vmem:[%s9 + $0x22c] sm:$0xf]
        %v2122 = vld [vmem:[%s9 + $0x230] sm:$0xf]
        %v2123 = vld [vmem:[%s9 + $0x234] sm:$0xf]
        %v2124 = vld [vmem:[%s9 + $0x238] sm:$0xf]
        %v2125 = vld [vmem:[%s9 + $0x23c] sm:$0xf]
        %v2126 = vld [vmem:[%s9 + $0x240] sm:$0xf]
        %v2127 = vld [vmem:[%s9 + $0x244] sm:$0xf]
        %v2128 = vld [vmem:[%s9 + $0x248] sm:$0xf]
        %v2129 = vld [vmem:[%s9 + $0x24c] sm:$0xf]
        %v2130 = vld [vmem:[%s9 + $0x250] sm:$0xf]
        %v2131 = vld [vmem:[%s9 + $0x254] sm:$0xf]
        %v2132 = vld [vmem:[%s9 + $0x258] sm:$0xf]
        %v2133 = vld [vmem:[%s9 + $0x25c] sm:$0xf]
        %v2134 = vld [vmem:[%s9 + $0x260] sm:$0xf]
        %v2135 = vld [vmem:[%s9 + $0x264] sm:$0xf]
        %v2136 = vld [vmem:[%s9 + $0x268] sm:$0xf]
        %v2137 = vld [vmem:[%s9 + $0x26c] sm:$0xf]
        %v2138 = vld [vmem:[%s9 + $0x270] sm:$0xf]
        %v2139 = vld [vmem:[%s9 + $0x274] sm:$0xf]
        %v2140 = vld [vmem:[%s9 + $0x278] sm:$0xf]
        %v2141 = vld [vmem:[%s9 + $0x27c] sm:$0xf]
        %v2142 = vld [vmem:[%s9 + $0x280] sm:$0xf]
        %v2143 = vld [vmem:[%s9 + $0x284] sm:$0xf]
        %v2144 = vld [vmem:[%s9 + $0x288] sm:$0xf]
        %v2145 = vld [vmem:[%s9 + $0x28c] sm:$0xf]
        %v2146 = vld [vmem:[%s9 + $0x290] sm:$0xf]
        %v2147 = vld [vmem:[%s9 + $0x294] sm:$0xf]
        %v2148 = vld [vmem:[%s9 + $0x298] sm:$0xf]
        %v2149 = vld [vmem:[%s9 + $0x29c] sm:$0xf]
        %v2150 = vld [vmem:[%s9 + $0x2a0] sm:$0xf]
        %v2151 = vld [vmem:[%s9 + $0x2a4] sm:$0xf]
        %v2152 = vld [vmem:[%s9 + $0x2a8] sm:$0xf]
        %v2153 = vld [vmem:[%s9 + $0x2ac] sm:$0xf]
        %v2154 = vld [vmem:[%s9 + $0x2b0] sm:$0xf]
        %v2155 = vld [vmem:[%s9 + $0x2b4] sm:$0xf]
        %v2156 = vld [vmem:[%s9 + $0x2b8] sm:$0xf]
        %v2157 = vld [vmem:[%s9 + $0x2bc] sm:$0xf]
        %v2158 = vld [vmem:[%s9 + $0x2c0] sm:$0xf]
        %v2159 = vld [vmem:[%s9 + $0x2c4] sm:$0xf]
        %v2160 = vld [vmem:[%s9 + $0x2c8] sm:$0xf]
        %v2161 = vld [vmem:[%s9 + $0x2cc] sm:$0xf]
        %v2162 = vld [vmem:[%s9 + $0x2d0] sm:$0xf]
        %v2163 = vld [vmem:[%s9 + $0x2d4] sm:$0xf]
        %v2164 = vld [vmem:[%s9 + $0x2d8] sm:$0xf]
        %v2165 = vld [vmem:[%s9 + $0x2dc] sm:$0xf]
        %v2166 = vld [vmem:[%s9 + $0x2e0] sm:$0xf]
        %v2167 = vld [vmem:[%s9 + $0x2e4] sm:$0xf]
        %v2168 = vld [vmem:[%s9 + $0x2e8] sm:$0xf]
        %v2169 = vld [vmem:[%s9 + $0x2ec] sm:$0xf]
        %v2170 = vld [vmem:[%s9 + $0x2f0] sm:$0xf]
        %v2171 = vld [vmem:[%s9 + $0x2f4] sm:$0xf]
        %v2172 = vld [vmem:[%s9 + $0x2f8] sm:$0xf]
        %v2173 = vld [vmem:[%s9 + $0x2fc] sm:$0xf]
        %v2174 = vld [vmem:[%s9 + $0x300] sm:$0xf]
        %v2175 = vld [vmem:[%s9 + $0x304] sm:$0xf]
        %v2176 = vld [vmem:[%s9 + $0x308] sm:$0xf]
        %v2177 = vld [vmem:[%s9 + $0x30c] sm:$0xf]
        %v2178 = vld [vmem:[%s9 + $0x310] sm:$0xf]
        %v2179 = vld [vmem:[%s9 + $0x314] sm:$0xf]
        %v2180 = vld [vmem:[%s9 + $0x318] sm:$0xf]
        %v2181 = vld [vmem:[%s9 + $0x31c] sm:$0xf]
        %v2182 = vld [vmem:[%s9 + $0x320] sm:$0xf]
        %v2183 = vld [vmem:[%s9 + $0x324] sm:$0xf]
        %v2184 = vld [vmem:[%s9 + $0x328] sm:$0xf]
        %v2185 = vld [vmem:[%s9 + $0x32c] sm:$0xf]
        %v2186 = vld [vmem:[%s9 + $0x330] sm:$0xf]
        %v2187 = vld [vmem:[%s9 + $0x334] sm:$0xf]
        %v2188 = vld [vmem:[%s9 + $0x338] sm:$0xf]
        %v2189 = vld [vmem:[%s9 + $0x33c] sm:$0xf]
        %v2190 = vld [vmem:[%s9 + $0x340] sm:$0xf]
        %v2191 = vld [vmem:[%s9 + $0x344] sm:$0xf]
        %v2192 = vld [vmem:[%s9 + $0x348] sm:$0xf]
        %v2193 = vld [vmem:[%s9 + $0x34c] sm:$0xf]
        %v2194 = vld [vmem:[%s9 + $0x350] sm:$0xf]
        %v2195 = vld [vmem:[%s9 + $0x354] sm:$0xf]
        %v2196 = vld [vmem:[%s9 + $0x358] sm:$0xf]
        %v2197 = vld [vmem:[%s9 + $0x35c] sm:$0xf]
        %v2198 = vld [vmem:[%s9 + $0x360] sm:$0xf]
        %v2199 = vld [vmem:[%s9 + $0x364] sm:$0xf]
        %v2200 = vld [vmem:[%s9 + $0x368] sm:$0xf]
        %v2201 = vld [vmem:[%s9 + $0x36c] sm:$0xf]
        %v2202 = vld [vmem:[%s9 + $0x370] sm:$0xf]
        %v2203 = vld [vmem:[%s9 + $0x374] sm:$0xf]
        %v2204 = vld [vmem:[%s9 + $0x378] sm:$0xf]
        %v2205 = vld [vmem:[%s9 + $0x37c] sm:$0xf]
        %v2206 = vld [vmem:[%s9 + $0x380] sm:$0xf]
        %v2207 = vld [vmem:[%s9 + $0x384] sm:$0xf]
        %v2208 = vld [vmem:[%s9 + $0x388] sm:$0xf]
        %v2209 = vld [vmem:[%s9 + $0x38c] sm:$0xf]
        %v2210 = vld [vmem:[%s9 + $0x390] sm:$0xf]
        %v2211 = vld [vmem:[%s9 + $0x394] sm:$0xf]
        %v2212 = vld [vmem:[%s9 + $0x398] sm:$0xf]
        %v2213 = vld [vmem:[%s9 + $0x39c] sm:$0xf]
        %v2214 = vld [vmem:[%s9 + $0x3a0] sm:$0xf]
        %v2215 = vld [vmem:[%s9 + $0x3a4] sm:$0xf]
        %v2216 = vld [vmem:[%s9 + $0x3a8] sm:$0xf]
        %v2217 = vld [vmem:[%s9 + $0x3ac] sm:$0xf]
        %v2218 = vld [vmem:[%s9 + $0x3b0] sm:$0xf]
        %v2219 = vld [vmem:[%s9 + $0x3b4] sm:$0xf]
        %v2220 = vld [vmem:[%s9 + $0x3b8] sm:$0xf]
        %v2221 = vld [vmem:[%s9 + $0x3bc] sm:$0xf]
        %v2222 = vld [vmem:[%s9 + $0x3c0] sm:$0xf]
        %v2223 = vld [vmem:[%s9 + $0x3c4] sm:$0xf]
        %v2224 = vld [vmem:[%s9 + $0x3c8] sm:$0xf]
        %v2225 = vld [vmem:[%s9 + $0x3cc] sm:$0xf]
        %v2226 = vld [vmem:[%s9 + $0x3d0] sm:$0xf]
        %v2227 = vld [vmem:[%s9 + $0x3d4] sm:$0xf]
        %v2228 = vld [vmem:[%s9 + $0x3d8] sm:$0xf]
        %v2229 = vld [vmem:[%s9 + $0x3dc] sm:$0xf]
        %v2230 = vld [vmem:[%s9 + $0x3e0] sm:$0xf]
        %v2231 = vld [vmem:[%s9 + $0x3e4] sm:$0xf]
        %v2232 = vld [vmem:[%s9 + $0x3e8] sm:$0xf]
        %v2233 = vld [vmem:[%s9 + $0x3ec] sm:$0xf]
        %v2234 = vld [vmem:[%s9 + $0x3f0] sm:$0xf]
        %v2235 = vld [vmem:[%s9 + $0x3f4] sm:$0xf]
        %v2236 = vld [vmem:[%s9 + $0x3f8] sm:$0xf]
        %v2237 = vld [vmem:[%s9 + $0x3fc] sm:$0xf]
        %v2494 = vunpack.c.l.b16 %v1982
        %v2495 = vunpack.c.l.b16 %v1983
        %v2496 = vunpack.c.l.b16 %v1984
        %v2497 = vunpack.c.l.b16 %v1985
        %v2498 = vunpack.c.l.b16 %v1986
        %v2499 = vunpack.c.l.b16 %v1987
        %v2500 = vunpack.c.l.b16 %v1988
        %v2501 = vunpack.c.l.b16 %v1989
        %v2502 = vunpack.c.l.b16 %v1990
        %v2503 = vunpack.c.l.b16 %v1991
        %v2504 = vunpack.c.l.b16 %v1992
        %v2505 = vunpack.c.l.b16 %v1993
        %v2506 = vunpack.c.l.b16 %v1994
        %v2507 = vunpack.c.l.b16 %v1995
        %v2508 = vunpack.c.l.b16 %v1996
        %v2509 = vunpack.c.l.b16 %v1997
        %v2510 = vunpack.c.l.b16 %v1998
        %v2511 = vunpack.c.l.b16 %v1999
        %v2512 = vunpack.c.l.b16 %v2000
        %v2513 = vunpack.c.l.b16 %v2001
        %v2514 = vunpack.c.l.b16 %v2002
        %v2515 = vunpack.c.l.b16 %v2003
        %v2516 = vunpack.c.l.b16 %v2004
        %v2517 = vunpack.c.l.b16 %v2005
        %v2518 = vunpack.c.l.b16 %v2006
        %v2519 = vunpack.c.l.b16 %v2007
        %v2520 = vunpack.c.l.b16 %v2008
        %v2521 = vunpack.c.l.b16 %v2009
        %v2522 = vunpack.c.l.b16 %v2010
        %v2523 = vunpack.c.l.b16 %v2011
        %v2524 = vunpack.c.l.b16 %v2012
        %v2525 = vunpack.c.l.b16 %v2013
        %v2526 = vunpack.c.l.b16 %v2014
        %v2527 = vunpack.c.l.b16 %v2015
        %v2528 = vunpack.c.l.b16 %v2016
        %v2529 = vunpack.c.l.b16 %v2017
        %v2530 = vunpack.c.l.b16 %v2018
        %v2531 = vunpack.c.l.b16 %v2019
        %v2532 = vunpack.c.l.b16 %v2020
        %v2533 = vunpack.c.l.b16 %v2021
        %v2534 = vunpack.c.l.b16 %v2022
        %v2535 = vunpack.c.l.b16 %v2023
        %v2536 = vunpack.c.l.b16 %v2024
        %v2537 = vunpack.c.l.b16 %v2025
        %v2538 = vunpack.c.l.b16 %v2026
        %v2539 = vunpack.c.l.b16 %v2027
        %v2540 = vunpack.c.l.b16 %v2028
        %v2541 = vunpack.c.l.b16 %v2029
        %v2542 = vunpack.c.l.b16 %v2030
        %v2543 = vunpack.c.l.b16 %v2031
        %v2544 = vunpack.c.l.b16 %v2032
        %v2545 = vunpack.c.l.b16 %v2033
        %v2546 = vunpack.c.l.b16 %v2034
        %v2547 = vunpack.c.l.b16 %v2035
        %v2548 = vunpack.c.l.b16 %v2036
        %v2549 = vunpack.c.l.b16 %v2037
        %v2550 = vunpack.c.l.b16 %v2038
        %v2551 = vunpack.c.l.b16 %v2039
        %v2552 = vunpack.c.l.b16 %v2040
        %v2553 = vunpack.c.l.b16 %v2041
        %v2554 = vunpack.c.l.b16 %v2042
        %v2555 = vunpack.c.l.b16 %v2043
        %v2556 = vunpack.c.l.b16 %v2044
        %v2557 = vunpack.c.l.b16 %v2045
        %v2558 = vunpack.c.l.b16 %v2046
        %v2559 = vunpack.c.l.b16 %v2047
        %v2560 = vunpack.c.l.b16 %v2048
        %v2561 = vunpack.c.l.b16 %v2049
        %v2562 = vunpack.c.l.b16 %v2050
        %v2563 = vunpack.c.l.b16 %v2051
        %v2564 = vunpack.c.l.b16 %v2052
        %v2565 = vunpack.c.l.b16 %v2053
        %v2566 = vunpack.c.l.b16 %v2054
        %v2567 = vunpack.c.l.b16 %v2055
        %v2568 = vunpack.c.l.b16 %v2056
        %v2569 = vunpack.c.l.b16 %v2057
        %v2570 = vunpack.c.l.b16 %v2058
        %v2571 = vunpack.c.l.b16 %v2059
        %v2572 = vunpack.c.l.b16 %v2060
        %v2573 = vunpack.c.l.b16 %v2061
        %v2574 = vunpack.c.l.b16 %v2062
        %v2575 = vunpack.c.l.b16 %v2063
        %v2576 = vunpack.c.l.b16 %v2064
        %v2577 = vunpack.c.l.b16 %v2065
        %v2578 = vunpack.c.l.b16 %v2066
        %v2579 = vunpack.c.l.b16 %v2067
        %v2580 = vunpack.c.l.b16 %v2068
        %v2581 = vunpack.c.l.b16 %v2069
        %v2582 = vunpack.c.l.b16 %v2070
        %v2583 = vunpack.c.l.b16 %v2071
        %v2584 = vunpack.c.l.b16 %v2072
        %v2585 = vunpack.c.l.b16 %v2073
        %v2586 = vunpack.c.l.b16 %v2074
        %v2587 = vunpack.c.l.b16 %v2075
        %v2588 = vunpack.c.l.b16 %v2076
        %v2589 = vunpack.c.l.b16 %v2077
        %v2590 = vunpack.c.l.b16 %v2078
        %v2591 = vunpack.c.l.b16 %v2079
        %v2592 = vunpack.c.l.b16 %v2080
        %v2593 = vunpack.c.l.b16 %v2081
        %v2594 = vunpack.c.l.b16 %v2082
        %v2595 = vunpack.c.l.b16 %v2083
        %v2596 = vunpack.c.l.b16 %v2084
        %v2597 = vunpack.c.l.b16 %v2085
        %v2598 = vunpack.c.l.b16 %v2086
        %v2599 = vunpack.c.l.b16 %v2087
        %v2600 = vunpack.c.l.b16 %v2088
        %v2601 = vunpack.c.l.b16 %v2089
        %v2602 = vunpack.c.l.b16 %v2090
        %v2603 = vunpack.c.l.b16 %v2091
        %v2604 = vunpack.c.l.b16 %v2092
        %v2605 = vunpack.c.l.b16 %v2093
        %v2606 = vunpack.c.l.b16 %v2094
        %v2607 = vunpack.c.l.b16 %v2095
        %v2608 = vunpack.c.l.b16 %v2096
        %v2609 = vunpack.c.l.b16 %v2097
        %v2610 = vunpack.c.l.b16 %v2098
        %v2611 = vunpack.c.l.b16 %v2099
        %v2612 = vunpack.c.l.b16 %v2100
        %v2613 = vunpack.c.l.b16 %v2101
        %v2614 = vunpack.c.l.b16 %v2102
        %v2615 = vunpack.c.l.b16 %v2103
        %v2616 = vunpack.c.l.b16 %v2104
        %v2617 = vunpack.c.l.b16 %v2105
        %v2618 = vunpack.c.l.b16 %v2106
        %v2619 = vunpack.c.l.b16 %v2107
        %v2620 = vunpack.c.l.b16 %v2108
        %v2621 = vunpack.c.l.b16 %v2109
        %v2622 = vunpack.c.l.b16 %v2110
        %v2623 = vunpack.c.l.b16 %v2111
        %v2624 = vunpack.c.l.b16 %v2112
        %v2625 = vunpack.c.l.b16 %v2113
        %v2626 = vunpack.c.l.b16 %v2114
        %v2627 = vunpack.c.l.b16 %v2115
        %v2628 = vunpack.c.l.b16 %v2116
        %v2629 = vunpack.c.l.b16 %v2117
        %v2630 = vunpack.c.l.b16 %v2118
        %v2631 = vunpack.c.l.b16 %v2119
        %v2632 = vunpack.c.l.b16 %v2120
        %v2633 = vunpack.c.l.b16 %v2121
        %v2634 = vunpack.c.l.b16 %v2122
        %v2635 = vunpack.c.l.b16 %v2123
        %v2636 = vunpack.c.l.b16 %v2124
        %v2637 = vunpack.c.l.b16 %v2125
        %v2638 = vunpack.c.l.b16 %v2126
        %v2639 = vunpack.c.l.b16 %v2127
        %v2640 = vunpack.c.l.b16 %v2128
        %v2641 = vunpack.c.l.b16 %v2129
        %v2642 = vunpack.c.l.b16 %v2130
        %v2643 = vunpack.c.l.b16 %v2131
        %v2644 = vunpack.c.l.b16 %v2132
        %v2645 = vunpack.c.l.b16 %v2133
        %v2646 = vunpack.c.l.b16 %v2134
        %v2647 = vunpack.c.l.b16 %v2135
        %v2648 = vunpack.c.l.b16 %v2136
        %v2649 = vunpack.c.l.b16 %v2137
        %v2650 = vunpack.c.l.b16 %v2138
        %v2651 = vunpack.c.l.b16 %v2139
        %v2652 = vunpack.c.l.b16 %v2140
        %v2653 = vunpack.c.l.b16 %v2141
        %v2654 = vunpack.c.l.b16 %v2142
        %v2655 = vunpack.c.l.b16 %v2143
        %v2656 = vunpack.c.l.b16 %v2144
        %v2657 = vunpack.c.l.b16 %v2145
        %v2658 = vunpack.c.l.b16 %v2146
        %v2659 = vunpack.c.l.b16 %v2147
        %v2660 = vunpack.c.l.b16 %v2148
        %v2661 = vunpack.c.l.b16 %v2149
        %v2662 = vunpack.c.l.b16 %v2150
        %v2663 = vunpack.c.l.b16 %v2151
        %v2664 = vunpack.c.l.b16 %v2152
        %v2665 = vunpack.c.l.b16 %v2153
        %v2666 = vunpack.c.l.b16 %v2154
        %v2667 = vunpack.c.l.b16 %v2155
        %v2668 = vunpack.c.l.b16 %v2156
        %v2669 = vunpack.c.l.b16 %v2157
        %v2670 = vunpack.c.l.b16 %v2158
        %v2671 = vunpack.c.l.b16 %v2159
        %v2672 = vunpack.c.l.b16 %v2160
        %v2673 = vunpack.c.l.b16 %v2161
        %v2674 = vunpack.c.l.b16 %v2162
        %v2675 = vunpack.c.l.b16 %v2163
        %v2676 = vunpack.c.l.b16 %v2164
        %v2677 = vunpack.c.l.b16 %v2165
        %v2678 = vunpack.c.l.b16 %v2166
        %v2679 = vunpack.c.l.b16 %v2167
        %v2680 = vunpack.c.l.b16 %v2168
        %v2681 = vunpack.c.l.b16 %v2169
        %v2682 = vunpack.c.l.b16 %v2170
        %v2683 = vunpack.c.l.b16 %v2171
        %v2684 = vunpack.c.l.b16 %v2172
        %v2685 = vunpack.c.l.b16 %v2173
        %v2686 = vunpack.c.l.b16 %v2174
        %v2687 = vunpack.c.l.b16 %v2175
        %v2688 = vunpack.c.l.b16 %v2176
        %v2689 = vunpack.c.l.b16 %v2177
        %v2690 = vunpack.c.l.b16 %v2178
        %v2691 = vunpack.c.l.b16 %v2179
        %v2692 = vunpack.c.l.b16 %v2180
        %v2693 = vunpack.c.l.b16 %v2181
        %v2694 = vunpack.c.l.b16 %v2182
        %v2695 = vunpack.c.l.b16 %v2183
        %v2696 = vunpack.c.l.b16 %v2184
        %v2697 = vunpack.c.l.b16 %v2185
        %v2698 = vunpack.c.l.b16 %v2186
        %v2699 = vunpack.c.l.b16 %v2187
        %v2700 = vunpack.c.l.b16 %v2188
        %v2701 = vunpack.c.l.b16 %v2189
        %v2702 = vunpack.c.l.b16 %v2190
        %v2703 = vunpack.c.l.b16 %v2191
        %v2704 = vunpack.c.l.b16 %v2192
        %v2705 = vunpack.c.l.b16 %v2193
        %v2706 = vunpack.c.l.b16 %v2194
        %v2707 = vunpack.c.l.b16 %v2195
        %v2708 = vunpack.c.l.b16 %v2196
        %v2709 = vunpack.c.l.b16 %v2197
        %v2710 = vunpack.c.l.b16 %v2198
        %v2711 = vunpack.c.l.b16 %v2199
        %v2712 = vunpack.c.l.b16 %v2200
        %v2713 = vunpack.c.l.b16 %v2201
        %v2714 = vunpack.c.l.b16 %v2202
        %v2715 = vunpack.c.l.b16 %v2203
        %v2716 = vunpack.c.l.b16 %v2204
        %v2717 = vunpack.c.l.b16 %v2205
        %v2718 = vunpack.c.l.b16 %v2206
        %v2719 = vunpack.c.l.b16 %v2207
        %v2720 = vunpack.c.l.b16 %v2208
        %v2721 = vunpack.c.l.b16 %v2209
        %v2722 = vunpack.c.l.b16 %v2210
        %v2723 = vunpack.c.l.b16 %v2211
        %v2724 = vunpack.c.l.b16 %v2212
        %v2725 = vunpack.c.l.b16 %v2213
        %v2726 = vunpack.c.l.b16 %v2214
        %v2727 = vunpack.c.l.b16 %v2215
        %v2728 = vunpack.c.l.b16 %v2216
        %v2729 = vunpack.c.l.b16 %v2217
        %v2730 = vunpack.c.l.b16 %v2218
        %v2731 = vunpack.c.l.b16 %v2219
        %v2732 = vunpack.c.l.b16 %v2220
        %v2733 = vunpack.c.l.b16 %v2221
        %v2734 = vunpack.c.l.b16 %v2222
        %v2735 = vunpack.c.l.b16 %v2223
        %v2736 = vunpack.c.l.b16 %v2224
        %v2737 = vunpack.c.l.b16 %v2225
        %v2738 = vunpack.c.l.b16 %v2226
        %v2739 = vunpack.c.l.b16 %v2227
        %v2740 = vunpack.c.l.b16 %v2228
        %v2741 = vunpack.c.l.b16 %v2229
        %v2742 = vunpack.c.l.b16 %v2230
        %v2743 = vunpack.c.l.b16 %v2231
        %v2744 = vunpack.c.l.b16 %v2232
        %v2745 = vunpack.c.l.b16 %v2233
        %v2746 = vunpack.c.l.b16 %v2234
        %v2747 = vunpack.c.l.b16 %v2235
        %v2748 = vunpack.c.l.b16 %v2236
        %v2749 = vunpack.c.l.b16 %v2237
        %v2750 = vpack.c.b16 %v2495, %v2494
        %v2751 = vpack.c.b16 %v2497, %v2496
        %v2752 = vpack.c.b16 %v2499, %v2498
        %v2753 = vpack.c.b16 %v2501, %v2500
        %v2754 = vpack.c.b16 %v2503, %v2502
        %v2755 = vpack.c.b16 %v2505, %v2504
        %v2756 = vpack.c.b16 %v2507, %v2506
        %v2757 = vpack.c.b16 %v2509, %v2508
        %v2758 = vpack.c.b16 %v2511, %v2510
        %v2759 = vpack.c.b16 %v2513, %v2512
        %v2760 = vpack.c.b16 %v2515, %v2514
        %v2761 = vpack.c.b16 %v2517, %v2516
        %v2762 = vpack.c.b16 %v2519, %v2518
        %v2763 = vpack.c.b16 %v2521, %v2520
        %v2764 = vpack.c.b16 %v2523, %v2522
        %v2765 = vpack.c.b16 %v2525, %v2524
        %v2766 = vpack.c.b16 %v2527, %v2526
        %v2767 = vpack.c.b16 %v2529, %v2528
        %v2768 = vpack.c.b16 %v2531, %v2530
        %v2769 = vpack.c.b16 %v2533, %v2532
        %v2770 = vpack.c.b16 %v2535, %v2534
        %v2771 = vpack.c.b16 %v2537, %v2536
        %v2772 = vpack.c.b16 %v2539, %v2538
        %v2773 = vpack.c.b16 %v2541, %v2540
        %v2774 = vpack.c.b16 %v2543, %v2542
        %v2775 = vpack.c.b16 %v2545, %v2544
        %v2776 = vpack.c.b16 %v2547, %v2546
        %v2777 = vpack.c.b16 %v2549, %v2548
        %v2778 = vpack.c.b16 %v2551, %v2550
        %v2779 = vpack.c.b16 %v2553, %v2552
        %v2780 = vpack.c.b16 %v2555, %v2554
        %v2781 = vpack.c.b16 %v2557, %v2556
        %v2782 = vpack.c.b16 %v2559, %v2558
        %v2783 = vpack.c.b16 %v2561, %v2560
        %v2784 = vpack.c.b16 %v2563, %v2562
        %v2785 = vpack.c.b16 %v2565, %v2564
        %v2786 = vpack.c.b16 %v2567, %v2566
        %v2787 = vpack.c.b16 %v2569, %v2568
        %v2788 = vpack.c.b16 %v2571, %v2570
        %v2789 = vpack.c.b16 %v2573, %v2572
        %v2790 = vpack.c.b16 %v2575, %v2574
        %v2791 = vpack.c.b16 %v2577, %v2576
        %v2792 = vpack.c.b16 %v2579, %v2578
        %v2793 = vpack.c.b16 %v2581, %v2580
        %v2794 = vpack.c.b16 %v2583, %v2582
        %v2795 = vpack.c.b16 %v2585, %v2584
        %v2796 = vpack.c.b16 %v2587, %v2586
        %v2797 = vpack.c.b16 %v2589, %v2588
        %v2798 = vpack.c.b16 %v2591, %v2590
        %v2799 = vpack.c.b16 %v2593, %v2592
        %v2800 = vpack.c.b16 %v2595, %v2594
        %v2801 = vpack.c.b16 %v2597, %v2596
        %v2802 = vpack.c.b16 %v2599, %v2598
        %v2803 = vpack.c.b16 %v2601, %v2600
        %v2804 = vpack.c.b16 %v2603, %v2602
        %v2805 = vpack.c.b16 %v2605, %v2604
        %v2806 = vpack.c.b16 %v2607, %v2606
        %v2807 = vpack.c.b16 %v2609, %v2608
        %v2808 = vpack.c.b16 %v2611, %v2610
        %v2809 = vpack.c.b16 %v2613, %v2612
        %v2810 = vpack.c.b16 %v2615, %v2614
        %v2811 = vpack.c.b16 %v2617, %v2616
        %v2812 = vpack.c.b16 %v2619, %v2618
        %v2813 = vpack.c.b16 %v2621, %v2620
        %v2814 = vpack.c.b16 %v2623, %v2622
        %v2815 = vpack.c.b16 %v2625, %v2624
        %v2816 = vpack.c.b16 %v2627, %v2626
        %v2817 = vpack.c.b16 %v2629, %v2628
        %v2818 = vpack.c.b16 %v2631, %v2630
        %v2819 = vpack.c.b16 %v2633, %v2632
        %v2820 = vpack.c.b16 %v2635, %v2634
        %v2821 = vpack.c.b16 %v2637, %v2636
        %v2822 = vpack.c.b16 %v2639, %v2638
        %v2823 = vpack.c.b16 %v2641, %v2640
        %v2824 = vpack.c.b16 %v2643, %v2642
        %v2825 = vpack.c.b16 %v2645, %v2644
        %v2826 = vpack.c.b16 %v2647, %v2646
        %v2827 = vpack.c.b16 %v2649, %v2648
        %v2828 = vpack.c.b16 %v2651, %v2650
        %v2829 = vpack.c.b16 %v2653, %v2652
        %v2830 = vpack.c.b16 %v2655, %v2654
        %v2831 = vpack.c.b16 %v2657, %v2656
        %v2832 = vpack.c.b16 %v2659, %v2658
        %v2833 = vpack.c.b16 %v2661, %v2660
        %v2834 = vpack.c.b16 %v2663, %v2662
        %v2835 = vpack.c.b16 %v2665, %v2664
        %v2836 = vpack.c.b16 %v2667, %v2666
        %v2837 = vpack.c.b16 %v2669, %v2668
        %v2838 = vpack.c.b16 %v2671, %v2670
        %v2839 = vpack.c.b16 %v2673, %v2672
        %v2840 = vpack.c.b16 %v2675, %v2674
        %v2841 = vpack.c.b16 %v2677, %v2676
        %v2842 = vpack.c.b16 %v2679, %v2678
        %v2843 = vpack.c.b16 %v2681, %v2680
        %v2844 = vpack.c.b16 %v2683, %v2682
        %v2845 = vpack.c.b16 %v2685, %v2684
        %v2846 = vpack.c.b16 %v2687, %v2686
        %v2847 = vpack.c.b16 %v2689, %v2688
        %v2848 = vpack.c.b16 %v2691, %v2690
        %v2849 = vpack.c.b16 %v2693, %v2692
        %v2850 = vpack.c.b16 %v2695, %v2694
        %v2851 = vpack.c.b16 %v2697, %v2696
        %v2852 = vpack.c.b16 %v2699, %v2698
        %v2853 = vpack.c.b16 %v2701, %v2700
        %v2854 = vpack.c.b16 %v2703, %v2702
        %v2855 = vpack.c.b16 %v2705, %v2704
        %v2856 = vpack.c.b16 %v2707, %v2706
        %v2857 = vpack.c.b16 %v2709, %v2708
        %v2858 = vpack.c.b16 %v2711, %v2710
        %v2859 = vpack.c.b16 %v2713, %v2712
        %v2860 = vpack.c.b16 %v2715, %v2714
        %v2861 = vpack.c.b16 %v2717, %v2716
        %v2862 = vpack.c.b16 %v2719, %v2718
        %v2863 = vpack.c.b16 %v2721, %v2720
        %v2864 = vpack.c.b16 %v2723, %v2722
        %v2865 = vpack.c.b16 %v2725, %v2724
        %v2866 = vpack.c.b16 %v2727, %v2726
        %v2867 = vpack.c.b16 %v2729, %v2728
        %v2868 = vpack.c.b16 %v2731, %v2730
        %v2869 = vpack.c.b16 %v2733, %v2732
        %v2870 = vpack.c.b16 %v2735, %v2734
        %v2871 = vpack.c.b16 %v2737, %v2736
        %v2872 = vpack.c.b16 %v2739, %v2738
        %v2873 = vpack.c.b16 %v2741, %v2740
        %v2874 = vpack.c.b16 %v2743, %v2742
        %v2875 = vpack.c.b16 %v2745, %v2744
        %v2876 = vpack.c.b16 %v2747, %v2746
        %v2877 = vpack.c.b16 %v2749, %v2748
        %3006 = vmatprep.subr.bf16.mxu0 0
        %3007 = vmatpush1.bf16.msra.mxu0 %v2750
        %3008 = vmatprep.subr.bf16.mxu0 0
        %3009 = vmatpush1.bf16.msra.mxu0 %v2751
        %3010 = vmatprep.subr.bf16.mxu0 0
        %3011 = vmatpush1.bf16.msra.mxu0 %v2752
        %3012 = vmatprep.subr.bf16.mxu0 0
        %3013 = vmatpush1.bf16.msra.mxu0 %v2753
        %3014 = vmatprep.subr.bf16.mxu0 0
        %3015 = vmatpush1.bf16.msra.mxu0 %v2754
        %3016 = vmatprep.subr.bf16.mxu0 0
        %3017 = vmatpush1.bf16.msra.mxu0 %v2755
        %3018 = vmatprep.subr.bf16.mxu0 0
        %3019 = vmatpush1.bf16.msra.mxu0 %v2756
        %3020 = vmatprep.subr.bf16.mxu0 0
        %3021 = vmatpush1.bf16.msra.mxu0 %v2757
        %3022 = vmatprep.subr.bf16.mxu0 0
        %3023 = vmatpush1.bf16.msra.mxu0 %v2758
        %3024 = vmatprep.subr.bf16.mxu0 0
        %3025 = vmatpush1.bf16.msra.mxu0 %v2759
        %3026 = vmatprep.subr.bf16.mxu0 0
        %3027 = vmatpush1.bf16.msra.mxu0 %v2760
        %3028 = vmatprep.subr.bf16.mxu0 0
        %3029 = vmatpush1.bf16.msra.mxu0 %v2761
        %3030 = vmatprep.subr.bf16.mxu0 0
        %3031 = vmatpush1.bf16.msra.mxu0 %v2762
        %3032 = vmatprep.subr.bf16.mxu0 0
        %3033 = vmatpush1.bf16.msra.mxu0 %v2763
        %3034 = vmatprep.subr.bf16.mxu0 0
        %3035 = vmatpush1.bf16.msra.mxu0 %v2764
        %3036 = vmatprep.subr.bf16.mxu0 0
        %3037 = vmatpush1.bf16.msra.mxu0 %v2765
        %3038 = vmatprep.mubr.bf16.mxu0 %v1967
        %3039 = vmatmul.mubr.bf16.gmra.mrb[0].mxu0 %v1966
        %v3040 = vpop.f32.mrb[0].mxu0
        %v3041 = vadd.f32 0.0, %v3040
        %v3042 = vpop.f32.mrb[0].mxu0
        %v3043 = vpop.f32.mrb[0].mxu0
        %v3044 = vpop.f32.mrb[0].mxu0
        %3045 = vdwg.mxu0
        %3046 = vmatprep.subr.bf16.mxu0 0
        %3047 = vmatpush1.bf16.msra.mxu0 %v2766
        %3048 = vmatprep.subr.bf16.mxu0 0
        %3049 = vmatpush1.bf16.msra.mxu0 %v2767
        %3050 = vmatprep.subr.bf16.mxu0 0
        %3051 = vmatpush1.bf16.msra.mxu0 %v2768
        %3052 = vmatprep.subr.bf16.mxu0 0
        %3053 = vmatpush1.bf16.msra.mxu0 %v2769
        %3054 = vmatprep.subr.bf16.mxu0 0
        %3055 = vmatpush1.bf16.msra.mxu0 %v2770
        %3056 = vmatprep.subr.bf16.mxu0 0
        %3057 = vmatpush1.bf16.msra.mxu0 %v2771
        %3058 = vmatprep.subr.bf16.mxu0 0
        %3059 = vmatpush1.bf16.msra.mxu0 %v2772
        %3060 = vmatprep.subr.bf16.mxu0 0
        %3061 = vmatpush1.bf16.msra.mxu0 %v2773
        %3062 = vmatprep.subr.bf16.mxu0 0
        %3063 = vmatpush1.bf16.msra.mxu0 %v2774
        %3064 = vmatprep.subr.bf16.mxu0 0
        %3065 = vmatpush1.bf16.msra.mxu0 %v2775
        %3066 = vmatprep.subr.bf16.mxu0 0
        %3067 = vmatpush1.bf16.msra.mxu0 %v2776
        %3068 = vmatprep.subr.bf16.mxu0 0
        %3069 = vmatpush1.bf16.msra.mxu0 %v2777
        %3070 = vmatprep.subr.bf16.mxu0 0
        %3071 = vmatpush1.bf16.msra.mxu0 %v2778
        %3072 = vmatprep.subr.bf16.mxu0 0
        %3073 = vmatpush1.bf16.msra.mxu0 %v2779
        %3074 = vmatprep.subr.bf16.mxu0 0
        %3075 = vmatpush1.bf16.msra.mxu0 %v2780
        %3076 = vmatprep.subr.bf16.mxu0 0
        %3077 = vmatpush1.bf16.msra.mxu0 %v2781
        %3078 = vmatprep.mubr.bf16.mxu0 %v1969
        %3079 = vmatmul.mubr.bf16.gmra.mrb[0].mxu0 %v1968
        %v3080 = vpop.f32.mrb[0].mxu0
        %v3081 = vadd.f32 %v3041, %v3080
        %v3082 = vpop.f32.mrb[0].mxu0
        %v3083 = vpop.f32.mrb[0].mxu0
        %v3084 = vpop.f32.mrb[0].mxu0
        %3085 = vdwg.mxu0
        %3086 = vmatprep.subr.bf16.mxu0 0
        %3087 = vmatpush1.bf16.msra.mxu0 %v2782
        %3088 = vmatprep.subr.bf16.mxu0 0
        %3089 = vmatpush1.bf16.msra.mxu0 %v2783
        %3090 = vmatprep.subr.bf16.mxu0 0
        %3091 = vmatpush1.bf16.msra.mxu0 %v2784
        %3092 = vmatprep.subr.bf16.mxu0 0
        %3093 = vmatpush1.bf16.msra.mxu0 %v2785
        %3094 = vmatprep.subr.bf16.mxu0 0
        %3095 = vmatpush1.bf16.msra.mxu0 %v2786
        %3096 = vmatprep.subr.bf16.mxu0 0
        %3097 = vmatpush1.bf16.msra.mxu0 %v2787
        %3098 = vmatprep.subr.bf16.mxu0 0
        %3099 = vmatpush1.bf16.msra.mxu0 %v2788
        %3100 = vmatprep.subr.bf16.mxu0 0
        %3101 = vmatpush1.bf16.msra.mxu0 %v2789
        %3102 = vmatprep.subr.bf16.mxu0 0
        %3103 = vmatpush1.bf16.msra.mxu0 %v2790
        %3104 = vmatprep.subr.bf16.mxu0 0
        %3105 = vmatpush1.bf16.msra.mxu0 %v2791
        %3106 = vmatprep.subr.bf16.mxu0 0
        %3107 = vmatpush1.bf16.msra.mxu0 %v2792
        %3108 = vmatprep.subr.bf16.mxu0 0
        %3109 = vmatpush1.bf16.msra.mxu0 %v2793
        %3110 = vmatprep.subr.bf16.mxu0 0
        %3111 = vmatpush1.bf16.msra.mxu0 %v2794
        %3112 = vmatprep.subr.bf16.mxu0 0
        %3113 = vmatpush1.bf16.msra.mxu0 %v2795
        %3114 = vmatprep.subr.bf16.mxu0 0
        %3115 = vmatpush1.bf16.msra.mxu0 %v2796
        %3116 = vmatprep.subr.bf16.mxu0 0
        %3117 = vmatpush1.bf16.msra.mxu0 %v2797
        %3118 = vmatprep.mubr.bf16.mxu0 %v1971
        %3119 = vmatmul.mubr.bf16.gmra.mrb[0].mxu0 %v1970
        %v3120 = vpop.f32.mrb[0].mxu0
        %v3121 = vadd.f32 %v3081, %v3120
        %v3122 = vpop.f32.mrb[0].mxu0
        %v3123 = vpop.f32.mrb[0].mxu0
        %v3124 = vpop.f32.mrb[0].mxu0
        %3125 = vdwg.mxu0
        %3126 = vmatprep.subr.bf16.mxu0 0
        %3127 = vmatpush1.bf16.msra.mxu0 %v2798
        %3128 = vmatprep.subr.bf16.mxu0 0
        %3129 = vmatpush1.bf16.msra.mxu0 %v2799
        %3130 = vmatprep.subr.bf16.mxu0 0
        %3131 = vmatpush1.bf16.msra.mxu0 %v2800
        %3132 = vmatprep.subr.bf16.mxu0 0
        %3133 = vmatpush1.bf16.msra.mxu0 %v2801
        %3134 = vmatprep.subr.bf16.mxu0 0
        %3135 = vmatpush1.bf16.msra.mxu0 %v2802
        %3136 = vmatprep.subr.bf16.mxu0 0
        %3137 = vmatpush1.bf16.msra.mxu0 %v2803
        %3138 = vmatprep.subr.bf16.mxu0 0
        %3139 = vmatpush1.bf16.msra.mxu0 %v2804
        %3140 = vmatprep.subr.bf16.mxu0 0
        %3141 = vmatpush1.bf16.msra.mxu0 %v2805
        %3142 = vmatprep.subr.bf16.mxu0 0
        %3143 = vmatpush1.bf16.msra.mxu0 %v2806
        %3144 = vmatprep.subr.bf16.mxu0 0
        %3145 = vmatpush1.bf16.msra.mxu0 %v2807
        %3146 = vmatprep.subr.bf16.mxu0 0
        %3147 = vmatpush1.bf16.msra.mxu0 %v2808
        %3148 = vmatprep.subr.bf16.mxu0 0
        %3149 = vmatpush1.bf16.msra.mxu0 %v2809
        %3150 = vmatprep.subr.bf16.mxu0 0
        %3151 = vmatpush1.bf16.msra.mxu0 %v2810
        %3152 = vmatprep.subr.bf16.mxu0 0
        %3153 = vmatpush1.bf16.msra.mxu0 %v2811
        %3154 = vmatprep.subr.bf16.mxu0 0
        %3155 = vmatpush1.bf16.msra.mxu0 %v2812
        %3156 = vmatprep.subr.bf16.mxu0 0
        %3157 = vmatpush1.bf16.msra.mxu0 %v2813
        %3158 = vmatprep.mubr.bf16.mxu0 %v1973
        %3159 = vmatmul.mubr.bf16.gmra.mrb[0].mxu0 %v1972
        %v3160 = vpop.f32.mrb[0].mxu0
        %v3161 = vadd.f32 %v3121, %v3160
        %v3162 = vpop.f32.mrb[0].mxu0
        %v3163 = vpop.f32.mrb[0].mxu0
        %v3164 = vpop.f32.mrb[0].mxu0
        %3165 = vdwg.mxu0
        %3166 = vmatprep.subr.bf16.mxu0 0
        %3167 = vmatpush1.bf16.msra.mxu0 %v2814
        %3168 = vmatprep.subr.bf16.mxu0 0
        %3169 = vmatpush1.bf16.msra.mxu0 %v2815
        %3170 = vmatprep.subr.bf16.mxu0 0
        %3171 = vmatpush1.bf16.msra.mxu0 %v2816
        %3172 = vmatprep.subr.bf16.mxu0 0
        %3173 = vmatpush1.bf16.msra.mxu0 %v2817
        %3174 = vmatprep.subr.bf16.mxu0 0
        %3175 = vmatpush1.bf16.msra.mxu0 %v2818
        %3176 = vmatprep.subr.bf16.mxu0 0
        %3177 = vmatpush1.bf16.msra.mxu0 %v2819
        %3178 = vmatprep.subr.bf16.mxu0 0
        %3179 = vmatpush1.bf16.msra.mxu0 %v2820
        %3180 = vmatprep.subr.bf16.mxu0 0
        %3181 = vmatpush1.bf16.msra.mxu0 %v2821
        %3182 = vmatprep.subr.bf16.mxu0 0
        %3183 = vmatpush1.bf16.msra.mxu0 %v2822
        %3184 = vmatprep.subr.bf16.mxu0 0
        %3185 = vmatpush1.bf16.msra.mxu0 %v2823
        %3186 = vmatprep.subr.bf16.mxu0 0
        %3187 = vmatpush1.bf16.msra.mxu0 %v2824
        %3188 = vmatprep.subr.bf16.mxu0 0
        %3189 = vmatpush1.bf16.msra.mxu0 %v2825
        %3190 = vmatprep.subr.bf16.mxu0 0
        %3191 = vmatpush1.bf16.msra.mxu0 %v2826
        %3192 = vmatprep.subr.bf16.mxu0 0
        %3193 = vmatpush1.bf16.msra.mxu0 %v2827
        %3194 = vmatprep.subr.bf16.mxu0 0
        %3195 = vmatpush1.bf16.msra.mxu0 %v2828
        %3196 = vmatprep.subr.bf16.mxu0 0
        %3197 = vmatpush1.bf16.msra.mxu0 %v2829
        %3198 = vmatprep.mubr.bf16.mxu0 %v1975
        %3199 = vmatmul.mubr.bf16.gmra.mrb[0].mxu0 %v1974
        %v3200 = vpop.f32.mrb[0].mxu0
        %v3201 = vadd.f32 %v3161, %v3200
        %v3202 = vpop.f32.mrb[0].mxu0
        %v3203 = vpop.f32.mrb[0].mxu0
        %v3204 = vpop.f32.mrb[0].mxu0
        %3205 = vdwg.mxu0
        %3206 = vmatprep.subr.bf16.mxu0 0
        %3207 = vmatpush1.bf16.msra.mxu0 %v2830
        %3208 = vmatprep.subr.bf16.mxu0 0
        %3209 = vmatpush1.bf16.msra.mxu0 %v2831
        %3210 = vmatprep.subr.bf16.mxu0 0
        %3211 = vmatpush1.bf16.msra.mxu0 %v2832
        %3212 = vmatprep.subr.bf16.mxu0 0
        %3213 = vmatpush1.bf16.msra.mxu0 %v2833
        %3214 = vmatprep.subr.bf16.mxu0 0
        %3215 = vmatpush1.bf16.msra.mxu0 %v2834
        %3216 = vmatprep.subr.bf16.mxu0 0
        %3217 = vmatpush1.bf16.msra.mxu0 %v2835
        %3218 = vmatprep.subr.bf16.mxu0 0
        %3219 = vmatpush1.bf16.msra.mxu0 %v2836
        %3220 = vmatprep.subr.bf16.mxu0 0
        %3221 = vmatpush1.bf16.msra.mxu0 %v2837
        %3222 = vmatprep.subr.bf16.mxu0 0
        %3223 = vmatpush1.bf16.msra.mxu0 %v2838
        %3224 = vmatprep.subr.bf16.mxu0 0
        %3225 = vmatpush1.bf16.msra.mxu0 %v2839
        %3226 = vmatprep.subr.bf16.mxu0 0
        %3227 = vmatpush1.bf16.msra.mxu0 %v2840
        %3228 = vmatprep.subr.bf16.mxu0 0
        %3229 = vmatpush1.bf16.msra.mxu0 %v2841
        %3230 = vmatprep.subr.bf16.mxu0 0
        %3231 = vmatpush1.bf16.msra.mxu0 %v2842
        %3232 = vmatprep.subr.bf16.mxu0 0
        %3233 = vmatpush1.bf16.msra.mxu0 %v2843
        %3234 = vmatprep.subr.bf16.mxu0 0
        %3235 = vmatpush1.bf16.msra.mxu0 %v2844
        %3236 = vmatprep.subr.bf16.mxu0 0
        %3237 = vmatpush1.bf16.msra.mxu0 %v2845
        %3238 = vmatprep.mubr.bf16.mxu0 %v1977
        %3239 = vmatmul.mubr.bf16.gmra.mrb[0].mxu0 %v1976
        %v3240 = vpop.f32.mrb[0].mxu0
        %v3241 = vadd.f32 %v3201, %v3240
        %v3242 = vpop.f32.mrb[0].mxu0
        %v3243 = vpop.f32.mrb[0].mxu0
        %v3244 = vpop.f32.mrb[0].mxu0
        %3245 = vdwg.mxu0
        %3246 = vmatprep.subr.bf16.mxu0 0
        %3247 = vmatpush1.bf16.msra.mxu0 %v2846
        %3248 = vmatprep.subr.bf16.mxu0 0
        %3249 = vmatpush1.bf16.msra.mxu0 %v2847
        %3250 = vmatprep.subr.bf16.mxu0 0
        %3251 = vmatpush1.bf16.msra.mxu0 %v2848
        %3252 = vmatprep.subr.bf16.mxu0 0
        %3253 = vmatpush1.bf16.msra.mxu0 %v2849
        %3254 = vmatprep.subr.bf16.mxu0 0
        %3255 = vmatpush1.bf16.msra.mxu0 %v2850
        %3256 = vmatprep.subr.bf16.mxu0 0
        %3257 = vmatpush1.bf16.msra.mxu0 %v2851
        %3258 = vmatprep.subr.bf16.mxu0 0
        %3259 = vmatpush1.bf16.msra.mxu0 %v2852
        %3260 = vmatprep.subr.bf16.mxu0 0
        %3261 = vmatpush1.bf16.msra.mxu0 %v2853
        %3262 = vmatprep.subr.bf16.mxu0 0
        %3263 = vmatpush1.bf16.msra.mxu0 %v2854
        %3264 = vmatprep.subr.bf16.mxu0 0
        %3265 = vmatpush1.bf16.msra.mxu0 %v2855
        %3266 = vmatprep.subr.bf16.mxu0 0
        %3267 = vmatpush1.bf16.msra.mxu0 %v2856
        %3268 = vmatprep.subr.bf16.mxu0 0
        %3269 = vmatpush1.bf16.msra.mxu0 %v2857
        %3270 = vmatprep.subr.bf16.mxu0 0
        %3271 = vmatpush1.bf16.msra.mxu0 %v2858
        %3272 = vmatprep.subr.bf16.mxu0 0
        %3273 = vmatpush1.bf16.msra.mxu0 %v2859
        %3274 = vmatprep.subr.bf16.mxu0 0
        %3275 = vmatpush1.bf16.msra.mxu0 %v2860
        %3276 = vmatprep.subr.bf16.mxu0 0
        %3277 = vmatpush1.bf16.msra.mxu0 %v2861
        %3278 = vmatprep.mubr.bf16.mxu0 %v1979
        %3279 = vmatmul.mubr.bf16.gmra.mrb[0].mxu0 %v1978
        %v3280 = vpop.f32.mrb[0].mxu0
        %v3281 = vadd.f32 %v3241, %v3280
        %v3282 = vpop.f32.mrb[0].mxu0
        %v3283 = vpop.f32.mrb[0].mxu0
        %v3284 = vpop.f32.mrb[0].mxu0
        %3285 = vdwg.mxu0
        %3286 = vmatprep.subr.bf16.mxu0 0
        %3287 = vmatpush1.bf16.msra.mxu0 %v2862
        %3288 = vmatprep.subr.bf16.mxu0 0
        %3289 = vmatpush1.bf16.msra.mxu0 %v2863
        %3290 = vmatprep.subr.bf16.mxu0 0
        %3291 = vmatpush1.bf16.msra.mxu0 %v2864
        %3292 = vmatprep.subr.bf16.mxu0 0
        %3293 = vmatpush1.bf16.msra.mxu0 %v2865
        %3294 = vmatprep.subr.bf16.mxu0 0
        %3295 = vmatpush1.bf16.msra.mxu0 %v2866
        %3296 = vmatprep.subr.bf16.mxu0 0
        %3297 = vmatpush1.bf16.msra.mxu0 %v2867
        %3298 = vmatprep.subr.bf16.mxu0 0
        %3299 = vmatpush1.bf16.msra.mxu0 %v2868
        %3300 = vmatprep.subr.bf16.mxu0 0
        %3301 = vmatpush1.bf16.msra.mxu0 %v2869
        %3302 = vmatprep.subr.bf16.mxu0 0
        %3303 = vmatpush1.bf16.msra.mxu0 %v2870
        %3304 = vmatprep.subr.bf16.mxu0 0
        %3305 = vmatpush1.bf16.msra.mxu0 %v2871
        %3306 = vmatprep.subr.bf16.mxu0 0
        %3307 = vmatpush1.bf16.msra.mxu0 %v2872
        %3308 = vmatprep.subr.bf16.mxu0 0
        %3309 = vmatpush1.bf16.msra.mxu0 %v2873
        %3310 = vmatprep.subr.bf16.mxu0 0
        %3311 = vmatpush1.bf16.msra.mxu0 %v2874
        %3312 = vmatprep.subr.bf16.mxu0 0
        %3313 = vmatpush1.bf16.msra.mxu0 %v2875
        %3314 = vmatprep.subr.bf16.mxu0 0
        %3315 = vmatpush1.bf16.msra.mxu0 %v2876
        %3316 = vmatprep.subr.bf16.mxu0 0
        %3317 = vmatpush1.bf16.msra.mxu0 %v2877
        %3318 = vmatprep.mubr.bf16.mxu0 %v1981
        %3319 = vmatmul.mubr.bf16.gmra.mrb[0].mxu0 %v1980
        %v3320 = vpop.f32.mrb[0].mxu0
        %v3321 = vadd.f32 %v3281, %v3320
        %v3322 = vpop.f32.mrb[0].mxu0
        %v3323 = vpop.f32.mrb[0].mxu0
        %v3324 = vpop.f32.mrb[0].mxu0
        %3325 = vdwg.mxu0
        %v3326 = vadd.f32 %v1309, %v3321
        %v3327 = vld [vmem:[%s10] sm:$0x1]
        %v3329 = vlaneseq
        %v3330 = vshrl.u32 %v3329, 7
        %v3331 = vsub.s32 0, %v3330
        %v3332 = vrot.slane %v3327, %v3331
        %v3334 = vadd.f32 %v3326, %v3332
        %3335 = vst.msk [vmem:[%s377] sm:$0xff] %vm617, %v3334
        %s3336 = sand.u32 %s269, 1
        %s3337 = scalar_lea.sflag [#allocation4], %s3336
        %s3338 = sand.u32 %s269, 1
        %s3339 = smul.addr %s3338, 8
        %s3340 = scalar_lea.vmem [#allocation3], %s3339
        // Predicated region
        $region65: #{tpu_custom_call.1} parent=63 // pred_check
          %p3341 = pneg %p279
        $region66: #{tpu_custom_call.1} parent=63 // pred_check_branch
          %3343 = sbr.rel (%p3341) target = $region68
        $region67: #{tpu_custom_call.1} parent=63 // pred_region
          %s3345 = ssub.s32 128, 128
          %3346 = vsyncadd %s3337, %s3345
          %s3347 = smul.addr %s25, 128
          %s3348 = scalar_lea.hbm %s11, %s3347
          %s3350 = sshll.u32 %s3340, 4
          %s3351 = int_to_ptr.vmem [resolvable:$true] %s3350
          %3353 = dma.vmem_to_hbm [thread:$0]  %s3351, 128, %s3348, %s3337
        $region68: #{tpu_custom_call.1} parent=63 // pred_fallthru
          _
      $region64: #{tpu_custom_call.1} parent=5 // pred_fallthru
        _
      %p3354 = scmp.le.s32.totalorder 2, %s20
      // Predicated region
      $region69: #{tpu_custom_call.1} parent=5 // pred_check
        %p3355 = pneg %p3354
      $region70: #{tpu_custom_call.1} parent=5 // pred_check_branch
        %3357 = sbr.rel (%p3355) target = $region72
      $region71: #{tpu_custom_call.1} parent=5 // pred_region
        %s3358 = ssub.s32 %s20, 2
        // Predicated region
        $region73: #{tpu_custom_call.1} parent=71 // pred_check
          %p3359 = pneg %p285
        $region74: #{tpu_custom_call.1} parent=71 // pred_check_branch
          %3361 = sbr.rel (%p3359) target = $region76
        $region75: #{tpu_custom_call.1} parent=71 // pred_region
          %s3362 = sand.u32 %s270, 1
          %s3363 = scalar_lea.sflag [#allocation4], %s3362
          %s3364 = sand.u32 %s270, 1
          %s3365 = smul.addr %s3364, 8
          %s3366 = scalar_lea.vmem [#allocation3], %s3365
          %3367 = dma.done %s3363, 128
        $region76: #{tpu_custom_call.1} parent=71 // pred_fallthru
          _
      $region72: #{tpu_custom_call.1} parent=5 // pred_fallthru
        _
    $region6: #{tpu_custom_call.1} parent=1 // loop_footer
      %s24 = sadd.s32 1, %s20
    $region7: #{tpu_custom_call.1} parent=1 // loop_footer_branch
      %19 = sbr.rel target = $region3
    $region8: #{tpu_custom_call.1} parent=1 // loop_exit
      _
    %3368 = vsyncpa [#allocation4], 1
    %s3369 = scalar_lea.sflag [#allocation4], 1
    %3370 = vsyncpa %s3369, 1

</llo_original>
